<compile_context>
chip_gen: v7x
topology: tpu7x:2x2x1
jax: 0.10.0
libtpu: 0.0.40
codegen_flags: <defaults>
</compile_context>

<pallas_src>
import functools

import jax
import jax.numpy as jnp
import numpy as np
from jax import lax
from jax.experimental import pallas as pl
from jax.experimental.pallas import tpu as pltpu


# ----------------------------------------------------------------------------
# Kernels
# ----------------------------------------------------------------------------
def _conv_chain_kernel(xflat_ref, w_in_ref, b_in_ref, w_out_ref, b_out_ref,
                       o_ref, pad_ref, *, H, W, layers, compute_dtype):
    """Fused conv_in + (layers-1) x conv_out (shared weights), ReLU after each.

    xflat_ref : ((H+3)*(W+2), Cin)  row-flattened zero-padded input (1 top,
                                    2 bottom, 1 left, 1 right padding rows/cols)
    w_in_ref  : (9*Cin, Cout)       3x3 taps folded into the K axis (HWIO order)
    b_in_ref  : (1, Cout)
    w_out_ref : (9*Cout, Cout)
    b_out_ref : (1, Cout)
    o_ref     : (H*(W+2), Cout)     flat output; 2 junk columns per row are
                                    dropped by the pooling stage
    pad_ref   : ((H+3)*(W+2), Cout) VMEM scratch used to re-zero-pad between
                                    the shared-weight layers
    """
    Wp = W + 2              # padded width
    L = H * Wp              # rows of the flat output (incl. 2 junk cols/row)
    Cout = o_ref.shape[-1]

    def conv3x3_relu(src_ref, w_ref, b_ref):
        # 9 contiguous shifted views of the flattened padded input, concatenated
        # on the lane axis -> (L, 9*C) im2col -> one MXU matmul (K = 9*C).
        taps = [src_ref[dy * Wp + dx: dy * Wp + dx + L, :]
                for dy in range(3) for dx in range(3)]
        im2col = jnp.concatenate(taps, axis=-1).astype(compute_dtype)
        y = jnp.dot(im2col, w_ref[...].astype(compute_dtype),
                    preferred_element_type=jnp.float32)
        return jnp.maximum(y + b_ref[...].astype(jnp.float32), 0.0)

    # conv_in + ReLU
    y = conv3x3_relu(xflat_ref, w_in_ref, b_in_ref)          # (L, Cout) f32

    if layers > 1:
        # Columns w >= W of the flat (H, W+2) grid are junk; zeroing them makes
        # them land exactly on the zero border of the next layer's padded input.
        col = lax.broadcasted_iota(jnp.int32, (L, Cout), 0) % Wp
        valid = col < W
        pad_ref[...] = jnp.zeros(pad_ref.shape, pad_ref.dtype)
        for _ in range(layers - 1):                          # shared weights
            pad_ref[Wp + 1: Wp + 1 + L, :] = jnp.where(
                valid, y, 0.0).astype(pad_ref.dtype)
            y = conv3x3_relu(pad_ref, w_out_ref, b_out_ref)

    o_ref[...] = y.astype(o_ref.dtype)


def _maxpool2x2_kernel(a_ref, b_ref, c_ref, d_ref, o_ref):
    """2x2/stride-2 max pool: elementwise max of the 4 corner views."""
    o_ref[...] = jnp.maximum(
        jnp.maximum(a_ref[...], b_ref[...]),
        jnp.maximum(c_ref[...], d_ref[...]),
    )


# ----------------------------------------------------------------------------
# Wrappers (layout glue in plain JAX, compute in pallas_call)
# ----------------------------------------------------------------------------
def conv_chain(x_nhwc, w_in, b_in, w_out, b_out, *, layers,
               compute_dtype=jnp.float32):
    """x: (N,H,W,Cin) NHWC; weights HWIO.  Returns (N, H, W+2, Cout) where the
    last 2 columns of each row are junk (dropped by the pooling stage)."""
    N, H, W, Cin = x_nhwc.shape
    Cout = w_in.shape[-1]
    Wp = W + 2
    R = (H + 3) * Wp          # flattened padded length (1 top + 2 bottom rows)
    L = H * Wp

    # Pad once (small ~1.3x copy) and row-flatten; taps are built in-kernel.
    xpad = jnp.pad(x_nhwc, ((0, 0), (1, 2), (1, 1), (0, 0)))
    xflat = xpad.reshape(N, R, Cin)

    w_in9 = w_in.reshape(9 * Cin, Cout)       # (dy, dx, cin) folded into K
    w_out9 = w_out.reshape(9 * Cout, Cout)
    b_in2 = b_in.reshape(1, Cout)
    b_out2 = b_out.reshape(1, Cout)

    kernel = functools.partial(_conv_chain_kernel, H=H, W=W, layers=layers,
                               compute_dtype=compute_dtype)
    yflat = pl.pallas_call(
        kernel,
        out_shape=jax.ShapeDtypeStruct((N, L, Cout), x_nhwc.dtype),
        grid=(N,),
        in_specs=[
            pl.BlockSpec((None, R, Cin), lambda n: (n, 0, 0)),
            pl.BlockSpec((9 * Cin, Cout), lambda n: (0, 0)),
            pl.BlockSpec((1, Cout), lambda n: (0, 0)),
            pl.BlockSpec((9 * Cout, Cout), lambda n: (0, 0)),
            pl.BlockSpec((1, Cout), lambda n: (0, 0)),
        ],
        out_specs=pl.BlockSpec((None, L, Cout), lambda n: (n, 0, 0)),
        scratch_shapes=[pltpu.VMEM((R, Cout), jnp.float32)],
        compiler_params=pltpu.CompilerParams(
            dimension_semantics=("parallel",)),
    )(xflat, w_in9, b_in2, w_out9, b_out2)

    return yflat.reshape(N, H, Wp, Cout)


def maxpool2x2(x, *, valid_w=None):
    """x: (N, H, W_any, C). Pools the first `valid_w` columns with a 2x2/stride-2
    max (floor semantics, like nn.MaxPool2d(kernel_size=2))."""
    N, H, Wa, C = x.shape
    W = Wa if valid_w is None else valid_w
    H2, W2 = H // 2, W // 2
    corners = [x[:, dy:2 * H2:2, dx:2 * W2:2, :]
               for dy in range(2) for dx in range(2)]
    return pl.pallas_call(
        _maxpool2x2_kernel,
        out_shape=jax.ShapeDtypeStruct((N, H2, W2, C), x.dtype),
        grid=(N,),
        in_specs=[pl.BlockSpec((None, H2, W2, C), lambda n: (n, 0, 0, 0))
                  for _ in range(4)],
        out_specs=pl.BlockSpec((None, H2, W2, C), lambda n: (n, 0, 0, 0)),
        compiler_params=pltpu.CompilerParams(
            dimension_semantics=("parallel",)),
    )(*corners)


def fucking_block(x_nchw, w_in, b_in, w_out, b_out, *, layers,
                  compute_dtype=jnp.float32):
    """Forward pass of fuckingBlock.  x_nchw: (N, Cin, H, W); weights HWIO."""
    N, Cin, H, W = x_nchw.shape
    x = jnp.transpose(x_nchw, (0, 2, 3, 1))                   # NCHW -> NHWC
    y = conv_chain(x, w_in, b_in, w_out, b_out, layers=layers,
                   compute_dtype=compute_dtype)               # (N, H, W+2, Cout)
    p = maxpool2x2(y, valid_w=W)                              # (N, H//2, W//2, Cout)
    return jnp.transpose(p, (0, 3, 1, 2))                     # NHWC -> NCHW


# ----------------------------------------------------------------------------
# Pure-JAX reference (for correctness check)
# ----------------------------------------------------------------------------
def _ref_conv_relu(x, w, b):
    y = lax.conv_general_dilated(
        x, w, window_strides=(1, 1), padding="SAME",
        dimension_numbers=("NHWC", "HWIO", "NHWC"),
    )
    return jax.nn.relu(y + b)


def _ref_block(x_nchw, w_in, b_in, w_out, b_out, *, layers):
    x = jnp.transpose(x_nchw, (0, 2, 3, 1))
    x = _ref_conv_relu(x, w_in, b_in)
    for _ in range(layers - 1):
        x = _ref_conv_relu(x, w_out, b_out)
    x = lax.reduce_window(
        x, -jnp.inf, lax.max, (1, 2, 2, 1), (1, 2, 2, 1), "VALID"
    )
    return jnp.transpose(x, (0, 3, 1, 2))


# ----------------------------------------------------------------------------
# Main
# ----------------------------------------------------------------------------
if __name__ == "__main__":
    layers = 2          # module arg: conv_in once, conv_out (layers-1)=1 time
    in_channels = 4
    out_channels = 8
    N, H, W = 2, 16, 16

    key = jax.random.PRNGKey(0)
    k_x, k_wi, k_bi, k_wo, k_bo = jax.random.split(key, 5)

    x = jax.random.normal(k_x, (N, in_channels, H, W), jnp.float32)
    # Deterministic synthetic parameters (HWIO layout for the kernels).
    w_in = 0.1 * jax.random.normal(
        k_wi, (3, 3, in_channels, out_channels), jnp.float32)
    b_in = 0.1 * jax.random.normal(k_bi, (out_channels,), jnp.float32)
    w_out = 0.1 * jax.random.normal(
        k_wo, (3, 3, out_channels, out_channels), jnp.float32)
    b_out = 0.1 * jax.random.normal(k_bo, (out_channels,), jnp.float32)

    run = jax.jit(functools.partial(fucking_block, layers=layers))
    out = jax.block_until_ready(run(x, w_in, b_in, w_out, b_out))

    ref = _ref_block(x, w_in, b_in, w_out, b_out, layers=layers)
    assert out.shape == (N, out_channels, H // 2, W // 2), out.shape
    np.testing.assert_allclose(np.asarray(out), np.asarray(ref),
                               rtol=1e-5, atol=1e-5)

    print("KERNEL_OK")
</pallas_src>

<mosaic_0001>
module attributes {stable_mosaic.version = 11 : i64} {
  func.func @_conv_chain_kernel(%arg0: i32, %arg1: memref<1x342x4xf32, #tpu.memory_space<vmem>>, %arg2: memref<36x8xf32, #tpu.memory_space<vmem>>, %arg3: memref<1x8xf32, #tpu.memory_space<vmem>>, %arg4: memref<72x8xf32, #tpu.memory_space<vmem>>, %arg5: memref<1x8xf32, #tpu.memory_space<vmem>>, %arg6: memref<1x288x8xf32, #tpu.memory_space<vmem>>, %arg7: memref<342x8xf32, #tpu.memory_space<vmem>>) attributes {dimension_semantics = [#tpu.dimension_semantics<parallel>], iteration_bounds = array<i64: 2>, scalar_prefetch = 0 : i64, scratch_operands = 1 : i64, tpu.core_type = #tpu.core_type<tc>, window_params = [{transform_indices = @transform_0, window_bounds = array<i64: 1, 342, 4>}, {pipeline_mode = #tpu.pipeline_mode<synchronous>, transform_indices = @transform_1, window_bounds = array<i64: 36, 8>}, {pipeline_mode = #tpu.pipeline_mode<synchronous>, transform_indices = @transform_2, window_bounds = array<i64: 1, 8>}, {pipeline_mode = #tpu.pipeline_mode<synchronous>, transform_indices = @transform_3, window_bounds = array<i64: 72, 8>}, {pipeline_mode = #tpu.pipeline_mode<synchronous>, transform_indices = @transform_4, window_bounds = array<i64: 1, 8>}, {transform_indices = @transform_5, window_bounds = array<i64: 1, 288, 8>}]} {
    %c0 = arith.constant 0 : index
    %c0_0 = arith.constant 0 : index
    %c0_1 = arith.constant 0 : index
    %0 = vector.load %arg1[%c0, %c0_0, %c0_1] : memref<1x342x4xf32, #tpu.memory_space<vmem>>, vector<1x288x4xf32>
    %1 = vector.shape_cast %0 : vector<1x288x4xf32> to vector<288x4xf32>
    %c0_2 = arith.constant 0 : index
    %c1 = arith.constant 1 : index
    %c0_3 = arith.constant 0 : index
    %2 = vector.load %arg1[%c0_2, %c1, %c0_3] : memref<1x342x4xf32, #tpu.memory_space<vmem>>, vector<1x288x4xf32>
    %3 = vector.shape_cast %2 : vector<1x288x4xf32> to vector<288x4xf32>
    %c0_4 = arith.constant 0 : index
    %c2 = arith.constant 2 : index
    %c0_5 = arith.constant 0 : index
    %4 = vector.load %arg1[%c0_4, %c2, %c0_5] : memref<1x342x4xf32, #tpu.memory_space<vmem>>, vector<1x288x4xf32>
    %5 = vector.shape_cast %4 : vector<1x288x4xf32> to vector<288x4xf32>
    %c0_6 = arith.constant 0 : index
    %c18 = arith.constant 18 : index
    %c0_7 = arith.constant 0 : index
    %6 = vector.load %arg1[%c0_6, %c18, %c0_7] : memref<1x342x4xf32, #tpu.memory_space<vmem>>, vector<1x288x4xf32>
    %7 = vector.shape_cast %6 : vector<1x288x4xf32> to vector<288x4xf32>
    %c0_8 = arith.constant 0 : index
    %c19 = arith.constant 19 : index
    %c0_9 = arith.constant 0 : index
    %8 = vector.load %arg1[%c0_8, %c19, %c0_9] : memref<1x342x4xf32, #tpu.memory_space<vmem>>, vector<1x288x4xf32>
    %9 = vector.shape_cast %8 : vector<1x288x4xf32> to vector<288x4xf32>
    %c0_10 = arith.constant 0 : index
    %c20 = arith.constant 20 : index
    %c0_11 = arith.constant 0 : index
    %10 = vector.load %arg1[%c0_10, %c20, %c0_11] : memref<1x342x4xf32, #tpu.memory_space<vmem>>, vector<1x288x4xf32>
    %11 = vector.shape_cast %10 : vector<1x288x4xf32> to vector<288x4xf32>
    %c0_12 = arith.constant 0 : index
    %c36 = arith.constant 36 : index
    %c0_13 = arith.constant 0 : index
    %12 = vector.load %arg1[%c0_12, %c36, %c0_13] : memref<1x342x4xf32, #tpu.memory_space<vmem>>, vector<1x288x4xf32>
    %13 = vector.shape_cast %12 : vector<1x288x4xf32> to vector<288x4xf32>
    %c0_14 = arith.constant 0 : index
    %c37 = arith.constant 37 : index
    %c0_15 = arith.constant 0 : index
    %14 = vector.load %arg1[%c0_14, %c37, %c0_15] : memref<1x342x4xf32, #tpu.memory_space<vmem>>, vector<1x288x4xf32>
    %15 = vector.shape_cast %14 : vector<1x288x4xf32> to vector<288x4xf32>
    %c0_16 = arith.constant 0 : index
    %c38 = arith.constant 38 : index
    %c0_17 = arith.constant 0 : index
    %16 = vector.load %arg1[%c0_16, %c38, %c0_17] : memref<1x342x4xf32, #tpu.memory_space<vmem>>, vector<1x288x4xf32>
    %17 = vector.shape_cast %16 : vector<1x288x4xf32> to vector<288x4xf32>
    %18 = tpu.concatenate %1, %3, %5, %7, %9, %11, %13, %15, %17 in 1 : vector<288x4xf32>, vector<288x4xf32>, vector<288x4xf32>, vector<288x4xf32>, vector<288x4xf32>, vector<288x4xf32>, vector<288x4xf32>, vector<288x4xf32>, vector<288x4xf32> -> vector<288x36xf32>
    %c0_18 = arith.constant 0 : index
    %c0_19 = arith.constant 0 : index
    %19 = vector.load %arg2[%c0_18, %c0_19] : memref<36x8xf32, #tpu.memory_space<vmem>>, vector<36x8xf32>
    %cst = arith.constant dense<0.000000e+00> : vector<288x8xf32>
    %20 = tpu.matmul %18, %19, %cst {dimension_numbers = #tpu.dot_dimension_numbers<[1], [0], [0], [1], [0, 0, 1, 1], [], []>} : vector<288x36xf32>, vector<36x8xf32>, vector<288x8xf32> -> vector<288x8xf32>
    %c0_20 = arith.constant 0 : index
    %c0_21 = arith.constant 0 : index
    %21 = vector.load %arg3[%c0_20, %c0_21] : memref<1x8xf32, #tpu.memory_space<vmem>>, vector<1x8xf32>
    %22 = vector.broadcast %21 : vector<1x8xf32> to vector<288x8xf32>
    %23 = arith.addf %20, %22 : vector<288x8xf32>
    %cst_22 = arith.constant 0.000000e+00 : f32
    %24 = vector.broadcast %cst_22 : f32 to vector<288x8xf32>
    %25 = arith.maximumf %23, %24 : vector<288x8xf32>
    %26 = tpu.iota {dimensions = array<i32: 0>} : vector<288x8xi32>
    %c18_i32 = arith.constant 18 : i32
    %c0_i32 = arith.constant 0 : i32
    %27 = arith.cmpi eq, %c18_i32, %c0_i32 : i32
    %c1_i32 = arith.constant 1 : i32
    %28 = arith.select %27, %c1_i32, %c18_i32 : i32
    %29 = vector.broadcast %28 : i32 to vector<288x8xi32>
    %30 = arith.remsi %26, %29 : vector<288x8xi32>
    %c0_i32_23 = arith.constant 0 : i32
    %31 = vector.broadcast %c0_i32_23 : i32 to vector<288x8xi32>
    %32 = arith.cmpi ne, %30, %31 : vector<288x8xi32>
    %c0_i32_24 = arith.constant 0 : i32
    %33 = vector.broadcast %c0_i32_24 : i32 to vector<288x8xi32>
    %34 = arith.cmpi slt, %30, %33 : vector<288x8xi32>
    %c0_i32_25 = arith.constant 0 : i32
    %35 = arith.cmpi slt, %28, %c0_i32_25 : i32
    %36 = vector.broadcast %35 : i1 to vector<288x8xi1>
    %37 = vector.broadcast %36 : vector<288x8xi1> to vector<288x8xi1>
    %38 = arith.xori %34, %37 : vector<288x8xi1>
    %39 = arith.andi %38, %32 : vector<288x8xi1>
    %40 = vector.broadcast %28 : i32 to vector<288x8xi32>
    %41 = arith.addi %30, %40 : vector<288x8xi32>
    %42 = arith.select %39, %41, %30 : vector<288x8xi1>, vector<288x8xi32>
    %c16_i32 = arith.constant 16 : i32
    %43 = vector.broadcast %c16_i32 : i32 to vector<288x8xi32>
    %44 = arith.cmpi slt, %42, %43 : vector<288x8xi32>
    %cst_26 = arith.constant 0.000000e+00 : f32
    %45 = vector.broadcast %cst_26 : f32 to vector<342x8xf32>
    %c0_27 = arith.constant 0 : index
    %c0_28 = arith.constant 0 : index
    %46 = vector.load %arg7[%c0_27, %c0_28] : memref<342x8xf32, #tpu.memory_space<vmem>>, vector<342x8xf32>
    tpu.vector_store %arg7[%c0_27, %c0_28], %45 {strides = array<i32>} : memref<342x8xf32, #tpu.memory_space<vmem>>, vector<342x8xf32>,
    %cst_29 = arith.constant 0.000000e+00 : f32
    %47 = vector.broadcast %cst_29 : f32 to vector<288x8xf32>
    %48 = arith.select %44, %25, %47 : vector<288x8xi1>, vector<288x8xf32>
    %c19_30 = arith.constant 19 : index
    %c0_31 = arith.constant 0 : index
    %49 = vector.load %arg7[%c19_30, %c0_31] : memref<342x8xf32, #tpu.memory_space<vmem>>, vector<288x8xf32>
    tpu.vector_store %arg7[%c19_30, %c0_31], %48 {strides = array<i32>} : memref<342x8xf32, #tpu.memory_space<vmem>>, vector<288x8xf32>,
    %c0_32 = arith.constant 0 : index
    %c0_33 = arith.constant 0 : index
    %50 = vector.load %arg7[%c0_32, %c0_33] : memref<342x8xf32, #tpu.memory_space<vmem>>, vector<288x8xf32>
    %c1_34 = arith.constant 1 : index
    %c0_35 = arith.constant 0 : index
    %51 = vector.load %arg7[%c1_34, %c0_35] : memref<342x8xf32, #tpu.memory_space<vmem>>, vector<288x8xf32>
    %c2_36 = arith.constant 2 : index
    %c0_37 = arith.constant 0 : index
    %52 = vector.load %arg7[%c2_36, %c0_37] : memref<342x8xf32, #tpu.memory_space<vmem>>, vector<288x8xf32>
    %c18_38 = arith.constant 18 : index
    %c0_39 = arith.constant 0 : index
    %53 = vector.load %arg7[%c18_38, %c0_39] : memref<342x8xf32, #tpu.memory_space<vmem>>, vector<288x8xf32>
    %c19_40 = arith.constant 19 : index
    %c0_41 = arith.constant 0 : index
    %54 = vector.load %arg7[%c19_40, %c0_41] : memref<342x8xf32, #tpu.memory_space<vmem>>, vector<288x8xf32>
    %c20_42 = arith.constant 20 : index
    %c0_43 = arith.constant 0 : index
    %55 = vector.load %arg7[%c20_42, %c0_43] : memref<342x8xf32, #tpu.memory_space<vmem>>, vector<288x8xf32>
    %c36_44 = arith.constant 36 : index
    %c0_45 = arith.constant 0 : index
    %56 = vector.load %arg7[%c36_44, %c0_45] : memref<342x8xf32, #tpu.memory_space<vmem>>, vector<288x8xf32>
    %c37_46 = arith.constant 37 : index
    %c0_47 = arith.constant 0 : index
    %57 = vector.load %arg7[%c37_46, %c0_47] : memref<342x8xf32, #tpu.memory_space<vmem>>, vector<288x8xf32>
    %c38_48 = arith.constant 38 : index
    %c0_49 = arith.constant 0 : index
    %58 = vector.load %arg7[%c38_48, %c0_49] : memref<342x8xf32, #tpu.memory_space<vmem>>, vector<288x8xf32>
    %59 = tpu.concatenate %50, %51, %52, %53, %54, %55, %56, %57, %58 in 1 : vector<288x8xf32>, vector<288x8xf32>, vector<288x8xf32>, vector<288x8xf32>, vector<288x8xf32>, vector<288x8xf32>, vector<288x8xf32>, vector<288x8xf32>, vector<288x8xf32> -> vector<288x72xf32>
    %c0_50 = arith.constant 0 : index
    %c0_51 = arith.constant 0 : index
    %60 = vector.load %arg4[%c0_50, %c0_51] : memref<72x8xf32, #tpu.memory_space<vmem>>, vector<72x8xf32>
    %cst_52 = arith.constant dense<0.000000e+00> : vector<288x8xf32>
    %61 = tpu.matmul %59, %60, %cst_52 {dimension_numbers = #tpu.dot_dimension_numbers<[1], [0], [0], [1], [0, 0, 1, 1], [], []>} : vector<288x72xf32>, vector<72x8xf32>, vector<288x8xf32> -> vector<288x8xf32>
    %c0_53 = arith.constant 0 : index
    %c0_54 = arith.constant 0 : index
    %62 = vector.load %arg5[%c0_53, %c0_54] : memref<1x8xf32, #tpu.memory_space<vmem>>, vector<1x8xf32>
    %63 = vector.broadcast %62 : vector<1x8xf32> to vector<288x8xf32>
    %64 = arith.addf %61, %63 : vector<288x8xf32>
    %cst_55 = arith.constant 0.000000e+00 : f32
    %65 = vector.broadcast %cst_55 : f32 to vector<288x8xf32>
    %66 = arith.maximumf %64, %65 : vector<288x8xf32>
    %c0_56 = arith.constant 0 : index
    %c0_57 = arith.constant 0 : index
    %c0_58 = arith.constant 0 : index
    %67 = vector.load %arg6[%c0_56, %c0_57, %c0_58] : memref<1x288x8xf32, #tpu.memory_space<vmem>>, vector<1x288x8xf32>
    %68 = vector.shape_cast %67 : vector<1x288x8xf32> to vector<288x8xf32>
    %69 = vector.shape_cast %66 : vector<288x8xf32> to vector<1x288x8xf32>
    tpu.vector_store %arg6[%c0_56, %c0_57, %c0_58], %69 {strides = array<i32>} : memref<1x288x8xf32, #tpu.memory_space<vmem>>, vector<1x288x8xf32>,
    return
  }
  func.func @transform_0(%arg0: i32) -> (i32, i32, i32) {
    %c0_i32 = arith.constant 0 : i32
    %c0_i32_0 = arith.constant 0 : i32
    %c0_i32_1 = arith.constant 0 : i32
    return %arg0, %c0_i32, %c0_i32_0 : i32, i32, i32
  }
  func.func @transform_1(%arg0: i32) -> (i32, i32) {
    %c0_i32 = arith.constant 0 : i32
    %c0_i32_0 = arith.constant 0 : i32
    %c0_i32_1 = arith.constant 0 : i32
    return %c0_i32, %c0_i32_0 : i32, i32
  }
  func.func @transform_2(%arg0: i32) -> (i32, i32) {
    %c0_i32 = arith.constant 0 : i32
    %c0_i32_0 = arith.constant 0 : i32
    %c0_i32_1 = arith.constant 0 : i32
    return %c0_i32, %c0_i32_0 : i32, i32
  }
  func.func @transform_3(%arg0: i32) -> (i32, i32) {
    %c0_i32 = arith.constant 0 : i32
    %c0_i32_0 = arith.constant 0 : i32
    %c0_i32_1 = arith.constant 0 : i32
    return %c0_i32, %c0_i32_0 : i32, i32
  }
  func.func @transform_4(%arg0: i32) -> (i32, i32) {
    %c0_i32 = arith.constant 0 : i32
    %c0_i32_0 = arith.constant 0 : i32
    %c0_i32_1 = arith.constant 0 : i32
    return %c0_i32, %c0_i32_0 : i32, i32
  }
  func.func @transform_5(%arg0: i32) -> (i32, i32, i32) {
    %c0_i32 = arith.constant 0 : i32
    %c0_i32_0 = arith.constant 0 : i32
    %c0_i32_1 = arith.constant 0 : i32
    return %arg0, %c0_i32, %c0_i32_0 : i32, i32, i32
  }
}

module attributes {stable_mosaic.version = 11 : i64} {
  func.func @_maxpool2x2_kernel(%arg0: i32, %arg1: memref<1x8x8x8xf32, #tpu.memory_space<vmem>>, %arg2: memref<1x8x8x8xf32, #tpu.memory_space<vmem>>, %arg3: memref<1x8x8x8xf32, #tpu.memory_space<vmem>>, %arg4: memref<1x8x8x8xf32, #tpu.memory_space<vmem>>, %arg5: memref<1x8x8x8xf32, #tpu.memory_space<vmem>>) attributes {dimension_semantics = [#tpu.dimension_semantics<parallel>], iteration_bounds = array<i64: 2>, scalar_prefetch = 0 : i64, scratch_operands = 0 : i64, tpu.core_type = #tpu.core_type<tc>, window_params = [{transform_indices = @transform_0, window_bounds = array<i64: 1, 8, 8, 8>}, {transform_indices = @transform_1, window_bounds = array<i64: 1, 8, 8, 8>}, {transform_indices = @transform_2, window_bounds = array<i64: 1, 8, 8, 8>}, {transform_indices = @transform_3, window_bounds = array<i64: 1, 8, 8, 8>}, {transform_indices = @transform_4, window_bounds = array<i64: 1, 8, 8, 8>}]} {
    %c0 = arith.constant 0 : index
    %c0_0 = arith.constant 0 : index
    %c0_1 = arith.constant 0 : index
    %c0_2 = arith.constant 0 : index
    %0 = vector.load %arg1[%c0, %c0_0, %c0_1, %c0_2] : memref<1x8x8x8xf32, #tpu.memory_space<vmem>>, vector<1x8x8x8xf32>
    %1 = vector.shape_cast %0 : vector<1x8x8x8xf32> to vector<8x8x8xf32>
    %c0_3 = arith.constant 0 : index
    %c0_4 = arith.constant 0 : index
    %c0_5 = arith.constant 0 : index
    %c0_6 = arith.constant 0 : index
    %2 = vector.load %arg2[%c0_3, %c0_4, %c0_5, %c0_6] : memref<1x8x8x8xf32, #tpu.memory_space<vmem>>, vector<1x8x8x8xf32>
    %3 = vector.shape_cast %2 : vector<1x8x8x8xf32> to vector<8x8x8xf32>
    %4 = arith.maximumf %1, %3 : vector<8x8x8xf32>
    %c0_7 = arith.constant 0 : index
    %c0_8 = arith.constant 0 : index
    %c0_9 = arith.constant 0 : index
    %c0_10 = arith.constant 0 : index
    %5 = vector.load %arg3[%c0_7, %c0_8, %c0_9, %c0_10] : memref<1x8x8x8xf32, #tpu.memory_space<vmem>>, vector<1x8x8x8xf32>
    %6 = vector.shape_cast %5 : vector<1x8x8x8xf32> to vector<8x8x8xf32>
    %c0_11 = arith.constant 0 : index
    %c0_12 = arith.constant 0 : index
    %c0_13 = arith.constant 0 : index
    %c0_14 = arith.constant 0 : index
    %7 = vector.load %arg4[%c0_11, %c0_12, %c0_13, %c0_14] : memref<1x8x8x8xf32, #tpu.memory_space<vmem>>, vector<1x8x8x8xf32>
    %8 = vector.shape_cast %7 : vector<1x8x8x8xf32> to vector<8x8x8xf32>
    %9 = arith.maximumf %6, %8 : vector<8x8x8xf32>
    %10 = arith.maximumf %4, %9 : vector<8x8x8xf32>
    %c0_15 = arith.constant 0 : index
    %c0_16 = arith.constant 0 : index
    %c0_17 = arith.constant 0 : index
    %c0_18 = arith.constant 0 : index
    %11 = vector.load %arg5[%c0_15, %c0_16, %c0_17, %c0_18] : memref<1x8x8x8xf32, #tpu.memory_space<vmem>>, vector<1x8x8x8xf32>
    %12 = vector.shape_cast %11 : vector<1x8x8x8xf32> to vector<8x8x8xf32>
    %13 = vector.shape_cast %10 : vector<8x8x8xf32> to vector<1x8x8x8xf32>
    tpu.vector_store %arg5[%c0_15, %c0_16, %c0_17, %c0_18], %13 {strides = array<i32>} : memref<1x8x8x8xf32, #tpu.memory_space<vmem>>, vector<1x8x8x8xf32>,
    return
  }
  func.func @transform_0(%arg0: i32) -> (i32, i32, i32, i32) {
    %c0_i32 = arith.constant 0 : i32
    %c0_i32_0 = arith.constant 0 : i32
    %c0_i32_1 = arith.constant 0 : i32
    %c0_i32_2 = arith.constant 0 : i32
    return %arg0, %c0_i32, %c0_i32_0, %c0_i32_1 : i32, i32, i32, i32
  }
  func.func @transform_1(%arg0: i32) -> (i32, i32, i32, i32) {
    %c0_i32 = arith.constant 0 : i32
    %c0_i32_0 = arith.constant 0 : i32
    %c0_i32_1 = arith.constant 0 : i32
    %c0_i32_2 = arith.constant 0 : i32
    return %arg0, %c0_i32, %c0_i32_0, %c0_i32_1 : i32, i32, i32, i32
  }
  func.func @transform_2(%arg0: i32) -> (i32, i32, i32, i32) {
    %c0_i32 = arith.constant 0 : i32
    %c0_i32_0 = arith.constant 0 : i32
    %c0_i32_1 = arith.constant 0 : i32
    %c0_i32_2 = arith.constant 0 : i32
    return %arg0, %c0_i32, %c0_i32_0, %c0_i32_1 : i32, i32, i32, i32
  }
  func.func @transform_3(%arg0: i32) -> (i32, i32, i32, i32) {
    %c0_i32 = arith.constant 0 : i32
    %c0_i32_0 = arith.constant 0 : i32
    %c0_i32_1 = arith.constant 0 : i32
    %c0_i32_2 = arith.constant 0 : i32
    return %arg0, %c0_i32, %c0_i32_0, %c0_i32_1 : i32, i32, i32, i32
  }
  func.func @transform_4(%arg0: i32) -> (i32, i32, i32, i32) {
    %c0_i32 = arith.constant 0 : i32
    %c0_i32_0 = arith.constant 0 : i32
    %c0_i32_1 = arith.constant 0 : i32
    %c0_i32_2 = arith.constant 0 : i32
    return %arg0, %c0_i32, %c0_i32_0, %c0_i32_1 : i32, i32, i32, i32
  }
}

</mosaic_0001>

<llo_original>
// kernel: fucking_block.3
$region0: #{fucking_block.3}
  #allocation0 [shape = 'u32[]', space=smem, size = 0x4, offset = 0x4, fixed_abs, tag = 'smem constant byte address 0x4 - core index']
  #allocation1 [shape = 'u32[144,128]{1,0:T(1,128)}', space=vmem, size = 0x12000, scoped, tag = 'internal scratch']
  %s0 = inlined_call_operand.vmem [shape: f32[2,8,8,8], index: 0, kind: input, shape index: {}]
  %s1 = inlined_call_operand.vmem [shape: f32[2,8,8,8], index: 1, kind: input, shape index: {}]
  %s2 = inlined_call_operand.vmem [shape: f32[2,8,8,8], index: 2, kind: input, shape index: {}]
  %s3 = inlined_call_operand.vmem [shape: f32[2,8,8,8], index: 3, kind: input, shape index: {}]
  %s4 = inlined_call_operand.vmem [shape: f32[2,8,8,8], index: 4, kind: output, shape index: {}]
  %s5 = sld [smem:[#allocation0]]
  $region49: #{fucking_block.3} parent=0
    _
  %s7 = ssub.s32 1, %s5
  %s8 = scalar_select 0, %s7, %s5
  loop: start=0, step=1, limit=4
  $region2: #{fucking_block.3} parent=0 // loop_pre_header
    _
  $region3: #{fucking_block.3} parent=0 // loop_header
    %s10 = sphi 0, %s14
    %p11 = scmp.ge.s32.totalorder %s10, 4
    %s20 = sphi 0, %s22
    %s23 = sphi 0, %s20
    %s24 = sphi 0, %s23
    %s40 = sphi 0, %s24
    %s46 = sphi 0, %s48
    %s49 = sphi 0, %s46
    %s50 = sphi 0, %s49
    %s66 = sphi 0, %s50
    %s72 = sphi 0, %s74
    %s75 = sphi 0, %s72
    %s76 = sphi 0, %s75
    %s92 = sphi 0, %s76
    %s98 = sphi 0, %s100
    %s101 = sphi 0, %s98
    %s102 = sphi 0, %s101
    %s118 = sphi 0, %s102
    %s124 = sphi 0, %s126
    %s127 = sphi 0, %s124
    %s128 = sphi 0, %s127
    %s144 = sphi 0, %s128
  $region4: #{fucking_block.3} parent=0 // loop_header_branch
    %13 = sbr.rel (%p11) target = $region8
  $region5: #{fucking_block.3} parent=0 // loop_body
    %s15 = ssub.s32 %s10, 1
    %s16 = ssub.s32 %s10, 2
    %s17 = sadd.s32 %s10, 1
    %s18 = ssub.s32 %s10, %s17
    %p19 = scmp.eq.s32.totalorder %s18, 0
    %s21 = sadd.s32 %s20, 1
    %s22 = scalar_select %p19, %s20, %s21
    %p25 = pneg %p19
    %p26 = scmp.eq.s32.totalorder %s10, 1
    %p27 = por %p25, %p26
    %p28 = scmp.ne.s32.totalorder %s20, %s23
    %p29 = scmp.eq.s32.totalorder %s10, 0
    %p30 = por %p28, %p29
    %p31 = scmp.ne.s32.totalorder %s20, %s23
    %p32 = scmp.eq.s32.totalorder %s15, 1
    %p33 = por %p31, %p32
    %p34 = scmp.ne.s32.totalorder %s23, %s24
    %p35 = scmp.eq.s32.totalorder %s15, 0
    %p36 = por %p34, %p35
    %p37 = scmp.ne.s32.totalorder %s23, %s24
    %p38 = scmp.eq.s32.totalorder %s16, 1
    %p39 = por %p37, %p38
    %p41 = scmp.ne.s32.totalorder %s24, %s40
    %p42 = scmp.eq.s32.totalorder %s16, 0
    %p43 = por %p41, %p42
    %s44 = ssub.s32 %s10, %s17
    %p45 = scmp.eq.s32.totalorder %s44, 0
    %s47 = sadd.s32 %s46, 1
    %s48 = scalar_select %p45, %s46, %s47
    %p51 = pneg %p45
    %p52 = scmp.eq.s32.totalorder %s10, 1
    %p53 = por %p51, %p52
    %p54 = scmp.ne.s32.totalorder %s46, %s49
    %p55 = scmp.eq.s32.totalorder %s10, 0
    %p56 = por %p54, %p55
    %p57 = scmp.ne.s32.totalorder %s46, %s49
    %p58 = scmp.eq.s32.totalorder %s15, 1
    %p59 = por %p57, %p58
    %p60 = scmp.ne.s32.totalorder %s49, %s50
    %p61 = scmp.eq.s32.totalorder %s15, 0
    %p62 = por %p60, %p61
    %p63 = scmp.ne.s32.totalorder %s49, %s50
    %p64 = scmp.eq.s32.totalorder %s16, 1
    %p65 = por %p63, %p64
    %p67 = scmp.ne.s32.totalorder %s50, %s66
    %p68 = scmp.eq.s32.totalorder %s16, 0
    %p69 = por %p67, %p68
    %s70 = ssub.s32 %s10, %s17
    %p71 = scmp.eq.s32.totalorder %s70, 0
    %s73 = sadd.s32 %s72, 1
    %s74 = scalar_select %p71, %s72, %s73
    %p77 = pneg %p71
    %p78 = scmp.eq.s32.totalorder %s10, 1
    %p79 = por %p77, %p78
    %p80 = scmp.ne.s32.totalorder %s72, %s75
    %p81 = scmp.eq.s32.totalorder %s10, 0
    %p82 = por %p80, %p81
    %p83 = scmp.ne.s32.totalorder %s72, %s75
    %p84 = scmp.eq.s32.totalorder %s15, 1
    %p85 = por %p83, %p84
    %p86 = scmp.ne.s32.totalorder %s75, %s76
    %p87 = scmp.eq.s32.totalorder %s15, 0
    %p88 = por %p86, %p87
    %p89 = scmp.ne.s32.totalorder %s75, %s76
    %p90 = scmp.eq.s32.totalorder %s16, 1
    %p91 = por %p89, %p90
    %p93 = scmp.ne.s32.totalorder %s76, %s92
    %p94 = scmp.eq.s32.totalorder %s16, 0
    %p95 = por %p93, %p94
    %s96 = ssub.s32 %s10, %s17
    %p97 = scmp.eq.s32.totalorder %s96, 0
    %s99 = sadd.s32 %s98, 1
    %s100 = scalar_select %p97, %s98, %s99
    %p103 = pneg %p97
    %p104 = scmp.eq.s32.totalorder %s10, 1
    %p105 = por %p103, %p104
    %p106 = scmp.ne.s32.totalorder %s98, %s101
    %p107 = scmp.eq.s32.totalorder %s10, 0
    %p108 = por %p106, %p107
    %p109 = scmp.ne.s32.totalorder %s98, %s101
    %p110 = scmp.eq.s32.totalorder %s15, 1
    %p111 = por %p109, %p110
    %p112 = scmp.ne.s32.totalorder %s101, %s102
    %p113 = scmp.eq.s32.totalorder %s15, 0
    %p114 = por %p112, %p113
    %p115 = scmp.ne.s32.totalorder %s101, %s102
    %p116 = scmp.eq.s32.totalorder %s16, 1
    %p117 = por %p115, %p116
    %p119 = scmp.ne.s32.totalorder %s102, %s118
    %p120 = scmp.eq.s32.totalorder %s16, 0
    %p121 = por %p119, %p120
    %s122 = ssub.s32 %s10, %s17
    %p123 = scmp.eq.s32.totalorder %s122, 0
    %s125 = sadd.s32 %s124, 1
    %s126 = scalar_select %p123, %s124, %s125
    %p129 = pneg %p123
    %p130 = scmp.eq.s32.totalorder %s10, 1
    %p131 = por %p129, %p130
    %p132 = scmp.ne.s32.totalorder %s124, %s127
    %p133 = scmp.eq.s32.totalorder %s10, 0
    %p134 = por %p132, %p133
    %p135 = scmp.ne.s32.totalorder %s124, %s127
    %p136 = scmp.eq.s32.totalorder %s15, 1
    %p137 = por %p135, %p136
    %p138 = scmp.ne.s32.totalorder %s127, %s128
    %p139 = scmp.eq.s32.totalorder %s15, 0
    %p140 = por %p138, %p139
    %p141 = scmp.ne.s32.totalorder %s127, %s128
    %p142 = scmp.eq.s32.totalorder %s16, 1
    %p143 = por %p141, %p142
    %p145 = scmp.ne.s32.totalorder %s128, %s144
    %p146 = scmp.eq.s32.totalorder %s16, 0
    %p147 = por %p145, %p146
    %p148 = scmp.le.s32.totalorder 1, %s10
    %p149 = scmp.lt.s32.totalorder %s10, 3
    %p150 = pnand %p148, %p149
    %p151 = pneg %p150
    // Predicated region
    $region9: #{fucking_block.3} parent=5 // pred_check
      _
    $region10: #{fucking_block.3} parent=5 // pred_check_branch
      %153 = sbr.rel (%p150) target = $region12
    $region11: #{fucking_block.3} parent=5 // pred_region
      %s154 = ssub.s32 %s10, 1
    $region12: #{fucking_block.3} parent=5 // pred_fallthru
      _
    %p155 = scmp.lt.s32.totalorder %s10, 2
    // Predicated region
    $region13: #{fucking_block.3} parent=5 // pred_check
      %p156 = pneg %p155
    $region14: #{fucking_block.3} parent=5 // pred_check_branch
      %158 = sbr.rel (%p156) target = $region16
    $region15: #{fucking_block.3} parent=5 // pred_region
      // Predicated region
      $region17: #{fucking_block.3} parent=15 // pred_check
        %p159 = pneg %p30
      $region18: #{fucking_block.3} parent=15 // pred_check_branch
        %161 = sbr.rel (%p159) target = $region20
      $region19: #{fucking_block.3} parent=15 // pred_region
        %p162 = scmp.lt.s32.totalorder %s10, 1
        %s163 = scalar_select %p162, %s10, 1
        %s164 = smul.addr %s163, 8
        %s165 = smul.addr %s164, 8
        %s166 = scalar_lea.vmem %s0, %s165
      $region20: #{fucking_block.3} parent=15 // pred_fallthru
        _
      // Predicated region
      $region21: #{fucking_block.3} parent=15 // pred_check
        %p167 = pneg %p56
      $region22: #{fucking_block.3} parent=15 // pred_check_branch
        %169 = sbr.rel (%p167) target = $region24
      $region23: #{fucking_block.3} parent=15 // pred_region
        %p170 = scmp.lt.s32.totalorder %s10, 1
        %s171 = scalar_select %p170, %s10, 1
        %s172 = smul.addr %s171, 8
        %s173 = smul.addr %s172, 8
        %s174 = scalar_lea.vmem %s1, %s173
      $region24: #{fucking_block.3} parent=15 // pred_fallthru
        _
      // Predicated region
      $region25: #{fucking_block.3} parent=15 // pred_check
        %p175 = pneg %p82
      $region26: #{fucking_block.3} parent=15 // pred_check_branch
        %177 = sbr.rel (%p175) target = $region28
      $region27: #{fucking_block.3} parent=15 // pred_region
        %p178 = scmp.lt.s32.totalorder %s10, 1
        %s179 = scalar_select %p178, %s10, 1
        %s180 = smul.addr %s179, 8
        %s181 = smul.addr %s180, 8
        %s182 = scalar_lea.vmem %s2, %s181
      $region28: #{fucking_block.3} parent=15 // pred_fallthru
        _
      // Predicated region
      $region29: #{fucking_block.3} parent=15 // pred_check
        %p183 = pneg %p108
      $region30: #{fucking_block.3} parent=15 // pred_check_branch
        %185 = sbr.rel (%p183) target = $region32
      $region31: #{fucking_block.3} parent=15 // pred_region
        %p186 = scmp.lt.s32.totalorder %s10, 1
        %s187 = scalar_select %p186, %s10, 1
        %s188 = smul.addr %s187, 8
        %s189 = smul.addr %s188, 8
        %s190 = scalar_lea.vmem %s3, %s189
      $region32: #{fucking_block.3} parent=15 // pred_fallthru
        _
    $region16: #{fucking_block.3} parent=5 // pred_fallthru
      _
    %p191 = scmp.le.s32.totalorder 1, %s10
    %p192 = scmp.lt.s32.totalorder %s10, 3
    %p193 = pnand %p191, %p192
    %p194 = pneg %p193
    // Predicated region
    $region33: #{fucking_block.3} parent=5 // pred_check
      _
    $region34: #{fucking_block.3} parent=5 // pred_check_branch
      %196 = sbr.rel (%p193) target = $region36
    $region35: #{fucking_block.3} parent=5 // pred_region
      %s197 = ssub.s32 %s10, 1
      %p198 = scmp.lt.s32.totalorder %s15, 1
      %s199 = scalar_select %p198, %s15, 1
      %s200 = smul.addr %s199, 8
      %s201 = smul.addr %s200, 8
      %s202 = scalar_lea.vmem %s0, %s201
      %p203 = pneg %p36
      %p204 = pneg %p33
      %p205 = scmp.lt.s32.totalorder %s15, 1
      %s206 = scalar_select %p205, %s15, 1
      %s207 = smul.addr %s206, 8
      %s208 = smul.addr %s207, 8
      %s209 = scalar_lea.vmem %s1, %s208
      %p210 = pneg %p62
      %p211 = pneg %p59
      %p212 = scmp.lt.s32.totalorder %s15, 1
      %s213 = scalar_select %p212, %s15, 1
      %s214 = smul.addr %s213, 8
      %s215 = smul.addr %s214, 8
      %s216 = scalar_lea.vmem %s2, %s215
      %p217 = pneg %p88
      %p218 = pneg %p85
      %p219 = scmp.lt.s32.totalorder %s15, 1
      %s220 = scalar_select %p219, %s15, 1
      %s221 = smul.addr %s220, 8
      %s222 = smul.addr %s221, 8
      %s223 = scalar_lea.vmem %s3, %s222
      %p224 = pneg %p114
      %p225 = pneg %p111
      %p226 = pneg %p140
      %p227 = pneg %p137
      %p228 = scmp.lt.s32.totalorder %s15, 1
      %s229 = scalar_select %p228, %s15, 1
      %s230 = smul.addr %s229, 8
      %s231 = smul.addr %s230, 8
      %s232 = scalar_lea.vmem %s4, %s231
      %p233 = scmp.lt.s32.totalorder %s15, 1
      %s234 = scalar_select %p233, %s15, 1
      %s235 = smul.addr %s234, 8
      %s236 = smul.addr %s235, 8
      %s237 = scalar_lea.vmem %s0, %s236
      %p238 = scmp.lt.s32.totalorder %s15, 1
      %s239 = scalar_select %p238, %s15, 1
      %s240 = smul.addr %s239, 8
      %s241 = smul.addr %s240, 8
      %s242 = scalar_lea.vmem %s1, %s241
      %p243 = scmp.lt.s32.totalorder %s15, 1
      %s244 = scalar_select %p243, %s15, 1
      %s245 = smul.addr %s244, 8
      %s246 = smul.addr %s245, 8
      %s247 = scalar_lea.vmem %s2, %s246
      %p248 = scmp.lt.s32.totalorder %s15, 1
      %s249 = scalar_select %p248, %s15, 1
      %s250 = smul.addr %s249, 8
      %s251 = smul.addr %s250, 8
      %s252 = scalar_lea.vmem %s3, %s251
      %p253 = scmp.lt.s32.totalorder %s15, 1
      %s254 = scalar_select %p253, %s15, 1
      %s255 = smul.addr %s254, 8
      %s256 = smul.addr %s255, 8
      %s257 = scalar_lea.vmem %s4, %s256
      %v258 = vld [vmem:[%s237] sm:$0xff]
      %v259 = vld [vmem:[%s237 + $0x8] sm:$0xff]
      %v260 = vld [vmem:[%s237 + $0x10] sm:$0xff]
      %v261 = vld [vmem:[%s237 + $0x18] sm:$0xff]
      %v262 = vld [vmem:[%s237 + $0x20] sm:$0xff]
      %v263 = vld [vmem:[%s237 + $0x28] sm:$0xff]
      %v264 = vld [vmem:[%s237 + $0x30] sm:$0xff]
      %v265 = vld [vmem:[%s237 + $0x38] sm:$0xff]
      %v266 = vld [vmem:[%s242] sm:$0xff]
      %v267 = vld [vmem:[%s242 + $0x8] sm:$0xff]
      %v268 = vld [vmem:[%s242 + $0x10] sm:$0xff]
      %v269 = vld [vmem:[%s242 + $0x18] sm:$0xff]
      %v270 = vld [vmem:[%s242 + $0x20] sm:$0xff]
      %v271 = vld [vmem:[%s242 + $0x28] sm:$0xff]
      %v272 = vld [vmem:[%s242 + $0x30] sm:$0xff]
      %v273 = vld [vmem:[%s242 + $0x38] sm:$0xff]
      %v274 = vmax.f32 %v258, %v266
      %v275 = vmax.f32 %v259, %v267
      %v276 = vmax.f32 %v260, %v268
      %v277 = vmax.f32 %v261, %v269
      %v278 = vmax.f32 %v262, %v270
      %v279 = vmax.f32 %v263, %v271
      %v280 = vmax.f32 %v264, %v272
      %v281 = vmax.f32 %v265, %v273
      %v282 = vld [vmem:[%s247] sm:$0xff]
      %v283 = vld [vmem:[%s247 + $0x8] sm:$0xff]
      %v284 = vld [vmem:[%s247 + $0x10] sm:$0xff]
      %v285 = vld [vmem:[%s247 + $0x18] sm:$0xff]
      %v286 = vld [vmem:[%s247 + $0x20] sm:$0xff]
      %v287 = vld [vmem:[%s247 + $0x28] sm:$0xff]
      %v288 = vld [vmem:[%s247 + $0x30] sm:$0xff]
      %v289 = vld [vmem:[%s247 + $0x38] sm:$0xff]
      %v290 = vld [vmem:[%s252] sm:$0xff]
      %v291 = vld [vmem:[%s252 + $0x8] sm:$0xff]
      %v292 = vld [vmem:[%s252 + $0x10] sm:$0xff]
      %v293 = vld [vmem:[%s252 + $0x18] sm:$0xff]
      %v294 = vld [vmem:[%s252 + $0x20] sm:$0xff]
      %v295 = vld [vmem:[%s252 + $0x28] sm:$0xff]
      %v296 = vld [vmem:[%s252 + $0x30] sm:$0xff]
      %v297 = vld [vmem:[%s252 + $0x38] sm:$0xff]
      %v298 = vmax.f32 %v282, %v290
      %v299 = vmax.f32 %v283, %v291
      %v300 = vmax.f32 %v284, %v292
      %v301 = vmax.f32 %v285, %v293
      %v302 = vmax.f32 %v286, %v294
      %v303 = vmax.f32 %v287, %v295
      %v304 = vmax.f32 %v288, %v296
      %v305 = vmax.f32 %v289, %v297
      %v306 = vmax.f32 %v274, %v298
      %v307 = vmax.f32 %v275, %v299
      %v308 = vmax.f32 %v276, %v300
      %v309 = vmax.f32 %v277, %v301
      %v310 = vmax.f32 %v278, %v302
      %v311 = vmax.f32 %v279, %v303
      %v312 = vmax.f32 %v280, %v304
      %v313 = vmax.f32 %v281, %v305
      %vm314 = vcmask 64512
      %315 = vst.msk [vmem:[%s257] sm:$0xff] %vm314, %v306
      %316 = vst.msk [vmem:[%s257 + $0x8] sm:$0xff] %vm314, %v307
      %317 = vst.msk [vmem:[%s257 + $0x10] sm:$0xff] %vm314, %v308
      %318 = vst.msk [vmem:[%s257 + $0x18] sm:$0xff] %vm314, %v309
      %319 = vst.msk [vmem:[%s257 + $0x20] sm:$0xff] %vm314, %v310
      %320 = vst.msk [vmem:[%s257 + $0x28] sm:$0xff] %vm314, %v311
      %321 = vst.msk [vmem:[%s257 + $0x30] sm:$0xff] %vm314, %v312
      %322 = vst.msk [vmem:[%s257 + $0x38] sm:$0xff] %vm314, %v313
      %p323 = scmp.lt.s32.totalorder %s15, 1
      %s324 = scalar_select %p323, %s15, 1
      %s325 = smul.addr %s324, 8
      %s326 = smul.addr %s325, 8
      %s327 = scalar_lea.vmem %s4, %s326
      // Predicated region
      $region37: #{fucking_block.3} parent=35 // pred_check
        %p328 = pneg %p137
      $region38: #{fucking_block.3} parent=35 // pred_check_branch
        %330 = sbr.rel (%p328) target = $region40
      $region39: #{fucking_block.3} parent=35 // pred_region
        _
      $region40: #{fucking_block.3} parent=35 // pred_fallthru
        _
    $region36: #{fucking_block.3} parent=5 // pred_fallthru
      _
    %p331 = scmp.le.s32.totalorder 2, %s10
    // Predicated region
    $region41: #{fucking_block.3} parent=5 // pred_check
      %p332 = pneg %p331
    $region42: #{fucking_block.3} parent=5 // pred_check_branch
      %334 = sbr.rel (%p332) target = $region44
    $region43: #{fucking_block.3} parent=5 // pred_region
      %s335 = ssub.s32 %s10, 2
      // Predicated region
      $region45: #{fucking_block.3} parent=43 // pred_check
        %p336 = pneg %p143
      $region46: #{fucking_block.3} parent=43 // pred_check_branch
        %338 = sbr.rel (%p336) target = $region48
      $region47: #{fucking_block.3} parent=43 // pred_region
        %p339 = scmp.lt.s32.totalorder %s16, 1
        %s340 = scalar_select %p339, %s16, 1
        %s341 = smul.addr %s340, 8
        %s342 = smul.addr %s341, 8
        %s343 = scalar_lea.vmem %s4, %s342
      $region48: #{fucking_block.3} parent=43 // pred_fallthru
        _
    $region44: #{fucking_block.3} parent=5 // pred_fallthru
      _
  $region6: #{fucking_block.3} parent=0 // loop_footer
    %s14 = sadd.s32 1, %s10
  $region7: #{fucking_block.3} parent=0 // loop_footer_branch
    %9 = sbr.rel target = $region3
  $region8: #{fucking_block.3} parent=0 // loop_exit
    _

// kernel: fucking_block.2
$region0: #{fucking_block.2}
  #allocation0 [shape = 'u32[]', space=smem, size = 0x4, offset = 0x4, fixed_abs, tag = 'smem constant byte address 0x4 - core index']
  #allocation1 [shape = 'u32[144,128]{1,0:T(1,128)}', space=vmem, size = 0x12000, scoped, tag = 'internal scratch']
  #allocation2 [shape = 'f32[342,8]{1,0:T(8,128)}', space=vmem, size = 0x2b000, scoped, tag = 'scratch operand']
  %s0 = inlined_call_operand.vmem [shape: f32[2,342,4], index: 0, kind: input, shape index: {}]
  %s1 = inlined_call_operand.vmem [shape: f32[36,8], index: 1, kind: input, shape index: {}]
  %s2 = inlined_call_operand.vmem [shape: f32[1,8], index: 2, kind: input, shape index: {}]
  %s3 = inlined_call_operand.vmem [shape: f32[72,8], index: 3, kind: input, shape index: {}]
  %s4 = inlined_call_operand.vmem [shape: f32[1,8], index: 4, kind: input, shape index: {}]
  %s5 = inlined_call_operand.vmem [shape: f32[2,288,8], index: 5, kind: output, shape index: {}]
  %s6 = sld [smem:[#allocation0]]
  $region53: #{fucking_block.2} parent=0
    _
  %s8 = ssub.s32 1, %s6
  %s9 = scalar_select 0, %s8, %s6
  loop: start=0, step=1, limit=4
  $region2: #{fucking_block.2} parent=0 // loop_pre_header
    _
  $region3: #{fucking_block.2} parent=0 // loop_header
    %s11 = sphi 0, %s15
    %p12 = scmp.ge.s32.totalorder %s11, 4
    %s21 = sphi 0, %s23
    %s24 = sphi 0, %s21
    %s25 = sphi 0, %s24
    %s41 = sphi 0, %s25
    %s45 = sphi 0, %s45
    %s47 = sphi 0, %s45
    %s48 = sphi 0, %s47
    %s62 = sphi 0, %s48
    %s66 = sphi 0, %s66
    %s68 = sphi 0, %s66
    %s69 = sphi 0, %s68
    %s83 = sphi 0, %s69
    %s87 = sphi 0, %s87
    %s89 = sphi 0, %s87
    %s90 = sphi 0, %s89
    %s104 = sphi 0, %s90
    %s108 = sphi 0, %s108
    %s110 = sphi 0, %s108
    %s111 = sphi 0, %s110
    %s125 = sphi 0, %s111
    %s131 = sphi 0, %s133
    %s134 = sphi 0, %s131
    %s135 = sphi 0, %s134
    %s151 = sphi 0, %s135
  $region4: #{fucking_block.2} parent=0 // loop_header_branch
    %14 = sbr.rel (%p12) target = $region8
  $region5: #{fucking_block.2} parent=0 // loop_body
    %s16 = ssub.s32 %s11, 1
    %s17 = ssub.s32 %s11, 2
    %s18 = sadd.s32 %s11, 1
    %s19 = ssub.s32 %s11, %s18
    %p20 = scmp.eq.s32.totalorder %s19, 0
    %s22 = sadd.s32 %s21, 1
    %s23 = scalar_select %p20, %s21, %s22
    %p26 = pneg %p20
    %p27 = scmp.eq.s32.totalorder %s11, 1
    %p28 = por %p26, %p27
    %p29 = scmp.ne.s32.totalorder %s21, %s24
    %p30 = scmp.eq.s32.totalorder %s11, 0
    %p31 = por %p29, %p30
    %p32 = scmp.ne.s32.totalorder %s21, %s24
    %p33 = scmp.eq.s32.totalorder %s16, 1
    %p34 = por %p32, %p33
    %p35 = scmp.ne.s32.totalorder %s24, %s25
    %p36 = scmp.eq.s32.totalorder %s16, 0
    %p37 = por %p35, %p36
    %p38 = scmp.ne.s32.totalorder %s24, %s25
    %p39 = scmp.eq.s32.totalorder %s17, 1
    %p40 = por %p38, %p39
    %p42 = scmp.ne.s32.totalorder %s25, %s41
    %p43 = scmp.eq.s32.totalorder %s17, 0
    %p44 = por %p42, %p43
    %s46 = sadd.s32 %s45, 1
    %p49 = scmp.eq.s32.totalorder %s11, 1
    %p50 = scmp.ne.s32.totalorder %s45, %s47
    %p51 = scmp.eq.s32.totalorder %s11, 0
    %p52 = por %p50, %p51
    %p53 = scmp.ne.s32.totalorder %s45, %s47
    %p54 = scmp.eq.s32.totalorder %s16, 1
    %p55 = por %p53, %p54
    %p56 = scmp.ne.s32.totalorder %s47, %s48
    %p57 = scmp.eq.s32.totalorder %s16, 0
    %p58 = por %p56, %p57
    %p59 = scmp.ne.s32.totalorder %s47, %s48
    %p60 = scmp.eq.s32.totalorder %s17, 1
    %p61 = por %p59, %p60
    %p63 = scmp.ne.s32.totalorder %s48, %s62
    %p64 = scmp.eq.s32.totalorder %s17, 0
    %p65 = por %p63, %p64
    %s67 = sadd.s32 %s66, 1
    %p70 = scmp.eq.s32.totalorder %s11, 1
    %p71 = scmp.ne.s32.totalorder %s66, %s68
    %p72 = scmp.eq.s32.totalorder %s11, 0
    %p73 = por %p71, %p72
    %p74 = scmp.ne.s32.totalorder %s66, %s68
    %p75 = scmp.eq.s32.totalorder %s16, 1
    %p76 = por %p74, %p75
    %p77 = scmp.ne.s32.totalorder %s68, %s69
    %p78 = scmp.eq.s32.totalorder %s16, 0
    %p79 = por %p77, %p78
    %p80 = scmp.ne.s32.totalorder %s68, %s69
    %p81 = scmp.eq.s32.totalorder %s17, 1
    %p82 = por %p80, %p81
    %p84 = scmp.ne.s32.totalorder %s69, %s83
    %p85 = scmp.eq.s32.totalorder %s17, 0
    %p86 = por %p84, %p85
    %s88 = sadd.s32 %s87, 1
    %p91 = scmp.eq.s32.totalorder %s11, 1
    %p92 = scmp.ne.s32.totalorder %s87, %s89
    %p93 = scmp.eq.s32.totalorder %s11, 0
    %p94 = por %p92, %p93
    %p95 = scmp.ne.s32.totalorder %s87, %s89
    %p96 = scmp.eq.s32.totalorder %s16, 1
    %p97 = por %p95, %p96
    %p98 = scmp.ne.s32.totalorder %s89, %s90
    %p99 = scmp.eq.s32.totalorder %s16, 0
    %p100 = por %p98, %p99
    %p101 = scmp.ne.s32.totalorder %s89, %s90
    %p102 = scmp.eq.s32.totalorder %s17, 1
    %p103 = por %p101, %p102
    %p105 = scmp.ne.s32.totalorder %s90, %s104
    %p106 = scmp.eq.s32.totalorder %s17, 0
    %p107 = por %p105, %p106
    %s109 = sadd.s32 %s108, 1
    %p112 = scmp.eq.s32.totalorder %s11, 1
    %p113 = scmp.ne.s32.totalorder %s108, %s110
    %p114 = scmp.eq.s32.totalorder %s11, 0
    %p115 = por %p113, %p114
    %p116 = scmp.ne.s32.totalorder %s108, %s110
    %p117 = scmp.eq.s32.totalorder %s16, 1
    %p118 = por %p116, %p117
    %p119 = scmp.ne.s32.totalorder %s110, %s111
    %p120 = scmp.eq.s32.totalorder %s16, 0
    %p121 = por %p119, %p120
    %p122 = scmp.ne.s32.totalorder %s110, %s111
    %p123 = scmp.eq.s32.totalorder %s17, 1
    %p124 = por %p122, %p123
    %p126 = scmp.ne.s32.totalorder %s111, %s125
    %p127 = scmp.eq.s32.totalorder %s17, 0
    %p128 = por %p126, %p127
    %s129 = ssub.s32 %s11, %s18
    %p130 = scmp.eq.s32.totalorder %s129, 0
    %s132 = sadd.s32 %s131, 1
    %s133 = scalar_select %p130, %s131, %s132
    %p136 = pneg %p130
    %p137 = scmp.eq.s32.totalorder %s11, 1
    %p138 = por %p136, %p137
    %p139 = scmp.ne.s32.totalorder %s131, %s134
    %p140 = scmp.eq.s32.totalorder %s11, 0
    %p141 = por %p139, %p140
    %p142 = scmp.ne.s32.totalorder %s131, %s134
    %p143 = scmp.eq.s32.totalorder %s16, 1
    %p144 = por %p142, %p143
    %p145 = scmp.ne.s32.totalorder %s134, %s135
    %p146 = scmp.eq.s32.totalorder %s16, 0
    %p147 = por %p145, %p146
    %p148 = scmp.ne.s32.totalorder %s134, %s135
    %p149 = scmp.eq.s32.totalorder %s17, 1
    %p150 = por %p148, %p149
    %p152 = scmp.ne.s32.totalorder %s135, %s151
    %p153 = scmp.eq.s32.totalorder %s17, 0
    %p154 = por %p152, %p153
    %p155 = scmp.le.s32.totalorder 1, %s11
    %p156 = scmp.lt.s32.totalorder %s11, 3
    %p157 = pnand %p155, %p156
    %p158 = pneg %p157
    // Predicated region
    $region9: #{fucking_block.2} parent=5 // pred_check
      _
    $region10: #{fucking_block.2} parent=5 // pred_check_branch
      %160 = sbr.rel (%p157) target = $region12
    $region11: #{fucking_block.2} parent=5 // pred_region
      %s161 = ssub.s32 %s11, 1
      // Predicated region
      $region13: #{fucking_block.2} parent=11 // pred_check
        %p162 = pneg %p58
      $region14: #{fucking_block.2} parent=11 // pred_check_branch
        %164 = sbr.rel (%p162) target = $region16
      $region15: #{fucking_block.2} parent=11 // pred_region
        _
      $region16: #{fucking_block.2} parent=11 // pred_fallthru
        _
      // Predicated region
      $region17: #{fucking_block.2} parent=11 // pred_check
        %p165 = pneg %p79
      $region18: #{fucking_block.2} parent=11 // pred_check_branch
        %167 = sbr.rel (%p165) target = $region20
      $region19: #{fucking_block.2} parent=11 // pred_region
        _
      $region20: #{fucking_block.2} parent=11 // pred_fallthru
        _
      // Predicated region
      $region21: #{fucking_block.2} parent=11 // pred_check
        %p168 = pneg %p100
      $region22: #{fucking_block.2} parent=11 // pred_check_branch
        %170 = sbr.rel (%p168) target = $region24
      $region23: #{fucking_block.2} parent=11 // pred_region
        _
      $region24: #{fucking_block.2} parent=11 // pred_fallthru
        _
      // Predicated region
      $region25: #{fucking_block.2} parent=11 // pred_check
        %p171 = pneg %p121
      $region26: #{fucking_block.2} parent=11 // pred_check_branch
        %173 = sbr.rel (%p171) target = $region28
      $region27: #{fucking_block.2} parent=11 // pred_region
        _
      $region28: #{fucking_block.2} parent=11 // pred_fallthru
        _
    $region12: #{fucking_block.2} parent=5 // pred_fallthru
      _
    %p174 = scmp.lt.s32.totalorder %s11, 2
    // Predicated region
    $region29: #{fucking_block.2} parent=5 // pred_check
      %p175 = pneg %p174
    $region30: #{fucking_block.2} parent=5 // pred_check_branch
      %177 = sbr.rel (%p175) target = $region32
    $region31: #{fucking_block.2} parent=5 // pred_region
      // Predicated region
      $region33: #{fucking_block.2} parent=31 // pred_check
        %p178 = pneg %p31
      $region34: #{fucking_block.2} parent=31 // pred_check_branch
        %180 = sbr.rel (%p178) target = $region36
      $region35: #{fucking_block.2} parent=31 // pred_region
        %p181 = scmp.lt.s32.totalorder %s11, 1
        %s182 = scalar_select %p181, %s11, 1
        %s183 = smul.addr %s182, 43
        %s184 = smul.addr %s183, 8
        %s185 = scalar_lea.vmem %s0, %s184
      $region36: #{fucking_block.2} parent=31 // pred_fallthru
        _
    $region32: #{fucking_block.2} parent=5 // pred_fallthru
      _
    %p186 = scmp.le.s32.totalorder 1, %s11
    %p187 = scmp.lt.s32.totalorder %s11, 3
    %p188 = pnand %p186, %p187
    %p189 = pneg %p188
    // Predicated region
    $region37: #{fucking_block.2} parent=5 // pred_check
      _
    $region38: #{fucking_block.2} parent=5 // pred_check_branch
      %191 = sbr.rel (%p188) target = $region40
    $region39: #{fucking_block.2} parent=5 // pred_region
      %s192 = ssub.s32 %s11, 1
      %p193 = scmp.lt.s32.totalorder %s16, 1
      %s194 = scalar_select %p193, %s16, 1
      %s195 = smul.addr %s194, 43
      %s196 = smul.addr %s195, 8
      %s197 = scalar_lea.vmem %s0, %s196
      %p198 = pneg %p37
      %p199 = pneg %p34
      %p200 = pneg %p58
      %p201 = pneg %p55
      %p202 = pneg %p79
      %p203 = pneg %p76
      %p204 = pneg %p100
      %p205 = pneg %p97
      %p206 = pneg %p121
      %p207 = pneg %p118
      %p208 = pneg %p147
      %p209 = pneg %p144
      %p210 = scmp.lt.s32.totalorder %s16, 1
      %s211 = scalar_select %p210, %s16, 1
      %s212 = smul.addr %s211, 36
      %s213 = smul.addr %s212, 8
      %s214 = scalar_lea.vmem %s5, %s213
      %p215 = scmp.lt.s32.totalorder %s16, 1
      %s216 = scalar_select %p215, %s16, 1
      %s217 = smul.addr %s216, 43
      %s218 = smul.addr %s217, 8
      %s219 = scalar_lea.vmem %s0, %s218
      %p220 = scmp.lt.s32.totalorder %s16, 1
      %s221 = scalar_select %p220, %s16, 1
      %s222 = smul.addr %s221, 36
      %s223 = smul.addr %s222, 8
      %s224 = scalar_lea.vmem %s5, %s223
      %v225 = vld [vmem:[%s219] sm:$0xff]
      %v226 = vld [vmem:[%s219 + $0x8] sm:$0xff]
      %v227 = vld [vmem:[%s219 + $0x10] sm:$0xff]
      %v228 = vld [vmem:[%s219 + $0x18] sm:$0xff]
      %v229 = vld [vmem:[%s219 + $0x20] sm:$0xff]
      %v230 = vld [vmem:[%s219 + $0x28] sm:$0xff]
      %v231 = vld [vmem:[%s219 + $0x30] sm:$0xff]
      %v232 = vld [vmem:[%s219 + $0x38] sm:$0xff]
      %v233 = vld [vmem:[%s219 + $0x40] sm:$0xff]
      %v234 = vld [vmem:[%s219 + $0x48] sm:$0xff]
      %v235 = vld [vmem:[%s219 + $0x50] sm:$0xff]
      %v236 = vld [vmem:[%s219 + $0x58] sm:$0xff]
      %v237 = vld [vmem:[%s219 + $0x60] sm:$0xff]
      %v238 = vld [vmem:[%s219 + $0x68] sm:$0xff]
      %v239 = vld [vmem:[%s219 + $0x70] sm:$0xff]
      %v240 = vld [vmem:[%s219 + $0x78] sm:$0xff]
      %v241 = vld [vmem:[%s219 + $0x80] sm:$0xff]
      %v242 = vld [vmem:[%s219 + $0x88] sm:$0xff]
      %v243 = vld [vmem:[%s219 + $0x90] sm:$0xff]
      %v244 = vld [vmem:[%s219 + $0x98] sm:$0xff]
      %v245 = vld [vmem:[%s219 + $0xa0] sm:$0xff]
      %v246 = vld [vmem:[%s219 + $0xa8] sm:$0xff]
      %v247 = vld [vmem:[%s219 + $0xb0] sm:$0xff]
      %v248 = vld [vmem:[%s219 + $0xb8] sm:$0xff]
      %v249 = vld [vmem:[%s219 + $0xc0] sm:$0xff]
      %v250 = vld [vmem:[%s219 + $0xc8] sm:$0xff]
      %v251 = vld [vmem:[%s219 + $0xd0] sm:$0xff]
      %v252 = vld [vmem:[%s219 + $0xd8] sm:$0xff]
      %v253 = vld [vmem:[%s219 + $0xe0] sm:$0xff]
      %v254 = vld [vmem:[%s219 + $0xe8] sm:$0xff]
      %v255 = vld [vmem:[%s219 + $0xf0] sm:$0xff]
      %v256 = vld [vmem:[%s219 + $0xf8] sm:$0xff]
      %v257 = vld [vmem:[%s219 + $0x100] sm:$0xff]
      %v258 = vld [vmem:[%s219 + $0x108] sm:$0xff]
      %v259 = vld [vmem:[%s219 + $0x110] sm:$0xff]
      %v260 = vld [vmem:[%s219 + $0x118] sm:$0xff]
      %v261 = vld [vmem:[%s219 + $0x1] sm:$0xff]
      %v262 = vld [vmem:[%s219 + $0x9] sm:$0xff]
      %v263 = vld [vmem:[%s219 + $0x11] sm:$0xff]
      %v264 = vld [vmem:[%s219 + $0x19] sm:$0xff]
      %v265 = vld [vmem:[%s219 + $0x21] sm:$0xff]
      %v266 = vld [vmem:[%s219 + $0x29] sm:$0xff]
      %v267 = vld [vmem:[%s219 + $0x31] sm:$0xff]
      %v268 = vld [vmem:[%s219 + $0x39] sm:$0xff]
      %v269 = vld [vmem:[%s219 + $0x41] sm:$0xff]
      %v270 = vld [vmem:[%s219 + $0x49] sm:$0xff]
      %v271 = vld [vmem:[%s219 + $0x51] sm:$0xff]
      %v272 = vld [vmem:[%s219 + $0x59] sm:$0xff]
      %v273 = vld [vmem:[%s219 + $0x61] sm:$0xff]
      %v274 = vld [vmem:[%s219 + $0x69] sm:$0xff]
      %v275 = vld [vmem:[%s219 + $0x71] sm:$0xff]
      %v276 = vld [vmem:[%s219 + $0x79] sm:$0xff]
      %v277 = vld [vmem:[%s219 + $0x81] sm:$0xff]
      %v278 = vld [vmem:[%s219 + $0x89] sm:$0xff]
      %v279 = vld [vmem:[%s219 + $0x91] sm:$0xff]
      %v280 = vld [vmem:[%s219 + $0x99] sm:$0xff]
      %v281 = vld [vmem:[%s219 + $0xa1] sm:$0xff]
      %v282 = vld [vmem:[%s219 + $0xa9] sm:$0xff]
      %v283 = vld [vmem:[%s219 + $0xb1] sm:$0xff]
      %v284 = vld [vmem:[%s219 + $0xb9] sm:$0xff]
      %v285 = vld [vmem:[%s219 + $0xc1] sm:$0xff]
      %v286 = vld [vmem:[%s219 + $0xc9] sm:$0xff]
      %v287 = vld [vmem:[%s219 + $0xd1] sm:$0xff]
      %v288 = vld [vmem:[%s219 + $0xd9] sm:$0xff]
      %v289 = vld [vmem:[%s219 + $0xe1] sm:$0xff]
      %v290 = vld [vmem:[%s219 + $0xe9] sm:$0xff]
      %v291 = vld [vmem:[%s219 + $0xf1] sm:$0xff]
      %v292 = vld [vmem:[%s219 + $0xf9] sm:$0xff]
      %v293 = vld [vmem:[%s219 + $0x101] sm:$0xff]
      %v294 = vld [vmem:[%s219 + $0x109] sm:$0xff]
      %v295 = vld [vmem:[%s219 + $0x111] sm:$0xff]
      %v296 = vld [vmem:[%s219 + $0x119] sm:$0xff]
      %v297 = vld [vmem:[%s219 + $0x2] sm:$0xff]
      %v298 = vld [vmem:[%s219 + $0xa] sm:$0xff]
      %v299 = vld [vmem:[%s219 + $0x12] sm:$0xff]
      %v300 = vld [vmem:[%s219 + $0x1a] sm:$0xff]
      %v301 = vld [vmem:[%s219 + $0x22] sm:$0xff]
      %v302 = vld [vmem:[%s219 + $0x2a] sm:$0xff]
      %v303 = vld [vmem:[%s219 + $0x32] sm:$0xff]
      %v304 = vld [vmem:[%s219 + $0x3a] sm:$0xff]
      %v305 = vld [vmem:[%s219 + $0x42] sm:$0xff]
      %v306 = vld [vmem:[%s219 + $0x4a] sm:$0xff]
      %v307 = vld [vmem:[%s219 + $0x52] sm:$0xff]
      %v308 = vld [vmem:[%s219 + $0x5a] sm:$0xff]
      %v309 = vld [vmem:[%s219 + $0x62] sm:$0xff]
      %v310 = vld [vmem:[%s219 + $0x6a] sm:$0xff]
      %v311 = vld [vmem:[%s219 + $0x72] sm:$0xff]
      %v312 = vld [vmem:[%s219 + $0x7a] sm:$0xff]
      %v313 = vld [vmem:[%s219 + $0x82] sm:$0xff]
      %v314 = vld [vmem:[%s219 + $0x8a] sm:$0xff]
      %v315 = vld [vmem:[%s219 + $0x92] sm:$0xff]
      %v316 = vld [vmem:[%s219 + $0x9a] sm:$0xff]
      %v317 = vld [vmem:[%s219 + $0xa2] sm:$0xff]
      %v318 = vld [vmem:[%s219 + $0xaa] sm:$0xff]
      %v319 = vld [vmem:[%s219 + $0xb2] sm:$0xff]
      %v320 = vld [vmem:[%s219 + $0xba] sm:$0xff]
      %v321 = vld [vmem:[%s219 + $0xc2] sm:$0xff]
      %v322 = vld [vmem:[%s219 + $0xca] sm:$0xff]
      %v323 = vld [vmem:[%s219 + $0xd2] sm:$0xff]
      %v324 = vld [vmem:[%s219 + $0xda] sm:$0xff]
      %v325 = vld [vmem:[%s219 + $0xe2] sm:$0xff]
      %v326 = vld [vmem:[%s219 + $0xea] sm:$0xff]
      %v327 = vld [vmem:[%s219 + $0xf2] sm:$0xff]
      %v328 = vld [vmem:[%s219 + $0xfa] sm:$0xff]
      %v329 = vld [vmem:[%s219 + $0x102] sm:$0xff]
      %v330 = vld [vmem:[%s219 + $0x10a] sm:$0xff]
      %v331 = vld [vmem:[%s219 + $0x112] sm:$0xff]
      %v332 = vld [vmem:[%s219 + $0x11a] sm:$0xff]
      %v333 = vld [vmem:[%s219 + $0x122] sm:$0xff]
      %v334 = vld [vmem:[%s219 + $0x12a] sm:$0xff]
      %v335 = vld [vmem:[%s219 + $0x13] sm:$0xff]
      %v336 = vld [vmem:[%s219 + $0x1b] sm:$0xff]
      %v337 = vld [vmem:[%s219 + $0x23] sm:$0xff]
      %v338 = vld [vmem:[%s219 + $0x2b] sm:$0xff]
      %v339 = vld [vmem:[%s219 + $0x33] sm:$0xff]
      %v340 = vld [vmem:[%s219 + $0x3b] sm:$0xff]
      %v341 = vld [vmem:[%s219 + $0x43] sm:$0xff]
      %v342 = vld [vmem:[%s219 + $0x4b] sm:$0xff]
      %v343 = vld [vmem:[%s219 + $0x53] sm:$0xff]
      %v344 = vld [vmem:[%s219 + $0x5b] sm:$0xff]
      %v345 = vld [vmem:[%s219 + $0x63] sm:$0xff]
      %v346 = vld [vmem:[%s219 + $0x6b] sm:$0xff]
      %v347 = vld [vmem:[%s219 + $0x73] sm:$0xff]
      %v348 = vld [vmem:[%s219 + $0x7b] sm:$0xff]
      %v349 = vld [vmem:[%s219 + $0x83] sm:$0xff]
      %v350 = vld [vmem:[%s219 + $0x8b] sm:$0xff]
      %v351 = vld [vmem:[%s219 + $0x93] sm:$0xff]
      %v352 = vld [vmem:[%s219 + $0x9b] sm:$0xff]
      %v353 = vld [vmem:[%s219 + $0xa3] sm:$0xff]
      %v354 = vld [vmem:[%s219 + $0xab] sm:$0xff]
      %v355 = vld [vmem:[%s219 + $0xb3] sm:$0xff]
      %v356 = vld [vmem:[%s219 + $0xbb] sm:$0xff]
      %v357 = vld [vmem:[%s219 + $0xc3] sm:$0xff]
      %v358 = vld [vmem:[%s219 + $0xcb] sm:$0xff]
      %v359 = vld [vmem:[%s219 + $0xd3] sm:$0xff]
      %v360 = vld [vmem:[%s219 + $0xdb] sm:$0xff]
      %v361 = vld [vmem:[%s219 + $0xe3] sm:$0xff]
      %v362 = vld [vmem:[%s219 + $0xeb] sm:$0xff]
      %v363 = vld [vmem:[%s219 + $0xf3] sm:$0xff]
      %v364 = vld [vmem:[%s219 + $0xfb] sm:$0xff]
      %v365 = vld [vmem:[%s219 + $0x103] sm:$0xff]
      %v366 = vld [vmem:[%s219 + $0x10b] sm:$0xff]
      %v367 = vld [vmem:[%s219 + $0x113] sm:$0xff]
      %v368 = vld [vmem:[%s219 + $0x11b] sm:$0xff]
      %v369 = vld [vmem:[%s219 + $0x123] sm:$0xff]
      %v370 = vld [vmem:[%s219 + $0x12b] sm:$0xff]
      %v371 = vld [vmem:[%s219 + $0x14] sm:$0xff]
      %v372 = vld [vmem:[%s219 + $0x1c] sm:$0xff]
      %v373 = vld [vmem:[%s219 + $0x24] sm:$0xff]
      %v374 = vld [vmem:[%s219 + $0x2c] sm:$0xff]
      %v375 = vld [vmem:[%s219 + $0x34] sm:$0xff]
      %v376 = vld [vmem:[%s219 + $0x3c] sm:$0xff]
      %v377 = vld [vmem:[%s219 + $0x44] sm:$0xff]
      %v378 = vld [vmem:[%s219 + $0x4c] sm:$0xff]
      %v379 = vld [vmem:[%s219 + $0x54] sm:$0xff]
      %v380 = vld [vmem:[%s219 + $0x5c] sm:$0xff]
      %v381 = vld [vmem:[%s219 + $0x64] sm:$0xff]
      %v382 = vld [vmem:[%s219 + $0x6c] sm:$0xff]
      %v383 = vld [vmem:[%s219 + $0x74] sm:$0xff]
      %v384 = vld [vmem:[%s219 + $0x7c] sm:$0xff]
      %v385 = vld [vmem:[%s219 + $0x84] sm:$0xff]
      %v386 = vld [vmem:[%s219 + $0x8c] sm:$0xff]
      %v387 = vld [vmem:[%s219 + $0x94] sm:$0xff]
      %v388 = vld [vmem:[%s219 + $0x9c] sm:$0xff]
      %v389 = vld [vmem:[%s219 + $0xa4] sm:$0xff]
      %v390 = vld [vmem:[%s219 + $0xac] sm:$0xff]
      %v391 = vld [vmem:[%s219 + $0xb4] sm:$0xff]
      %v392 = vld [vmem:[%s219 + $0xbc] sm:$0xff]
      %v393 = vld [vmem:[%s219 + $0xc4] sm:$0xff]
      %v394 = vld [vmem:[%s219 + $0xcc] sm:$0xff]
      %v395 = vld [vmem:[%s219 + $0xd4] sm:$0xff]
      %v396 = vld [vmem:[%s219 + $0xdc] sm:$0xff]
      %v397 = vld [vmem:[%s219 + $0xe4] sm:$0xff]
      %v398 = vld [vmem:[%s219 + $0xec] sm:$0xff]
      %v399 = vld [vmem:[%s219 + $0xf4] sm:$0xff]
      %v400 = vld [vmem:[%s219 + $0xfc] sm:$0xff]
      %v401 = vld [vmem:[%s219 + $0x104] sm:$0xff]
      %v402 = vld [vmem:[%s219 + $0x10c] sm:$0xff]
      %v403 = vld [vmem:[%s219 + $0x114] sm:$0xff]
      %v404 = vld [vmem:[%s219 + $0x11c] sm:$0xff]
      %v405 = vld [vmem:[%s219 + $0x124] sm:$0xff]
      %v406 = vld [vmem:[%s219 + $0x12c] sm:$0xff]
      %v407 = vld [vmem:[%s219 + $0x134] sm:$0xff]
      %v408 = vld [vmem:[%s219 + $0x13c] sm:$0xff]
      %v409 = vld [vmem:[%s219 + $0x25] sm:$0xff]
      %v410 = vld [vmem:[%s219 + $0x2d] sm:$0xff]
      %v411 = vld [vmem:[%s219 + $0x35] sm:$0xff]
      %v412 = vld [vmem:[%s219 + $0x3d] sm:$0xff]
      %v413 = vld [vmem:[%s219 + $0x45] sm:$0xff]
      %v414 = vld [vmem:[%s219 + $0x4d] sm:$0xff]
      %v415 = vld [vmem:[%s219 + $0x55] sm:$0xff]
      %v416 = vld [vmem:[%s219 + $0x5d] sm:$0xff]
      %v417 = vld [vmem:[%s219 + $0x65] sm:$0xff]
      %v418 = vld [vmem:[%s219 + $0x6d] sm:$0xff]
      %v419 = vld [vmem:[%s219 + $0x75] sm:$0xff]
      %v420 = vld [vmem:[%s219 + $0x7d] sm:$0xff]
      %v421 = vld [vmem:[%s219 + $0x85] sm:$0xff]
      %v422 = vld [vmem:[%s219 + $0x8d] sm:$0xff]
      %v423 = vld [vmem:[%s219 + $0x95] sm:$0xff]
      %v424 = vld [vmem:[%s219 + $0x9d] sm:$0xff]
      %v425 = vld [vmem:[%s219 + $0xa5] sm:$0xff]
      %v426 = vld [vmem:[%s219 + $0xad] sm:$0xff]
      %v427 = vld [vmem:[%s219 + $0xb5] sm:$0xff]
      %v428 = vld [vmem:[%s219 + $0xbd] sm:$0xff]
      %v429 = vld [vmem:[%s219 + $0xc5] sm:$0xff]
      %v430 = vld [vmem:[%s219 + $0xcd] sm:$0xff]
      %v431 = vld [vmem:[%s219 + $0xd5] sm:$0xff]
      %v432 = vld [vmem:[%s219 + $0xdd] sm:$0xff]
      %v433 = vld [vmem:[%s219 + $0xe5] sm:$0xff]
      %v434 = vld [vmem:[%s219 + $0xed] sm:$0xff]
      %v435 = vld [vmem:[%s219 + $0xf5] sm:$0xff]
      %v436 = vld [vmem:[%s219 + $0xfd] sm:$0xff]
      %v437 = vld [vmem:[%s219 + $0x105] sm:$0xff]
      %v438 = vld [vmem:[%s219 + $0x10d] sm:$0xff]
      %v439 = vld [vmem:[%s219 + $0x115] sm:$0xff]
      %v440 = vld [vmem:[%s219 + $0x11d] sm:$0xff]
      %v441 = vld [vmem:[%s219 + $0x125] sm:$0xff]
      %v442 = vld [vmem:[%s219 + $0x12d] sm:$0xff]
      %v443 = vld [vmem:[%s219 + $0x135] sm:$0xff]
      %v444 = vld [vmem:[%s219 + $0x13d] sm:$0xff]
      %v445 = vld [vmem:[%s219 + $0x26] sm:$0xff]
      %v446 = vld [vmem:[%s219 + $0x2e] sm:$0xff]
      %v447 = vld [vmem:[%s219 + $0x36] sm:$0xff]
      %v448 = vld [vmem:[%s219 + $0x3e] sm:$0xff]
      %v449 = vld [vmem:[%s219 + $0x46] sm:$0xff]
      %v450 = vld [vmem:[%s219 + $0x4e] sm:$0xff]
      %v451 = vld [vmem:[%s219 + $0x56] sm:$0xff]
      %v452 = vld [vmem:[%s219 + $0x5e] sm:$0xff]
      %v453 = vld [vmem:[%s219 + $0x66] sm:$0xff]
      %v454 = vld [vmem:[%s219 + $0x6e] sm:$0xff]
      %v455 = vld [vmem:[%s219 + $0x76] sm:$0xff]
      %v456 = vld [vmem:[%s219 + $0x7e] sm:$0xff]
      %v457 = vld [vmem:[%s219 + $0x86] sm:$0xff]
      %v458 = vld [vmem:[%s219 + $0x8e] sm:$0xff]
      %v459 = vld [vmem:[%s219 + $0x96] sm:$0xff]
      %v460 = vld [vmem:[%s219 + $0x9e] sm:$0xff]
      %v461 = vld [vmem:[%s219 + $0xa6] sm:$0xff]
      %v462 = vld [vmem:[%s219 + $0xae] sm:$0xff]
      %v463 = vld [vmem:[%s219 + $0xb6] sm:$0xff]
      %v464 = vld [vmem:[%s219 + $0xbe] sm:$0xff]
      %v465 = vld [vmem:[%s219 + $0xc6] sm:$0xff]
      %v466 = vld [vmem:[%s219 + $0xce] sm:$0xff]
      %v467 = vld [vmem:[%s219 + $0xd6] sm:$0xff]
      %v468 = vld [vmem:[%s219 + $0xde] sm:$0xff]
      %v469 = vld [vmem:[%s219 + $0xe6] sm:$0xff]
      %v470 = vld [vmem:[%s219 + $0xee] sm:$0xff]
      %v471 = vld [vmem:[%s219 + $0xf6] sm:$0xff]
      %v472 = vld [vmem:[%s219 + $0xfe] sm:$0xff]
      %v473 = vld [vmem:[%s219 + $0x106] sm:$0xff]
      %v474 = vld [vmem:[%s219 + $0x10e] sm:$0xff]
      %v475 = vld [vmem:[%s219 + $0x116] sm:$0xff]
      %v476 = vld [vmem:[%s219 + $0x11e] sm:$0xff]
      %v477 = vld [vmem:[%s219 + $0x126] sm:$0xff]
      %v478 = vld [vmem:[%s219 + $0x12e] sm:$0xff]
      %v479 = vld [vmem:[%s219 + $0x136] sm:$0xff]
      %v480 = vld [vmem:[%s219 + $0x13e] sm:$0xff]
      %517 = vrot.lane.b32.xlu0 %v261, 4
      %v518 = vpop.permute.xlu0 %517
      %519 = vrot.lane.b32.xlu0 %v262, 4
      %v520 = vpop.permute.xlu0 %519
      %521 = vrot.lane.b32.xlu0 %v263, 4
      %v522 = vpop.permute.xlu0 %521
      %523 = vrot.lane.b32.xlu0 %v264, 4
      %v524 = vpop.permute.xlu0 %523
      %525 = vrot.lane.b32.xlu0 %v265, 4
      %v526 = vpop.permute.xlu0 %525
      %527 = vrot.lane.b32.xlu0 %v266, 4
      %v528 = vpop.permute.xlu0 %527
      %529 = vrot.lane.b32.xlu0 %v267, 4
      %v530 = vpop.permute.xlu0 %529
      %531 = vrot.lane.b32.xlu0 %v268, 4
      %v532 = vpop.permute.xlu0 %531
      %533 = vrot.lane.b32.xlu0 %v269, 4
      %v534 = vpop.permute.xlu0 %533
      %535 = vrot.lane.b32.xlu0 %v270, 4
      %v536 = vpop.permute.xlu0 %535
      %537 = vrot.lane.b32.xlu0 %v271, 4
      %v538 = vpop.permute.xlu0 %537
      %539 = vrot.lane.b32.xlu0 %v272, 4
      %v540 = vpop.permute.xlu0 %539
      %541 = vrot.lane.b32.xlu0 %v273, 4
      %v542 = vpop.permute.xlu0 %541
      %543 = vrot.lane.b32.xlu0 %v274, 4
      %v544 = vpop.permute.xlu0 %543
      %545 = vrot.lane.b32.xlu0 %v275, 4
      %v546 = vpop.permute.xlu0 %545
      %547 = vrot.lane.b32.xlu0 %v276, 4
      %v548 = vpop.permute.xlu0 %547
      %549 = vrot.lane.b32.xlu0 %v277, 4
      %v550 = vpop.permute.xlu0 %549
      %551 = vrot.lane.b32.xlu0 %v278, 4
      %v552 = vpop.permute.xlu0 %551
      %553 = vrot.lane.b32.xlu0 %v279, 4
      %v554 = vpop.permute.xlu0 %553
      %555 = vrot.lane.b32.xlu0 %v280, 4
      %v556 = vpop.permute.xlu0 %555
      %557 = vrot.lane.b32.xlu0 %v281, 4
      %v558 = vpop.permute.xlu0 %557
      %559 = vrot.lane.b32.xlu0 %v282, 4
      %v560 = vpop.permute.xlu0 %559
      %561 = vrot.lane.b32.xlu0 %v283, 4
      %v562 = vpop.permute.xlu0 %561
      %563 = vrot.lane.b32.xlu0 %v284, 4
      %v564 = vpop.permute.xlu0 %563
      %565 = vrot.lane.b32.xlu0 %v285, 4
      %v566 = vpop.permute.xlu0 %565
      %567 = vrot.lane.b32.xlu0 %v286, 4
      %v568 = vpop.permute.xlu0 %567
      %569 = vrot.lane.b32.xlu0 %v287, 4
      %v570 = vpop.permute.xlu0 %569
      %571 = vrot.lane.b32.xlu0 %v288, 4
      %v572 = vpop.permute.xlu0 %571
      %573 = vrot.lane.b32.xlu0 %v289, 4
      %v574 = vpop.permute.xlu0 %573
      %575 = vrot.lane.b32.xlu0 %v290, 4
      %v576 = vpop.permute.xlu0 %575
      %577 = vrot.lane.b32.xlu0 %v291, 4
      %v578 = vpop.permute.xlu0 %577
      %579 = vrot.lane.b32.xlu0 %v292, 4
      %v580 = vpop.permute.xlu0 %579
      %581 = vrot.lane.b32.xlu0 %v293, 4
      %v582 = vpop.permute.xlu0 %581
      %583 = vrot.lane.b32.xlu0 %v294, 4
      %v584 = vpop.permute.xlu0 %583
      %585 = vrot.lane.b32.xlu0 %v295, 4
      %v586 = vpop.permute.xlu0 %585
      %587 = vrot.lane.b32.xlu0 %v296, 4
      %v588 = vpop.permute.xlu0 %587
      %661 = vrot.lane.b32.xlu0 %v297, 8
      %v662 = vpop.permute.xlu0 %661
      %663 = vrot.lane.b32.xlu0 %v298, 8
      %v664 = vpop.permute.xlu0 %663
      %665 = vrot.lane.b32.xlu0 %v299, 8
      %v666 = vpop.permute.xlu0 %665
      %667 = vrot.lane.b32.xlu0 %v300, 8
      %v668 = vpop.permute.xlu0 %667
      %669 = vrot.lane.b32.xlu0 %v301, 8
      %v670 = vpop.permute.xlu0 %669
      %671 = vrot.lane.b32.xlu0 %v302, 8
      %v672 = vpop.permute.xlu0 %671
      %673 = vrot.lane.b32.xlu0 %v303, 8
      %v674 = vpop.permute.xlu0 %673
      %675 = vrot.lane.b32.xlu0 %v304, 8
      %v676 = vpop.permute.xlu0 %675
      %677 = vrot.lane.b32.xlu0 %v305, 8
      %v678 = vpop.permute.xlu0 %677
      %679 = vrot.lane.b32.xlu0 %v306, 8
      %v680 = vpop.permute.xlu0 %679
      %681 = vrot.lane.b32.xlu0 %v307, 8
      %v682 = vpop.permute.xlu0 %681
      %683 = vrot.lane.b32.xlu0 %v308, 8
      %v684 = vpop.permute.xlu0 %683
      %685 = vrot.lane.b32.xlu0 %v309, 8
      %v686 = vpop.permute.xlu0 %685
      %687 = vrot.lane.b32.xlu0 %v310, 8
      %v688 = vpop.permute.xlu0 %687
      %689 = vrot.lane.b32.xlu0 %v311, 8
      %v690 = vpop.permute.xlu0 %689
      %691 = vrot.lane.b32.xlu0 %v312, 8
      %v692 = vpop.permute.xlu0 %691
      %693 = vrot.lane.b32.xlu0 %v313, 8
      %v694 = vpop.permute.xlu0 %693
      %695 = vrot.lane.b32.xlu0 %v314, 8
      %v696 = vpop.permute.xlu0 %695
      %697 = vrot.lane.b32.xlu0 %v315, 8
      %v698 = vpop.permute.xlu0 %697
      %699 = vrot.lane.b32.xlu0 %v316, 8
      %v700 = vpop.permute.xlu0 %699
      %701 = vrot.lane.b32.xlu0 %v317, 8
      %v702 = vpop.permute.xlu0 %701
      %703 = vrot.lane.b32.xlu0 %v318, 8
      %v704 = vpop.permute.xlu0 %703
      %705 = vrot.lane.b32.xlu0 %v319, 8
      %v706 = vpop.permute.xlu0 %705
      %707 = vrot.lane.b32.xlu0 %v320, 8
      %v708 = vpop.permute.xlu0 %707
      %709 = vrot.lane.b32.xlu0 %v321, 8
      %v710 = vpop.permute.xlu0 %709
      %711 = vrot.lane.b32.xlu0 %v322, 8
      %v712 = vpop.permute.xlu0 %711
      %713 = vrot.lane.b32.xlu0 %v323, 8
      %v714 = vpop.permute.xlu0 %713
      %715 = vrot.lane.b32.xlu0 %v324, 8
      %v716 = vpop.permute.xlu0 %715
      %717 = vrot.lane.b32.xlu0 %v325, 8
      %v718 = vpop.permute.xlu0 %717
      %719 = vrot.lane.b32.xlu0 %v326, 8
      %v720 = vpop.permute.xlu0 %719
      %721 = vrot.lane.b32.xlu0 %v327, 8
      %v722 = vpop.permute.xlu0 %721
      %723 = vrot.lane.b32.xlu0 %v328, 8
      %v724 = vpop.permute.xlu0 %723
      %725 = vrot.lane.b32.xlu0 %v329, 8
      %v726 = vpop.permute.xlu0 %725
      %727 = vrot.lane.b32.xlu0 %v330, 8
      %v728 = vpop.permute.xlu0 %727
      %729 = vrot.lane.b32.xlu0 %v331, 8
      %v730 = vpop.permute.xlu0 %729
      %731 = vrot.lane.b32.xlu0 %v332, 8
      %v732 = vpop.permute.xlu0 %731
      %771 = vrot.lane.b32.xlu0 %v299, 12
      %v772 = vpop.permute.xlu0 %771
      %773 = vrot.lane.b32.xlu0 %v300, 12
      %v774 = vpop.permute.xlu0 %773
      %775 = vrot.lane.b32.xlu0 %v301, 12
      %v776 = vpop.permute.xlu0 %775
      %777 = vrot.lane.b32.xlu0 %v302, 12
      %v778 = vpop.permute.xlu0 %777
      %779 = vrot.lane.b32.xlu0 %v303, 12
      %v780 = vpop.permute.xlu0 %779
      %781 = vrot.lane.b32.xlu0 %v304, 12
      %v782 = vpop.permute.xlu0 %781
      %783 = vrot.lane.b32.xlu0 %v305, 12
      %v784 = vpop.permute.xlu0 %783
      %785 = vrot.lane.b32.xlu0 %v306, 12
      %v786 = vpop.permute.xlu0 %785
      %787 = vrot.lane.b32.xlu0 %v307, 12
      %v788 = vpop.permute.xlu0 %787
      %789 = vrot.lane.b32.xlu0 %v308, 12
      %v790 = vpop.permute.xlu0 %789
      %791 = vrot.lane.b32.xlu0 %v309, 12
      %v792 = vpop.permute.xlu0 %791
      %793 = vrot.lane.b32.xlu0 %v310, 12
      %v794 = vpop.permute.xlu0 %793
      %795 = vrot.lane.b32.xlu0 %v311, 12
      %v796 = vpop.permute.xlu0 %795
      %797 = vrot.lane.b32.xlu0 %v312, 12
      %v798 = vpop.permute.xlu0 %797
      %799 = vrot.lane.b32.xlu0 %v313, 12
      %v800 = vpop.permute.xlu0 %799
      %801 = vrot.lane.b32.xlu0 %v314, 12
      %v802 = vpop.permute.xlu0 %801
      %803 = vrot.lane.b32.xlu0 %v315, 12
      %v804 = vpop.permute.xlu0 %803
      %805 = vrot.lane.b32.xlu0 %v316, 12
      %v806 = vpop.permute.xlu0 %805
      %807 = vrot.lane.b32.xlu0 %v317, 12
      %v808 = vpop.permute.xlu0 %807
      %809 = vrot.lane.b32.xlu0 %v318, 12
      %v810 = vpop.permute.xlu0 %809
      %811 = vrot.lane.b32.xlu0 %v319, 12
      %v812 = vpop.permute.xlu0 %811
      %813 = vrot.lane.b32.xlu0 %v320, 12
      %v814 = vpop.permute.xlu0 %813
      %815 = vrot.lane.b32.xlu0 %v321, 12
      %v816 = vpop.permute.xlu0 %815
      %817 = vrot.lane.b32.xlu0 %v322, 12
      %v818 = vpop.permute.xlu0 %817
      %819 = vrot.lane.b32.xlu0 %v323, 12
      %v820 = vpop.permute.xlu0 %819
      %821 = vrot.lane.b32.xlu0 %v324, 12
      %v822 = vpop.permute.xlu0 %821
      %823 = vrot.lane.b32.xlu0 %v325, 12
      %v824 = vpop.permute.xlu0 %823
      %825 = vrot.lane.b32.xlu0 %v326, 12
      %v826 = vpop.permute.xlu0 %825
      %827 = vrot.lane.b32.xlu0 %v327, 12
      %v828 = vpop.permute.xlu0 %827
      %829 = vrot.lane.b32.xlu0 %v328, 12
      %v830 = vpop.permute.xlu0 %829
      %831 = vrot.lane.b32.xlu0 %v329, 12
      %v832 = vpop.permute.xlu0 %831
      %833 = vrot.lane.b32.xlu0 %v330, 12
      %v834 = vpop.permute.xlu0 %833
      %835 = vrot.lane.b32.xlu0 %v331, 12
      %v836 = vpop.permute.xlu0 %835
      %837 = vrot.lane.b32.xlu0 %v332, 12
      %v838 = vpop.permute.xlu0 %837
      %839 = vrot.lane.b32.xlu0 %v333, 12
      %v840 = vpop.permute.xlu0 %839
      %841 = vrot.lane.b32.xlu0 %v334, 12
      %v842 = vpop.permute.xlu0 %841
      %915 = vrot.lane.b32.xlu0 %v335, 16
      %v916 = vpop.permute.xlu0 %915
      %917 = vrot.lane.b32.xlu0 %v336, 16
      %v918 = vpop.permute.xlu0 %917
      %919 = vrot.lane.b32.xlu0 %v337, 16
      %v920 = vpop.permute.xlu0 %919
      %921 = vrot.lane.b32.xlu0 %v338, 16
      %v922 = vpop.permute.xlu0 %921
      %923 = vrot.lane.b32.xlu0 %v339, 16
      %v924 = vpop.permute.xlu0 %923
      %925 = vrot.lane.b32.xlu0 %v340, 16
      %v926 = vpop.permute.xlu0 %925
      %927 = vrot.lane.b32.xlu0 %v341, 16
      %v928 = vpop.permute.xlu0 %927
      %929 = vrot.lane.b32.xlu0 %v342, 16
      %v930 = vpop.permute.xlu0 %929
      %931 = vrot.lane.b32.xlu0 %v343, 16
      %v932 = vpop.permute.xlu0 %931
      %933 = vrot.lane.b32.xlu0 %v344, 16
      %v934 = vpop.permute.xlu0 %933
      %935 = vrot.lane.b32.xlu0 %v345, 16
      %v936 = vpop.permute.xlu0 %935
      %937 = vrot.lane.b32.xlu0 %v346, 16
      %v938 = vpop.permute.xlu0 %937
      %939 = vrot.lane.b32.xlu0 %v347, 16
      %v940 = vpop.permute.xlu0 %939
      %941 = vrot.lane.b32.xlu0 %v348, 16
      %v942 = vpop.permute.xlu0 %941
      %943 = vrot.lane.b32.xlu0 %v349, 16
      %v944 = vpop.permute.xlu0 %943
      %945 = vrot.lane.b32.xlu0 %v350, 16
      %v946 = vpop.permute.xlu0 %945
      %947 = vrot.lane.b32.xlu0 %v351, 16
      %v948 = vpop.permute.xlu0 %947
      %949 = vrot.lane.b32.xlu0 %v352, 16
      %v950 = vpop.permute.xlu0 %949
      %951 = vrot.lane.b32.xlu0 %v353, 16
      %v952 = vpop.permute.xlu0 %951
      %953 = vrot.lane.b32.xlu0 %v354, 16
      %v954 = vpop.permute.xlu0 %953
      %955 = vrot.lane.b32.xlu0 %v355, 16
      %v956 = vpop.permute.xlu0 %955
      %957 = vrot.lane.b32.xlu0 %v356, 16
      %v958 = vpop.permute.xlu0 %957
      %959 = vrot.lane.b32.xlu0 %v357, 16
      %v960 = vpop.permute.xlu0 %959
      %961 = vrot.lane.b32.xlu0 %v358, 16
      %v962 = vpop.permute.xlu0 %961
      %963 = vrot.lane.b32.xlu0 %v359, 16
      %v964 = vpop.permute.xlu0 %963
      %965 = vrot.lane.b32.xlu0 %v360, 16
      %v966 = vpop.permute.xlu0 %965
      %967 = vrot.lane.b32.xlu0 %v361, 16
      %v968 = vpop.permute.xlu0 %967
      %969 = vrot.lane.b32.xlu0 %v362, 16
      %v970 = vpop.permute.xlu0 %969
      %971 = vrot.lane.b32.xlu0 %v363, 16
      %v972 = vpop.permute.xlu0 %971
      %973 = vrot.lane.b32.xlu0 %v364, 16
      %v974 = vpop.permute.xlu0 %973
      %975 = vrot.lane.b32.xlu0 %v365, 16
      %v976 = vpop.permute.xlu0 %975
      %977 = vrot.lane.b32.xlu0 %v366, 16
      %v978 = vpop.permute.xlu0 %977
      %979 = vrot.lane.b32.xlu0 %v367, 16
      %v980 = vpop.permute.xlu0 %979
      %981 = vrot.lane.b32.xlu0 %v368, 16
      %v982 = vpop.permute.xlu0 %981
      %983 = vrot.lane.b32.xlu0 %v369, 16
      %v984 = vpop.permute.xlu0 %983
      %985 = vrot.lane.b32.xlu0 %v370, 16
      %v986 = vpop.permute.xlu0 %985
      %1059 = vrot.lane.b32.xlu0 %v371, 20
      %v1060 = vpop.permute.xlu0 %1059
      %1061 = vrot.lane.b32.xlu0 %v372, 20
      %v1062 = vpop.permute.xlu0 %1061
      %1063 = vrot.lane.b32.xlu0 %v373, 20
      %v1064 = vpop.permute.xlu0 %1063
      %1065 = vrot.lane.b32.xlu0 %v374, 20
      %v1066 = vpop.permute.xlu0 %1065
      %1067 = vrot.lane.b32.xlu0 %v375, 20
      %v1068 = vpop.permute.xlu0 %1067
      %1069 = vrot.lane.b32.xlu0 %v376, 20
      %v1070 = vpop.permute.xlu0 %1069
      %1071 = vrot.lane.b32.xlu0 %v377, 20
      %v1072 = vpop.permute.xlu0 %1071
      %1073 = vrot.lane.b32.xlu0 %v378, 20
      %v1074 = vpop.permute.xlu0 %1073
      %1075 = vrot.lane.b32.xlu0 %v379, 20
      %v1076 = vpop.permute.xlu0 %1075
      %1077 = vrot.lane.b32.xlu0 %v380, 20
      %v1078 = vpop.permute.xlu0 %1077
      %1079 = vrot.lane.b32.xlu0 %v381, 20
      %v1080 = vpop.permute.xlu0 %1079
      %1081 = vrot.lane.b32.xlu0 %v382, 20
      %v1082 = vpop.permute.xlu0 %1081
      %1083 = vrot.lane.b32.xlu0 %v383, 20
      %v1084 = vpop.permute.xlu0 %1083
      %1085 = vrot.lane.b32.xlu0 %v384, 20
      %v1086 = vpop.permute.xlu0 %1085
      %1087 = vrot.lane.b32.xlu0 %v385, 20
      %v1088 = vpop.permute.xlu0 %1087
      %1089 = vrot.lane.b32.xlu0 %v386, 20
      %v1090 = vpop.permute.xlu0 %1089
      %1091 = vrot.lane.b32.xlu0 %v387, 20
      %v1092 = vpop.permute.xlu0 %1091
      %1093 = vrot.lane.b32.xlu0 %v388, 20
      %v1094 = vpop.permute.xlu0 %1093
      %1095 = vrot.lane.b32.xlu0 %v389, 20
      %v1096 = vpop.permute.xlu0 %1095
      %1097 = vrot.lane.b32.xlu0 %v390, 20
      %v1098 = vpop.permute.xlu0 %1097
      %1099 = vrot.lane.b32.xlu0 %v391, 20
      %v1100 = vpop.permute.xlu0 %1099
      %1101 = vrot.lane.b32.xlu0 %v392, 20
      %v1102 = vpop.permute.xlu0 %1101
      %1103 = vrot.lane.b32.xlu0 %v393, 20
      %v1104 = vpop.permute.xlu0 %1103
      %1105 = vrot.lane.b32.xlu0 %v394, 20
      %v1106 = vpop.permute.xlu0 %1105
      %1107 = vrot.lane.b32.xlu0 %v395, 20
      %v1108 = vpop.permute.xlu0 %1107
      %1109 = vrot.lane.b32.xlu0 %v396, 20
      %v1110 = vpop.permute.xlu0 %1109
      %1111 = vrot.lane.b32.xlu0 %v397, 20
      %v1112 = vpop.permute.xlu0 %1111
      %1113 = vrot.lane.b32.xlu0 %v398, 20
      %v1114 = vpop.permute.xlu0 %1113
      %1115 = vrot.lane.b32.xlu0 %v399, 20
      %v1116 = vpop.permute.xlu0 %1115
      %1117 = vrot.lane.b32.xlu0 %v400, 20
      %v1118 = vpop.permute.xlu0 %1117
      %1119 = vrot.lane.b32.xlu0 %v401, 20
      %v1120 = vpop.permute.xlu0 %1119
      %1121 = vrot.lane.b32.xlu0 %v402, 20
      %v1122 = vpop.permute.xlu0 %1121
      %1123 = vrot.lane.b32.xlu0 %v403, 20
      %v1124 = vpop.permute.xlu0 %1123
      %1125 = vrot.lane.b32.xlu0 %v404, 20
      %v1126 = vpop.permute.xlu0 %1125
      %1127 = vrot.lane.b32.xlu0 %v405, 20
      %v1128 = vpop.permute.xlu0 %1127
      %1129 = vrot.lane.b32.xlu0 %v406, 20
      %v1130 = vpop.permute.xlu0 %1129
      %1169 = vrot.lane.b32.xlu0 %v373, 24
      %v1170 = vpop.permute.xlu0 %1169
      %1171 = vrot.lane.b32.xlu0 %v374, 24
      %v1172 = vpop.permute.xlu0 %1171
      %1173 = vrot.lane.b32.xlu0 %v375, 24
      %v1174 = vpop.permute.xlu0 %1173
      %1175 = vrot.lane.b32.xlu0 %v376, 24
      %v1176 = vpop.permute.xlu0 %1175
      %1177 = vrot.lane.b32.xlu0 %v377, 24
      %v1178 = vpop.permute.xlu0 %1177
      %1179 = vrot.lane.b32.xlu0 %v378, 24
      %v1180 = vpop.permute.xlu0 %1179
      %1181 = vrot.lane.b32.xlu0 %v379, 24
      %v1182 = vpop.permute.xlu0 %1181
      %1183 = vrot.lane.b32.xlu0 %v380, 24
      %v1184 = vpop.permute.xlu0 %1183
      %1185 = vrot.lane.b32.xlu0 %v381, 24
      %v1186 = vpop.permute.xlu0 %1185
      %1187 = vrot.lane.b32.xlu0 %v382, 24
      %v1188 = vpop.permute.xlu0 %1187
      %1189 = vrot.lane.b32.xlu0 %v383, 24
      %v1190 = vpop.permute.xlu0 %1189
      %1191 = vrot.lane.b32.xlu0 %v384, 24
      %v1192 = vpop.permute.xlu0 %1191
      %1193 = vrot.lane.b32.xlu0 %v385, 24
      %v1194 = vpop.permute.xlu0 %1193
      %1195 = vrot.lane.b32.xlu0 %v386, 24
      %v1196 = vpop.permute.xlu0 %1195
      %1197 = vrot.lane.b32.xlu0 %v387, 24
      %v1198 = vpop.permute.xlu0 %1197
      %1199 = vrot.lane.b32.xlu0 %v388, 24
      %v1200 = vpop.permute.xlu0 %1199
      %1201 = vrot.lane.b32.xlu0 %v389, 24
      %v1202 = vpop.permute.xlu0 %1201
      %1203 = vrot.lane.b32.xlu0 %v390, 24
      %v1204 = vpop.permute.xlu0 %1203
      %1205 = vrot.lane.b32.xlu0 %v391, 24
      %v1206 = vpop.permute.xlu0 %1205
      %1207 = vrot.lane.b32.xlu0 %v392, 24
      %v1208 = vpop.permute.xlu0 %1207
      %1209 = vrot.lane.b32.xlu0 %v393, 24
      %v1210 = vpop.permute.xlu0 %1209
      %1211 = vrot.lane.b32.xlu0 %v394, 24
      %v1212 = vpop.permute.xlu0 %1211
      %1213 = vrot.lane.b32.xlu0 %v395, 24
      %v1214 = vpop.permute.xlu0 %1213
      %1215 = vrot.lane.b32.xlu0 %v396, 24
      %v1216 = vpop.permute.xlu0 %1215
      %1217 = vrot.lane.b32.xlu0 %v397, 24
      %v1218 = vpop.permute.xlu0 %1217
      %1219 = vrot.lane.b32.xlu0 %v398, 24
      %v1220 = vpop.permute.xlu0 %1219
      %1221 = vrot.lane.b32.xlu0 %v399, 24
      %v1222 = vpop.permute.xlu0 %1221
      %1223 = vrot.lane.b32.xlu0 %v400, 24
      %v1224 = vpop.permute.xlu0 %1223
      %1225 = vrot.lane.b32.xlu0 %v401, 24
      %v1226 = vpop.permute.xlu0 %1225
      %1227 = vrot.lane.b32.xlu0 %v402, 24
      %v1228 = vpop.permute.xlu0 %1227
      %1229 = vrot.lane.b32.xlu0 %v403, 24
      %v1230 = vpop.permute.xlu0 %1229
      %1231 = vrot.lane.b32.xlu0 %v404, 24
      %v1232 = vpop.permute.xlu0 %1231
      %1233 = vrot.lane.b32.xlu0 %v405, 24
      %v1234 = vpop.permute.xlu0 %1233
      %1235 = vrot.lane.b32.xlu0 %v406, 24
      %v1236 = vpop.permute.xlu0 %1235
      %1237 = vrot.lane.b32.xlu0 %v407, 24
      %v1238 = vpop.permute.xlu0 %1237
      %1239 = vrot.lane.b32.xlu0 %v408, 24
      %v1240 = vpop.permute.xlu0 %1239
      %1313 = vrot.lane.b32.xlu0 %v409, 28
      %v1314 = vpop.permute.xlu0 %1313
      %1315 = vrot.lane.b32.xlu0 %v410, 28
      %v1316 = vpop.permute.xlu0 %1315
      %1317 = vrot.lane.b32.xlu0 %v411, 28
      %v1318 = vpop.permute.xlu0 %1317
      %1319 = vrot.lane.b32.xlu0 %v412, 28
      %v1320 = vpop.permute.xlu0 %1319
      %1321 = vrot.lane.b32.xlu0 %v413, 28
      %v1322 = vpop.permute.xlu0 %1321
      %1323 = vrot.lane.b32.xlu0 %v414, 28
      %v1324 = vpop.permute.xlu0 %1323
      %1325 = vrot.lane.b32.xlu0 %v415, 28
      %v1326 = vpop.permute.xlu0 %1325
      %1327 = vrot.lane.b32.xlu0 %v416, 28
      %v1328 = vpop.permute.xlu0 %1327
      %1329 = vrot.lane.b32.xlu0 %v417, 28
      %v1330 = vpop.permute.xlu0 %1329
      %1331 = vrot.lane.b32.xlu0 %v418, 28
      %v1332 = vpop.permute.xlu0 %1331
      %1333 = vrot.lane.b32.xlu0 %v419, 28
      %v1334 = vpop.permute.xlu0 %1333
      %1335 = vrot.lane.b32.xlu0 %v420, 28
      %v1336 = vpop.permute.xlu0 %1335
      %1337 = vrot.lane.b32.xlu0 %v421, 28
      %v1338 = vpop.permute.xlu0 %1337
      %1339 = vrot.lane.b32.xlu0 %v422, 28
      %v1340 = vpop.permute.xlu0 %1339
      %1341 = vrot.lane.b32.xlu0 %v423, 28
      %v1342 = vpop.permute.xlu0 %1341
      %1343 = vrot.lane.b32.xlu0 %v424, 28
      %v1344 = vpop.permute.xlu0 %1343
      %1345 = vrot.lane.b32.xlu0 %v425, 28
      %v1346 = vpop.permute.xlu0 %1345
      %1347 = vrot.lane.b32.xlu0 %v426, 28
      %v1348 = vpop.permute.xlu0 %1347
      %1349 = vrot.lane.b32.xlu0 %v427, 28
      %v1350 = vpop.permute.xlu0 %1349
      %1351 = vrot.lane.b32.xlu0 %v428, 28
      %v1352 = vpop.permute.xlu0 %1351
      %1353 = vrot.lane.b32.xlu0 %v429, 28
      %v1354 = vpop.permute.xlu0 %1353
      %1355 = vrot.lane.b32.xlu0 %v430, 28
      %v1356 = vpop.permute.xlu0 %1355
      %1357 = vrot.lane.b32.xlu0 %v431, 28
      %v1358 = vpop.permute.xlu0 %1357
      %1359 = vrot.lane.b32.xlu0 %v432, 28
      %v1360 = vpop.permute.xlu0 %1359
      %1361 = vrot.lane.b32.xlu0 %v433, 28
      %v1362 = vpop.permute.xlu0 %1361
      %1363 = vrot.lane.b32.xlu0 %v434, 28
      %v1364 = vpop.permute.xlu0 %1363
      %1365 = vrot.lane.b32.xlu0 %v435, 28
      %v1366 = vpop.permute.xlu0 %1365
      %1367 = vrot.lane.b32.xlu0 %v436, 28
      %v1368 = vpop.permute.xlu0 %1367
      %1369 = vrot.lane.b32.xlu0 %v437, 28
      %v1370 = vpop.permute.xlu0 %1369
      %1371 = vrot.lane.b32.xlu0 %v438, 28
      %v1372 = vpop.permute.xlu0 %1371
      %1373 = vrot.lane.b32.xlu0 %v439, 28
      %v1374 = vpop.permute.xlu0 %1373
      %1375 = vrot.lane.b32.xlu0 %v440, 28
      %v1376 = vpop.permute.xlu0 %1375
      %1377 = vrot.lane.b32.xlu0 %v441, 28
      %v1378 = vpop.permute.xlu0 %1377
      %1379 = vrot.lane.b32.xlu0 %v442, 28
      %v1380 = vpop.permute.xlu0 %1379
      %1381 = vrot.lane.b32.xlu0 %v443, 28
      %v1382 = vpop.permute.xlu0 %1381
      %1383 = vrot.lane.b32.xlu0 %v444, 28
      %v1384 = vpop.permute.xlu0 %1383
      %1457 = vrot.lane.b32.xlu0 %v445, 32
      %v1458 = vpop.permute.xlu0 %1457
      %1459 = vrot.lane.b32.xlu0 %v446, 32
      %v1460 = vpop.permute.xlu0 %1459
      %1461 = vrot.lane.b32.xlu0 %v447, 32
      %v1462 = vpop.permute.xlu0 %1461
      %1463 = vrot.lane.b32.xlu0 %v448, 32
      %v1464 = vpop.permute.xlu0 %1463
      %1465 = vrot.lane.b32.xlu0 %v449, 32
      %v1466 = vpop.permute.xlu0 %1465
      %1467 = vrot.lane.b32.xlu0 %v450, 32
      %v1468 = vpop.permute.xlu0 %1467
      %1469 = vrot.lane.b32.xlu0 %v451, 32
      %v1470 = vpop.permute.xlu0 %1469
      %1471 = vrot.lane.b32.xlu0 %v452, 32
      %v1472 = vpop.permute.xlu0 %1471
      %1473 = vrot.lane.b32.xlu0 %v453, 32
      %v1474 = vpop.permute.xlu0 %1473
      %1475 = vrot.lane.b32.xlu0 %v454, 32
      %v1476 = vpop.permute.xlu0 %1475
      %1477 = vrot.lane.b32.xlu0 %v455, 32
      %v1478 = vpop.permute.xlu0 %1477
      %1479 = vrot.lane.b32.xlu0 %v456, 32
      %v1480 = vpop.permute.xlu0 %1479
      %1481 = vrot.lane.b32.xlu0 %v457, 32
      %v1482 = vpop.permute.xlu0 %1481
      %1483 = vrot.lane.b32.xlu0 %v458, 32
      %v1484 = vpop.permute.xlu0 %1483
      %1485 = vrot.lane.b32.xlu0 %v459, 32
      %v1486 = vpop.permute.xlu0 %1485
      %1487 = vrot.lane.b32.xlu0 %v460, 32
      %v1488 = vpop.permute.xlu0 %1487
      %1489 = vrot.lane.b32.xlu0 %v461, 32
      %v1490 = vpop.permute.xlu0 %1489
      %1491 = vrot.lane.b32.xlu0 %v462, 32
      %v1492 = vpop.permute.xlu0 %1491
      %1493 = vrot.lane.b32.xlu0 %v463, 32
      %v1494 = vpop.permute.xlu0 %1493
      %1495 = vrot.lane.b32.xlu0 %v464, 32
      %v1496 = vpop.permute.xlu0 %1495
      %1497 = vrot.lane.b32.xlu0 %v465, 32
      %v1498 = vpop.permute.xlu0 %1497
      %1499 = vrot.lane.b32.xlu0 %v466, 32
      %v1500 = vpop.permute.xlu0 %1499
      %1501 = vrot.lane.b32.xlu0 %v467, 32
      %v1502 = vpop.permute.xlu0 %1501
      %1503 = vrot.lane.b32.xlu0 %v468, 32
      %v1504 = vpop.permute.xlu0 %1503
      %1505 = vrot.lane.b32.xlu0 %v469, 32
      %v1506 = vpop.permute.xlu0 %1505
      %1507 = vrot.lane.b32.xlu0 %v470, 32
      %v1508 = vpop.permute.xlu0 %1507
      %1509 = vrot.lane.b32.xlu0 %v471, 32
      %v1510 = vpop.permute.xlu0 %1509
      %1511 = vrot.lane.b32.xlu0 %v472, 32
      %v1512 = vpop.permute.xlu0 %1511
      %1513 = vrot.lane.b32.xlu0 %v473, 32
      %v1514 = vpop.permute.xlu0 %1513
      %1515 = vrot.lane.b32.xlu0 %v474, 32
      %v1516 = vpop.permute.xlu0 %1515
      %1517 = vrot.lane.b32.xlu0 %v475, 32
      %v1518 = vpop.permute.xlu0 %1517
      %1519 = vrot.lane.b32.xlu0 %v476, 32
      %v1520 = vpop.permute.xlu0 %1519
      %1521 = vrot.lane.b32.xlu0 %v477, 32
      %v1522 = vpop.permute.xlu0 %1521
      %1523 = vrot.lane.b32.xlu0 %v478, 32
      %v1524 = vpop.permute.xlu0 %1523
      %1525 = vrot.lane.b32.xlu0 %v479, 32
      %v1526 = vpop.permute.xlu0 %1525
      %1527 = vrot.lane.b32.xlu0 %v480, 32
      %v1528 = vpop.permute.xlu0 %1527
      %vm1565 = vcmask 31744
      %v1566 = vsel %vm1565, %v225, %v518
      %v1567 = vsel %vm1565, %v226, %v520
      %v1568 = vsel %vm1565, %v227, %v522
      %v1569 = vsel %vm1565, %v228, %v524
      %v1570 = vsel %vm1565, %v229, %v526
      %v1571 = vsel %vm1565, %v230, %v528
      %v1572 = vsel %vm1565, %v231, %v530
      %v1573 = vsel %vm1565, %v232, %v532
      %v1574 = vsel %vm1565, %v233, %v534
      %v1575 = vsel %vm1565, %v234, %v536
      %v1576 = vsel %vm1565, %v235, %v538
      %v1577 = vsel %vm1565, %v236, %v540
      %v1578 = vsel %vm1565, %v237, %v542
      %v1579 = vsel %vm1565, %v238, %v544
      %v1580 = vsel %vm1565, %v239, %v546
      %v1581 = vsel %vm1565, %v240, %v548
      %v1582 = vsel %vm1565, %v241, %v550
      %v1583 = vsel %vm1565, %v242, %v552
      %v1584 = vsel %vm1565, %v243, %v554
      %v1585 = vsel %vm1565, %v244, %v556
      %v1586 = vsel %vm1565, %v245, %v558
      %v1587 = vsel %vm1565, %v246, %v560
      %v1588 = vsel %vm1565, %v247, %v562
      %v1589 = vsel %vm1565, %v248, %v564
      %v1590 = vsel %vm1565, %v249, %v566
      %v1591 = vsel %vm1565, %v250, %v568
      %v1592 = vsel %vm1565, %v251, %v570
      %v1593 = vsel %vm1565, %v252, %v572
      %v1594 = vsel %vm1565, %v253, %v574
      %v1595 = vsel %vm1565, %v254, %v576
      %v1596 = vsel %vm1565, %v255, %v578
      %v1597 = vsel %vm1565, %v256, %v580
      %v1598 = vsel %vm1565, %v257, %v582
      %v1599 = vsel %vm1565, %v258, %v584
      %v1600 = vsel %vm1565, %v259, %v586
      %v1601 = vsel %vm1565, %v260, %v588
      %vm1602 = vcmask 64512
      %v1603 = vsel %vm1602, %v1566, %v662
      %v1604 = vsel %vm1602, %v1567, %v664
      %v1605 = vsel %vm1602, %v1568, %v666
      %v1606 = vsel %vm1602, %v1569, %v668
      %v1607 = vsel %vm1602, %v1570, %v670
      %v1608 = vsel %vm1602, %v1571, %v672
      %v1609 = vsel %vm1602, %v1572, %v674
      %v1610 = vsel %vm1602, %v1573, %v676
      %v1611 = vsel %vm1602, %v1574, %v678
      %v1612 = vsel %vm1602, %v1575, %v680
      %v1613 = vsel %vm1602, %v1576, %v682
      %v1614 = vsel %vm1602, %v1577, %v684
      %v1615 = vsel %vm1602, %v1578, %v686
      %v1616 = vsel %vm1602, %v1579, %v688
      %v1617 = vsel %vm1602, %v1580, %v690
      %v1618 = vsel %vm1602, %v1581, %v692
      %v1619 = vsel %vm1602, %v1582, %v694
      %v1620 = vsel %vm1602, %v1583, %v696
      %v1621 = vsel %vm1602, %v1584, %v698
      %v1622 = vsel %vm1602, %v1585, %v700
      %v1623 = vsel %vm1602, %v1586, %v702
      %v1624 = vsel %vm1602, %v1587, %v704
      %v1625 = vsel %vm1602, %v1588, %v706
      %v1626 = vsel %vm1602, %v1589, %v708
      %v1627 = vsel %vm1602, %v1590, %v710
      %v1628 = vsel %vm1602, %v1591, %v712
      %v1629 = vsel %vm1602, %v1592, %v714
      %v1630 = vsel %vm1602, %v1593, %v716
      %v1631 = vsel %vm1602, %v1594, %v718
      %v1632 = vsel %vm1602, %v1595, %v720
      %v1633 = vsel %vm1602, %v1596, %v722
      %v1634 = vsel %vm1602, %v1597, %v724
      %v1635 = vsel %vm1602, %v1598, %v726
      %v1636 = vsel %vm1602, %v1599, %v728
      %v1637 = vsel %vm1602, %v1600, %v730
      %v1638 = vsel %vm1602, %v1601, %v732
      %vm1639 = vcmask 97280
      %v1640 = vsel %vm1639, %v1603, %v772
      %v1641 = vsel %vm1639, %v1604, %v774
      %v1642 = vsel %vm1639, %v1605, %v776
      %v1643 = vsel %vm1639, %v1606, %v778
      %v1644 = vsel %vm1639, %v1607, %v780
      %v1645 = vsel %vm1639, %v1608, %v782
      %v1646 = vsel %vm1639, %v1609, %v784
      %v1647 = vsel %vm1639, %v1610, %v786
      %v1648 = vsel %vm1639, %v1611, %v788
      %v1649 = vsel %vm1639, %v1612, %v790
      %v1650 = vsel %vm1639, %v1613, %v792
      %v1651 = vsel %vm1639, %v1614, %v794
      %v1652 = vsel %vm1639, %v1615, %v796
      %v1653 = vsel %vm1639, %v1616, %v798
      %v1654 = vsel %vm1639, %v1617, %v800
      %v1655 = vsel %vm1639, %v1618, %v802
      %v1656 = vsel %vm1639, %v1619, %v804
      %v1657 = vsel %vm1639, %v1620, %v806
      %v1658 = vsel %vm1639, %v1621, %v808
      %v1659 = vsel %vm1639, %v1622, %v810
      %v1660 = vsel %vm1639, %v1623, %v812
      %v1661 = vsel %vm1639, %v1624, %v814
      %v1662 = vsel %vm1639, %v1625, %v816
      %v1663 = vsel %vm1639, %v1626, %v818
      %v1664 = vsel %vm1639, %v1627, %v820
      %v1665 = vsel %vm1639, %v1628, %v822
      %v1666 = vsel %vm1639, %v1629, %v824
      %v1667 = vsel %vm1639, %v1630, %v826
      %v1668 = vsel %vm1639, %v1631, %v828
      %v1669 = vsel %vm1639, %v1632, %v830
      %v1670 = vsel %vm1639, %v1633, %v832
      %v1671 = vsel %vm1639, %v1634, %v834
      %v1672 = vsel %vm1639, %v1635, %v836
      %v1673 = vsel %vm1639, %v1636, %v838
      %v1674 = vsel %vm1639, %v1637, %v840
      %v1675 = vsel %vm1639, %v1638, %v842
      %vm1676 = vcmask 130048
      %v1677 = vsel %vm1676, %v1640, %v916
      %v1678 = vsel %vm1676, %v1641, %v918
      %v1679 = vsel %vm1676, %v1642, %v920
      %v1680 = vsel %vm1676, %v1643, %v922
      %v1681 = vsel %vm1676, %v1644, %v924
      %v1682 = vsel %vm1676, %v1645, %v926
      %v1683 = vsel %vm1676, %v1646, %v928
      %v1684 = vsel %vm1676, %v1647, %v930
      %v1685 = vsel %vm1676, %v1648, %v932
      %v1686 = vsel %vm1676, %v1649, %v934
      %v1687 = vsel %vm1676, %v1650, %v936
      %v1688 = vsel %vm1676, %v1651, %v938
      %v1689 = vsel %vm1676, %v1652, %v940
      %v1690 = vsel %vm1676, %v1653, %v942
      %v1691 = vsel %vm1676, %v1654, %v944
      %v1692 = vsel %vm1676, %v1655, %v946
      %v1693 = vsel %vm1676, %v1656, %v948
      %v1694 = vsel %vm1676, %v1657, %v950
      %v1695 = vsel %vm1676, %v1658, %v952
      %v1696 = vsel %vm1676, %v1659, %v954
      %v1697 = vsel %vm1676, %v1660, %v956
      %v1698 = vsel %vm1676, %v1661, %v958
      %v1699 = vsel %vm1676, %v1662, %v960
      %v1700 = vsel %vm1676, %v1663, %v962
      %v1701 = vsel %vm1676, %v1664, %v964
      %v1702 = vsel %vm1676, %v1665, %v966
      %v1703 = vsel %vm1676, %v1666, %v968
      %v1704 = vsel %vm1676, %v1667, %v970
      %v1705 = vsel %vm1676, %v1668, %v972
      %v1706 = vsel %vm1676, %v1669, %v974
      %v1707 = vsel %vm1676, %v1670, %v976
      %v1708 = vsel %vm1676, %v1671, %v978
      %v1709 = vsel %vm1676, %v1672, %v980
      %v1710 = vsel %vm1676, %v1673, %v982
      %v1711 = vsel %vm1676, %v1674, %v984
      %v1712 = vsel %vm1676, %v1675, %v986
      %vm1713 = vcmask 162816
      %v1714 = vsel %vm1713, %v1677, %v1060
      %v1715 = vsel %vm1713, %v1678, %v1062
      %v1716 = vsel %vm1713, %v1679, %v1064
      %v1717 = vsel %vm1713, %v1680, %v1066
      %v1718 = vsel %vm1713, %v1681, %v1068
      %v1719 = vsel %vm1713, %v1682, %v1070
      %v1720 = vsel %vm1713, %v1683, %v1072
      %v1721 = vsel %vm1713, %v1684, %v1074
      %v1722 = vsel %vm1713, %v1685, %v1076
      %v1723 = vsel %vm1713, %v1686, %v1078
      %v1724 = vsel %vm1713, %v1687, %v1080
      %v1725 = vsel %vm1713, %v1688, %v1082
      %v1726 = vsel %vm1713, %v1689, %v1084
      %v1727 = vsel %vm1713, %v1690, %v1086
      %v1728 = vsel %vm1713, %v1691, %v1088
      %v1729 = vsel %vm1713, %v1692, %v1090
      %v1730 = vsel %vm1713, %v1693, %v1092
      %v1731 = vsel %vm1713, %v1694, %v1094
      %v1732 = vsel %vm1713, %v1695, %v1096
      %v1733 = vsel %vm1713, %v1696, %v1098
      %v1734 = vsel %vm1713, %v1697, %v1100
      %v1735 = vsel %vm1713, %v1698, %v1102
      %v1736 = vsel %vm1713, %v1699, %v1104
      %v1737 = vsel %vm1713, %v1700, %v1106
      %v1738 = vsel %vm1713, %v1701, %v1108
      %v1739 = vsel %vm1713, %v1702, %v1110
      %v1740 = vsel %vm1713, %v1703, %v1112
      %v1741 = vsel %vm1713, %v1704, %v1114
      %v1742 = vsel %vm1713, %v1705, %v1116
      %v1743 = vsel %vm1713, %v1706, %v1118
      %v1744 = vsel %vm1713, %v1707, %v1120
      %v1745 = vsel %vm1713, %v1708, %v1122
      %v1746 = vsel %vm1713, %v1709, %v1124
      %v1747 = vsel %vm1713, %v1710, %v1126
      %v1748 = vsel %vm1713, %v1711, %v1128
      %v1749 = vsel %vm1713, %v1712, %v1130
      %vm1750 = vcmask 195584
      %v1751 = vsel %vm1750, %v1714, %v1170
      %v1752 = vsel %vm1750, %v1715, %v1172
      %v1753 = vsel %vm1750, %v1716, %v1174
      %v1754 = vsel %vm1750, %v1717, %v1176
      %v1755 = vsel %vm1750, %v1718, %v1178
      %v1756 = vsel %vm1750, %v1719, %v1180
      %v1757 = vsel %vm1750, %v1720, %v1182
      %v1758 = vsel %vm1750, %v1721, %v1184
      %v1759 = vsel %vm1750, %v1722, %v1186
      %v1760 = vsel %vm1750, %v1723, %v1188
      %v1761 = vsel %vm1750, %v1724, %v1190
      %v1762 = vsel %vm1750, %v1725, %v1192
      %v1763 = vsel %vm1750, %v1726, %v1194
      %v1764 = vsel %vm1750, %v1727, %v1196
      %v1765 = vsel %vm1750, %v1728, %v1198
      %v1766 = vsel %vm1750, %v1729, %v1200
      %v1767 = vsel %vm1750, %v1730, %v1202
      %v1768 = vsel %vm1750, %v1731, %v1204
      %v1769 = vsel %vm1750, %v1732, %v1206
      %v1770 = vsel %vm1750, %v1733, %v1208
      %v1771 = vsel %vm1750, %v1734, %v1210
      %v1772 = vsel %vm1750, %v1735, %v1212
      %v1773 = vsel %vm1750, %v1736, %v1214
      %v1774 = vsel %vm1750, %v1737, %v1216
      %v1775 = vsel %vm1750, %v1738, %v1218
      %v1776 = vsel %vm1750, %v1739, %v1220
      %v1777 = vsel %vm1750, %v1740, %v1222
      %v1778 = vsel %vm1750, %v1741, %v1224
      %v1779 = vsel %vm1750, %v1742, %v1226
      %v1780 = vsel %vm1750, %v1743, %v1228
      %v1781 = vsel %vm1750, %v1744, %v1230
      %v1782 = vsel %vm1750, %v1745, %v1232
      %v1783 = vsel %vm1750, %v1746, %v1234
      %v1784 = vsel %vm1750, %v1747, %v1236
      %v1785 = vsel %vm1750, %v1748, %v1238
      %v1786 = vsel %vm1750, %v1749, %v1240
      %vm1787 = vcmask 228352
      %v1788 = vsel %vm1787, %v1751, %v1314
      %v1789 = vsel %vm1787, %v1752, %v1316
      %v1790 = vsel %vm1787, %v1753, %v1318
      %v1791 = vsel %vm1787, %v1754, %v1320
      %v1792 = vsel %vm1787, %v1755, %v1322
      %v1793 = vsel %vm1787, %v1756, %v1324
      %v1794 = vsel %vm1787, %v1757, %v1326
      %v1795 = vsel %vm1787, %v1758, %v1328
      %v1796 = vsel %vm1787, %v1759, %v1330
      %v1797 = vsel %vm1787, %v1760, %v1332
      %v1798 = vsel %vm1787, %v1761, %v1334
      %v1799 = vsel %vm1787, %v1762, %v1336
      %v1800 = vsel %vm1787, %v1763, %v1338
      %v1801 = vsel %vm1787, %v1764, %v1340
      %v1802 = vsel %vm1787, %v1765, %v1342
      %v1803 = vsel %vm1787, %v1766, %v1344
      %v1804 = vsel %vm1787, %v1767, %v1346
      %v1805 = vsel %vm1787, %v1768, %v1348
      %v1806 = vsel %vm1787, %v1769, %v1350
      %v1807 = vsel %vm1787, %v1770, %v1352
      %v1808 = vsel %vm1787, %v1771, %v1354
      %v1809 = vsel %vm1787, %v1772, %v1356
      %v1810 = vsel %vm1787, %v1773, %v1358
      %v1811 = vsel %vm1787, %v1774, %v1360
      %v1812 = vsel %vm1787, %v1775, %v1362
      %v1813 = vsel %vm1787, %v1776, %v1364
      %v1814 = vsel %vm1787, %v1777, %v1366
      %v1815 = vsel %vm1787, %v1778, %v1368
      %v1816 = vsel %vm1787, %v1779, %v1370
      %v1817 = vsel %vm1787, %v1780, %v1372
      %v1818 = vsel %vm1787, %v1781, %v1374
      %v1819 = vsel %vm1787, %v1782, %v1376
      %v1820 = vsel %vm1787, %v1783, %v1378
      %v1821 = vsel %vm1787, %v1784, %v1380
      %v1822 = vsel %vm1787, %v1785, %v1382
      %v1823 = vsel %vm1787, %v1786, %v1384
      %vm1824 = vcmask 261120
      %v1825 = vsel %vm1824, %v1788, %v1458
      %v1826 = vsel %vm1824, %v1789, %v1460
      %v1827 = vsel %vm1824, %v1790, %v1462
      %v1828 = vsel %vm1824, %v1791, %v1464
      %v1829 = vsel %vm1824, %v1792, %v1466
      %v1830 = vsel %vm1824, %v1793, %v1468
      %v1831 = vsel %vm1824, %v1794, %v1470
      %v1832 = vsel %vm1824, %v1795, %v1472
      %v1833 = vsel %vm1824, %v1796, %v1474
      %v1834 = vsel %vm1824, %v1797, %v1476
      %v1835 = vsel %vm1824, %v1798, %v1478
      %v1836 = vsel %vm1824, %v1799, %v1480
      %v1837 = vsel %vm1824, %v1800, %v1482
      %v1838 = vsel %vm1824, %v1801, %v1484
      %v1839 = vsel %vm1824, %v1802, %v1486
      %v1840 = vsel %vm1824, %v1803, %v1488
      %v1841 = vsel %vm1824, %v1804, %v1490
      %v1842 = vsel %vm1824, %v1805, %v1492
      %v1843 = vsel %vm1824, %v1806, %v1494
      %v1844 = vsel %vm1824, %v1807, %v1496
      %v1845 = vsel %vm1824, %v1808, %v1498
      %v1846 = vsel %vm1824, %v1809, %v1500
      %v1847 = vsel %vm1824, %v1810, %v1502
      %v1848 = vsel %vm1824, %v1811, %v1504
      %v1849 = vsel %vm1824, %v1812, %v1506
      %v1850 = vsel %vm1824, %v1813, %v1508
      %v1851 = vsel %vm1824, %v1814, %v1510
      %v1852 = vsel %vm1824, %v1815, %v1512
      %v1853 = vsel %vm1824, %v1816, %v1514
      %v1854 = vsel %vm1824, %v1817, %v1516
      %v1855 = vsel %vm1824, %v1818, %v1518
      %v1856 = vsel %vm1824, %v1819, %v1520
      %v1857 = vsel %vm1824, %v1820, %v1522
      %v1858 = vsel %vm1824, %v1821, %v1524
      %v1859 = vsel %vm1824, %v1822, %v1526
      %v1860 = vsel %vm1824, %v1823, %v1528
      %v1861 = vld [vmem:[%s1] sm:$0xff]
      %v1862 = vld [vmem:[%s1 + $0x8] sm:$0xff]
      %v1863 = vld [vmem:[%s1 + $0x10] sm:$0xff]
      %v1864 = vld [vmem:[%s1 + $0x18] sm:$0xff]
      %v1865 = vld [vmem:[%s1 + $0x20] sm:$0xf]
      %v1866 = vld [vmem:[%s2] sm:$0x1]
      %v1868 = vlaneseq
      %v1869 = vshrl.u32 %v1868, 7
      %v1870 = vsub.s32 0, %v1869
      %v1871 = vrot.slane %v1866, %v1870
      %vm1873 = vcmask 293888
      %v1875 = vsel %vm1873, %v1825, 0
      %v1878 = vsel %vm1873, %v1826, 0
      %v1881 = vsel %vm1873, %v1827, 0
      %v1884 = vsel %vm1873, %v1828, 0
      %v1887 = vsel %vm1873, %v1829, 0
      %v1890 = vsel %vm1873, %v1830, 0
      %v1893 = vsel %vm1873, %v1831, 0
      %v1896 = vsel %vm1873, %v1832, 0
      %v1899 = vsel %vm1873, %v1833, 0
      %v1902 = vsel %vm1873, %v1834, 0
      %v1905 = vsel %vm1873, %v1835, 0
      %v1908 = vsel %vm1873, %v1836, 0
      %v1911 = vsel %vm1873, %v1837, 0
      %v1914 = vsel %vm1873, %v1838, 0
      %v1917 = vsel %vm1873, %v1839, 0
      %v1920 = vsel %vm1873, %v1840, 0
      %v1923 = vsel %vm1873, %v1841, 0
      %v1926 = vsel %vm1873, %v1842, 0
      %v1929 = vsel %vm1873, %v1843, 0
      %v1932 = vsel %vm1873, %v1844, 0
      %v1935 = vsel %vm1873, %v1845, 0
      %v1938 = vsel %vm1873, %v1846, 0
      %v1941 = vsel %vm1873, %v1847, 0
      %v1944 = vsel %vm1873, %v1848, 0
      %v1947 = vsel %vm1873, %v1849, 0
      %v1950 = vsel %vm1873, %v1850, 0
      %v1953 = vsel %vm1873, %v1851, 0
      %v1956 = vsel %vm1873, %v1852, 0
      %v1959 = vsel %vm1873, %v1853, 0
      %v1962 = vsel %vm1873, %v1854, 0
      %v1965 = vsel %vm1873, %v1855, 0
      %v1968 = vsel %vm1873, %v1856, 0
      %v1971 = vsel %vm1873, %v1857, 0
      %v1974 = vsel %vm1873, %v1858, 0
      %v1977 = vsel %vm1873, %v1859, 0
      %v1980 = vsel %vm1873, %v1860, 0
      %vm1982 = vcmask 1043456
      %v1984 = vsel %vm1982, %v1865, 0
      %1986 = vmatprep.subr.mxu0 0.0
      %1987 = vmatpush1.msra.mxu0 %v1861
      %1988 = vmatprep.subr.mxu0 0.0
      %1989 = vmatpush1.msra.mxu0 %v1862
      %1990 = vmatprep.subr.mxu0 0.0
      %1991 = vmatpush1.msra.mxu0 %v1863
      %1992 = vmatprep.subr.mxu0 0.0
      %1993 = vmatpush1.msra.mxu0 %v1864
      %1994 = vmatprep.subr.mxu0 0.0
      %1995 = vmatpush1.msra.mxu0 %v1984
      %1996 = vmatprep.subr.mxu0 0.0
      %1997 = vmatpush1.msra.mxu0 0.0
      %1998 = vmatprep.subr.mxu0 0.0
      %1999 = vmatpush1.msra.mxu0 0.0
      %2000 = vmatprep.subr.mxu0 0.0
      %2001 = vmatpush1.msra.mxu0 0.0
      %2002 = vmatprep.subr.mxu0 0.0
      %2003 = vmatpush1.msra.mxu0 0.0
      %2004 = vmatprep.subr.mxu0 0.0
      %2005 = vmatpush1.msra.mxu0 0.0
      %2006 = vmatprep.subr.mxu0 0.0
      %2007 = vmatpush1.msra.mxu0 0.0
      %2008 = vmatprep.subr.mxu0 0.0
      %2009 = vmatpush1.msra.mxu0 0.0
      %2010 = vmatprep.subr.mxu0 0.0
      %2011 = vmatpush1.msra.mxu0 0.0
      %2012 = vmatprep.subr.mxu0 0.0
      %2013 = vmatpush1.msra.mxu0 0.0
      %2014 = vmatprep.subr.mxu0 0.0
      %2015 = vmatpush1.msra.mxu0 0.0
      %2016 = vmatprep.subr.mxu0 0.0
      %2017 = vmatpush1.msra.mxu0 0.0
      %2018 = vmatprep.subr.mxu0 0.0
      %2019 = vmatpush1.msra.mxu0 0.0
      %2020 = vmatprep.subr.mxu0 0.0
      %2021 = vmatpush1.msra.mxu0 0.0
      %2022 = vmatprep.subr.mxu0 0.0
      %2023 = vmatpush1.msra.mxu0 0.0
      %2024 = vmatprep.subr.mxu0 0.0
      %2025 = vmatpush1.msra.mxu0 0.0
      %2026 = vmatprep.subr.mxu0 0.0
      %2027 = vmatpush1.msra.mxu0 0.0
      %2028 = vmatprep.subr.mxu0 0.0
      %2029 = vmatpush1.msra.mxu0 0.0
      %2030 = vmatprep.subr.mxu0 0.0
      %2031 = vmatpush1.msra.mxu0 0.0
      %2032 = vmatprep.subr.mxu0 0.0
      %2033 = vmatpush1.msra.mxu0 0.0
      %2034 = vmatprep.subr.mxu0 0.0
      %2035 = vmatpush1.msra.mxu0 0.0
      %2036 = vmatprep.subr.mxu0 0.0
      %2037 = vmatpush1.msra.mxu0 0.0
      %2038 = vmatprep.subr.mxu0 0.0
      %2039 = vmatpush1.msra.mxu0 0.0
      %2040 = vmatprep.subr.mxu0 0.0
      %2041 = vmatpush1.msra.mxu0 0.0
      %2042 = vmatprep.subr.mxu0 0.0
      %2043 = vmatpush1.msra.mxu0 0.0
      %2044 = vmatprep.subr.mxu0 0.0
      %2045 = vmatpush1.msra.mxu0 0.0
      %2046 = vmatprep.subr.mxu0 0.0
      %2047 = vmatpush1.msra.mxu0 0.0
      %2048 = vmatprep.subr.mxu0 0.0
      %2049 = vmatpush1.msra.mxu0 0.0
      %2050 = vmatprep.mubr.f32.mxu0 0.0
      %2051 = vmatmul.mubr.f32.gmra.mrb[0].mxu0 %v1875
      %v2052 = vpop.f32.mrb[0].mxu0
      %v2053 = vadd.f32 %v1871, %v2052
      %v2054 = vpop.f32.mrb[0].mxu0
      %2055 = vmatprep.mubr.f32.mxu0 0.0
      %2056 = vmatmul.mubr.f32.gmra.mrb[0].mxu0 %v1878
      %v2057 = vpop.f32.mrb[0].mxu0
      %v2058 = vadd.f32 %v1871, %v2057
      %v2059 = vpop.f32.mrb[0].mxu0
      %2060 = vmatprep.mubr.f32.mxu0 0.0
      %2061 = vmatmul.mubr.f32.gmra.mrb[0].mxu0 %v1881
      %v2062 = vpop.f32.mrb[0].mxu0
      %v2063 = vadd.f32 %v1871, %v2062
      %v2064 = vpop.f32.mrb[0].mxu0
      %2065 = vmatprep.mubr.f32.mxu0 0.0
      %2066 = vmatmul.mubr.f32.gmra.mrb[0].mxu0 %v1884
      %v2067 = vpop.f32.mrb[0].mxu0
      %v2068 = vadd.f32 %v1871, %v2067
      %v2069 = vpop.f32.mrb[0].mxu0
      %2070 = vmatprep.mubr.f32.mxu0 0.0
      %2071 = vmatmul.mubr.f32.gmra.mrb[0].mxu0 %v1887
      %v2072 = vpop.f32.mrb[0].mxu0
      %v2073 = vadd.f32 %v1871, %v2072
      %v2074 = vpop.f32.mrb[0].mxu0
      %2075 = vmatprep.mubr.f32.mxu0 0.0
      %2076 = vmatmul.mubr.f32.gmra.mrb[0].mxu0 %v1890
      %v2077 = vpop.f32.mrb[0].mxu0
      %v2078 = vadd.f32 %v1871, %v2077
      %v2079 = vpop.f32.mrb[0].mxu0
      %2080 = vmatprep.mubr.f32.mxu0 0.0
      %2081 = vmatmul.mubr.f32.gmra.mrb[0].mxu0 %v1893
      %v2082 = vpop.f32.mrb[0].mxu0
      %v2083 = vadd.f32 %v1871, %v2082
      %v2084 = vpop.f32.mrb[0].mxu0
      %2085 = vmatprep.mubr.f32.mxu0 0.0
      %2086 = vmatmul.mubr.f32.gmra.mrb[0].mxu0 %v1896
      %v2087 = vpop.f32.mrb[0].mxu0
      %v2088 = vadd.f32 %v1871, %v2087
      %v2089 = vpop.f32.mrb[0].mxu0
      %2090 = vmatprep.mubr.f32.mxu0 0.0
      %2091 = vmatmul.mubr.f32.gmra.mrb[0].mxu0 %v1899
      %v2092 = vpop.f32.mrb[0].mxu0
      %v2093 = vadd.f32 %v1871, %v2092
      %v2094 = vpop.f32.mrb[0].mxu0
      %2095 = vmatprep.mubr.f32.mxu0 0.0
      %2096 = vmatmul.mubr.f32.gmra.mrb[0].mxu0 %v1902
      %v2097 = vpop.f32.mrb[0].mxu0
      %v2098 = vadd.f32 %v1871, %v2097
      %v2099 = vpop.f32.mrb[0].mxu0
      %2100 = vmatprep.mubr.f32.mxu0 0.0
      %2101 = vmatmul.mubr.f32.gmra.mrb[0].mxu0 %v1905
      %v2102 = vpop.f32.mrb[0].mxu0
      %v2103 = vadd.f32 %v1871, %v2102
      %v2104 = vpop.f32.mrb[0].mxu0
      %2105 = vmatprep.mubr.f32.mxu0 0.0
      %2106 = vmatmul.mubr.f32.gmra.mrb[0].mxu0 %v1908
      %v2107 = vpop.f32.mrb[0].mxu0
      %v2108 = vadd.f32 %v1871, %v2107
      %v2109 = vpop.f32.mrb[0].mxu0
      %2110 = vmatprep.mubr.f32.mxu0 0.0
      %2111 = vmatmul.mubr.f32.gmra.mrb[0].mxu0 %v1911
      %v2112 = vpop.f32.mrb[0].mxu0
      %v2113 = vadd.f32 %v1871, %v2112
      %v2114 = vpop.f32.mrb[0].mxu0
      %2115 = vmatprep.mubr.f32.mxu0 0.0
      %2116 = vmatmul.mubr.f32.gmra.mrb[0].mxu0 %v1914
      %v2117 = vpop.f32.mrb[0].mxu0
      %v2118 = vadd.f32 %v1871, %v2117
      %v2119 = vpop.f32.mrb[0].mxu0
      %2120 = vmatprep.mubr.f32.mxu0 0.0
      %2121 = vmatmul.mubr.f32.gmra.mrb[0].mxu0 %v1917
      %v2122 = vpop.f32.mrb[0].mxu0
      %v2123 = vadd.f32 %v1871, %v2122
      %v2124 = vpop.f32.mrb[0].mxu0
      %2125 = vmatprep.mubr.f32.mxu0 0.0
      %2126 = vmatmul.mubr.f32.gmra.mrb[0].mxu0 %v1920
      %v2127 = vpop.f32.mrb[0].mxu0
      %v2128 = vadd.f32 %v1871, %v2127
      %v2129 = vpop.f32.mrb[0].mxu0
      %2130 = vmatprep.mubr.f32.mxu0 0.0
      %2131 = vmatmul.mubr.f32.gmra.mrb[0].mxu0 %v1923
      %v2132 = vpop.f32.mrb[0].mxu0
      %v2133 = vadd.f32 %v1871, %v2132
      %v2134 = vpop.f32.mrb[0].mxu0
      %2135 = vmatprep.mubr.f32.mxu0 0.0
      %2136 = vmatmul.mubr.f32.gmra.mrb[0].mxu0 %v1926
      %v2137 = vpop.f32.mrb[0].mxu0
      %v2138 = vadd.f32 %v1871, %v2137
      %v2139 = vpop.f32.mrb[0].mxu0
      %2140 = vmatprep.mubr.f32.mxu0 0.0
      %2141 = vmatmul.mubr.f32.gmra.mrb[0].mxu0 %v1929
      %v2142 = vpop.f32.mrb[0].mxu0
      %v2143 = vadd.f32 %v1871, %v2142
      %v2144 = vpop.f32.mrb[0].mxu0
      %2145 = vmatprep.mubr.f32.mxu0 0.0
      %2146 = vmatmul.mubr.f32.gmra.mrb[0].mxu0 %v1932
      %v2147 = vpop.f32.mrb[0].mxu0
      %v2148 = vadd.f32 %v1871, %v2147
      %v2149 = vpop.f32.mrb[0].mxu0
      %2150 = vmatprep.mubr.f32.mxu0 0.0
      %2151 = vmatmul.mubr.f32.gmra.mrb[0].mxu0 %v1935
      %v2152 = vpop.f32.mrb[0].mxu0
      %v2153 = vadd.f32 %v1871, %v2152
      %v2154 = vpop.f32.mrb[0].mxu0
      %2155 = vmatprep.mubr.f32.mxu0 0.0
      %2156 = vmatmul.mubr.f32.gmra.mrb[0].mxu0 %v1938
      %v2157 = vpop.f32.mrb[0].mxu0
      %v2158 = vadd.f32 %v1871, %v2157
      %v2159 = vpop.f32.mrb[0].mxu0
      %2160 = vmatprep.mubr.f32.mxu0 0.0
      %2161 = vmatmul.mubr.f32.gmra.mrb[0].mxu0 %v1941
      %v2162 = vpop.f32.mrb[0].mxu0
      %v2163 = vadd.f32 %v1871, %v2162
      %v2164 = vpop.f32.mrb[0].mxu0
      %2165 = vmatprep.mubr.f32.mxu0 0.0
      %2166 = vmatmul.mubr.f32.gmra.mrb[0].mxu0 %v1944
      %v2167 = vpop.f32.mrb[0].mxu0
      %v2168 = vadd.f32 %v1871, %v2167
      %v2169 = vpop.f32.mrb[0].mxu0
      %2170 = vmatprep.mubr.f32.mxu0 0.0
      %2171 = vmatmul.mubr.f32.gmra.mrb[0].mxu0 %v1947
      %v2172 = vpop.f32.mrb[0].mxu0
      %v2173 = vadd.f32 %v1871, %v2172
      %v2174 = vpop.f32.mrb[0].mxu0
      %2175 = vmatprep.mubr.f32.mxu0 0.0
      %2176 = vmatmul.mubr.f32.gmra.mrb[0].mxu0 %v1950
      %v2177 = vpop.f32.mrb[0].mxu0
      %v2178 = vadd.f32 %v1871, %v2177
      %v2179 = vpop.f32.mrb[0].mxu0
      %2180 = vmatprep.mubr.f32.mxu0 0.0
      %2181 = vmatmul.mubr.f32.gmra.mrb[0].mxu0 %v1953
      %v2182 = vpop.f32.mrb[0].mxu0
      %v2183 = vadd.f32 %v1871, %v2182
      %v2184 = vpop.f32.mrb[0].mxu0
      %2185 = vmatprep.mubr.f32.mxu0 0.0
      %2186 = vmatmul.mubr.f32.gmra.mrb[0].mxu0 %v1956
      %v2187 = vpop.f32.mrb[0].mxu0
      %v2188 = vadd.f32 %v1871, %v2187
      %v2189 = vpop.f32.mrb[0].mxu0
      %2190 = vmatprep.mubr.f32.mxu0 0.0
      %2191 = vmatmul.mubr.f32.gmra.mrb[0].mxu0 %v1959
      %v2192 = vpop.f32.mrb[0].mxu0
      %v2193 = vadd.f32 %v1871, %v2192
      %v2194 = vpop.f32.mrb[0].mxu0
      %2195 = vmatprep.mubr.f32.mxu0 0.0
      %2196 = vmatmul.mubr.f32.gmra.mrb[0].mxu0 %v1962
      %v2197 = vpop.f32.mrb[0].mxu0
      %v2198 = vadd.f32 %v1871, %v2197
      %v2199 = vpop.f32.mrb[0].mxu0
      %2200 = vmatprep.mubr.f32.mxu0 0.0
      %2201 = vmatmul.mubr.f32.gmra.mrb[0].mxu0 %v1965
      %v2202 = vpop.f32.mrb[0].mxu0
      %v2203 = vadd.f32 %v1871, %v2202
      %v2204 = vpop.f32.mrb[0].mxu0
      %2205 = vmatprep.mubr.f32.mxu0 0.0
      %2206 = vmatmul.mubr.f32.gmra.mrb[0].mxu0 %v1968
      %v2207 = vpop.f32.mrb[0].mxu0
      %v2208 = vadd.f32 %v1871, %v2207
      %v2209 = vpop.f32.mrb[0].mxu0
      %2210 = vmatprep.mubr.f32.mxu0 0.0
      %2211 = vmatmul.mubr.f32.gmra.mrb[0].mxu0 %v1971
      %v2212 = vpop.f32.mrb[0].mxu0
      %v2213 = vadd.f32 %v1871, %v2212
      %v2214 = vpop.f32.mrb[0].mxu0
      %2215 = vmatprep.mubr.f32.mxu0 0.0
      %2216 = vmatmul.mubr.f32.gmra.mrb[0].mxu0 %v1974
      %v2217 = vpop.f32.mrb[0].mxu0
      %v2218 = vadd.f32 %v1871, %v2217
      %v2219 = vpop.f32.mrb[0].mxu0
      %2220 = vmatprep.mubr.f32.mxu0 0.0
      %2221 = vmatmul.mubr.f32.gmra.mrb[0].mxu0 %v1977
      %v2222 = vpop.f32.mrb[0].mxu0
      %v2223 = vadd.f32 %v1871, %v2222
      %v2224 = vpop.f32.mrb[0].mxu0
      %2225 = vmatprep.mubr.f32.mxu0 0.0
      %2226 = vmatmul.mubr.f32.gmra.mrb[0].mxu0 %v1980
      %v2227 = vpop.f32.mrb[0].mxu0
      %v2228 = vadd.f32 %v1871, %v2227
      %v2229 = vpop.f32.mrb[0].mxu0
      %2230 = vdwg.mxu0
      %v2231 = vmax.f32 %v2053, 0.0
      %v2232 = vmax.f32 %v2058, 0.0
      %v2233 = vmax.f32 %v2063, 0.0
      %v2234 = vmax.f32 %v2068, 0.0
      %v2235 = vmax.f32 %v2073, 0.0
      %v2236 = vmax.f32 %v2078, 0.0
      %v2237 = vmax.f32 %v2083, 0.0
      %v2238 = vmax.f32 %v2088, 0.0
      %v2239 = vmax.f32 %v2093, 0.0
      %v2240 = vmax.f32 %v2098, 0.0
      %v2241 = vmax.f32 %v2103, 0.0
      %v2242 = vmax.f32 %v2108, 0.0
      %v2243 = vmax.f32 %v2113, 0.0
      %v2244 = vmax.f32 %v2118, 0.0
      %v2245 = vmax.f32 %v2123, 0.0
      %v2246 = vmax.f32 %v2128, 0.0
      %v2247 = vmax.f32 %v2133, 0.0
      %v2248 = vmax.f32 %v2138, 0.0
      %v2249 = vmax.f32 %v2143, 0.0
      %v2250 = vmax.f32 %v2148, 0.0
      %v2251 = vmax.f32 %v2153, 0.0
      %v2252 = vmax.f32 %v2158, 0.0
      %v2253 = vmax.f32 %v2163, 0.0
      %v2254 = vmax.f32 %v2168, 0.0
      %v2255 = vmax.f32 %v2173, 0.0
      %v2256 = vmax.f32 %v2178, 0.0
      %v2257 = vmax.f32 %v2183, 0.0
      %v2258 = vmax.f32 %v2188, 0.0
      %v2259 = vmax.f32 %v2193, 0.0
      %v2260 = vmax.f32 %v2198, 0.0
      %v2261 = vmax.f32 %v2203, 0.0
      %v2262 = vmax.f32 %v2208, 0.0
      %v2263 = vmax.f32 %v2213, 0.0
      %v2264 = vmax.f32 %v2218, 0.0
      %v2265 = vmax.f32 %v2223, 0.0
      %v2266 = vmax.f32 %v2228, 0.0
      %v2267 = vlaneseq
      %v2268 = vshrl.u32 %v2267, 7
      %v2269 = vadd.s32 %v2268, 8
      %v2270 = vadd.s32 %v2268, 16
      %v2271 = vadd.s32 %v2268, 24
      %v2272 = vadd.s32 %v2268, 32
      %v2273 = vadd.s32 %v2268, 40
      %v2274 = vadd.s32 %v2268, 48
      %v2275 = vadd.s32 %v2268, 56
      %v2276 = vadd.s32 %v2268, 64
      %v2277 = vadd.s32 %v2268, 72
      %v2278 = vadd.s32 %v2268, 80
      %v2279 = vadd.s32 %v2268, 88
      %v2280 = vadd.s32 %v2268, 96
      %v2281 = vadd.s32 %v2268, 104
      %v2282 = vadd.s32 %v2268, 112
      %v2283 = vadd.s32 %v2268, 120
      %v2284 = vadd.s32 %v2268, 128
      %v2285 = vadd.s32 %v2268, 136
      %v2286 = vadd.s32 %v2268, 144
      %v2287 = vadd.s32 %v2268, 152
      %v2288 = vadd.s32 %v2268, 160
      %v2289 = vadd.s32 %v2268, 168
      %v2290 = vadd.s32 %v2268, 176
      %v2291 = vadd.s32 %v2268, 184
      %v2292 = vadd.s32 %v2268, 192
      %v2293 = vadd.s32 %v2268, 200
      %v2294 = vadd.s32 %v2268, 208
      %v2295 = vadd.s32 %v2268, 216
      %v2296 = vadd.s32 %v2268, 224
      %v2297 = vadd.s32 %v2268, 232
      %v2298 = vadd.s32 %v2268, 240
      %v2299 = vadd.s32 %v2268, 248
      %v2300 = vadd.s32 %v2268, 256
      %v2301 = vadd.s32 %v2268, 264
      %v2302 = vadd.s32 %v2268, 272
      %v2303 = vadd.s32 %v2268, 280
      %vm2304 = vcmp.lt.s32.totalorder %v2268, 0
      %v2305 = vsub.s32 0, %v2268
      %v2306 = vsel %vm2304, %v2305, %v2268
      %v2307 = vmul.u32.u64.compose %v2306, 3817748708
      %v2308 = vextract.low.u32 %v2307
      %v2309 = vextract.high.u32 %v2307
      %v2310 = vshrl.u32 %v2309, 4
      %v2311 = vmul.u32 %v2310, 18
      %v2312 = vsub.s32 %v2306, %v2311
      %v2313 = vsub.s32 0, %v2312
      %v2314 = vsel %vm2304, %v2313, %v2312
      %vm2315 = vcmp.lt.s32.totalorder %v2269, 0
      %v2316 = vsub.s32 0, %v2269
      %v2317 = vsel %vm2315, %v2316, %v2269
      %v2318 = vmul.u32.u64.compose %v2317, 3817748708
      %v2319 = vextract.low.u32 %v2318
      %v2320 = vextract.high.u32 %v2318
      %v2321 = vshrl.u32 %v2320, 4
      %v2322 = vmul.u32 %v2321, 18
      %v2323 = vsub.s32 %v2317, %v2322
      %v2324 = vsub.s32 0, %v2323
      %v2325 = vsel %vm2315, %v2324, %v2323
      %vm2326 = vcmp.lt.s32.totalorder %v2270, 0
      %v2327 = vsub.s32 0, %v2270
      %v2328 = vsel %vm2326, %v2327, %v2270
      %v2329 = vmul.u32.u64.compose %v2328, 3817748708
      %v2330 = vextract.low.u32 %v2329
      %v2331 = vextract.high.u32 %v2329
      %v2332 = vshrl.u32 %v2331, 4
      %v2333 = vmul.u32 %v2332, 18
      %v2334 = vsub.s32 %v2328, %v2333
      %v2335 = vsub.s32 0, %v2334
      %v2336 = vsel %vm2326, %v2335, %v2334
      %vm2337 = vcmp.lt.s32.totalorder %v2271, 0
      %v2338 = vsub.s32 0, %v2271
      %v2339 = vsel %vm2337, %v2338, %v2271
      %v2340 = vmul.u32.u64.compose %v2339, 3817748708
      %v2341 = vextract.low.u32 %v2340
      %v2342 = vextract.high.u32 %v2340
      %v2343 = vshrl.u32 %v2342, 4
      %v2344 = vmul.u32 %v2343, 18
      %v2345 = vsub.s32 %v2339, %v2344
      %v2346 = vsub.s32 0, %v2345
      %v2347 = vsel %vm2337, %v2346, %v2345
      %vm2348 = vcmp.lt.s32.totalorder %v2272, 0
      %v2349 = vsub.s32 0, %v2272
      %v2350 = vsel %vm2348, %v2349, %v2272
      %v2351 = vmul.u32.u64.compose %v2350, 3817748708
      %v2352 = vextract.low.u32 %v2351
      %v2353 = vextract.high.u32 %v2351
      %v2354 = vshrl.u32 %v2353, 4
      %v2355 = vmul.u32 %v2354, 18
      %v2356 = vsub.s32 %v2350, %v2355
      %v2357 = vsub.s32 0, %v2356
      %v2358 = vsel %vm2348, %v2357, %v2356
      %vm2359 = vcmp.lt.s32.totalorder %v2273, 0
      %v2360 = vsub.s32 0, %v2273
      %v2361 = vsel %vm2359, %v2360, %v2273
      %v2362 = vmul.u32.u64.compose %v2361, 3817748708
      %v2363 = vextract.low.u32 %v2362
      %v2364 = vextract.high.u32 %v2362
      %v2365 = vshrl.u32 %v2364, 4
      %v2366 = vmul.u32 %v2365, 18
      %v2367 = vsub.s32 %v2361, %v2366
      %v2368 = vsub.s32 0, %v2367
      %v2369 = vsel %vm2359, %v2368, %v2367
      %vm2370 = vcmp.lt.s32.totalorder %v2274, 0
      %v2371 = vsub.s32 0, %v2274
      %v2372 = vsel %vm2370, %v2371, %v2274
      %v2373 = vmul.u32.u64.compose %v2372, 3817748708
      %v2374 = vextract.low.u32 %v2373
      %v2375 = vextract.high.u32 %v2373
      %v2376 = vshrl.u32 %v2375, 4
      %v2377 = vmul.u32 %v2376, 18
      %v2378 = vsub.s32 %v2372, %v2377
      %v2379 = vsub.s32 0, %v2378
      %v2380 = vsel %vm2370, %v2379, %v2378
      %vm2381 = vcmp.lt.s32.totalorder %v2275, 0
      %v2382 = vsub.s32 0, %v2275
      %v2383 = vsel %vm2381, %v2382, %v2275
      %v2384 = vmul.u32.u64.compose %v2383, 3817748708
      %v2385 = vextract.low.u32 %v2384
      %v2386 = vextract.high.u32 %v2384
      %v2387 = vshrl.u32 %v2386, 4
      %v2388 = vmul.u32 %v2387, 18
      %v2389 = vsub.s32 %v2383, %v2388
      %v2390 = vsub.s32 0, %v2389
      %v2391 = vsel %vm2381, %v2390, %v2389
      %vm2392 = vcmp.lt.s32.totalorder %v2276, 0
      %v2393 = vsub.s32 0, %v2276
      %v2394 = vsel %vm2392, %v2393, %v2276
      %v2395 = vmul.u32.u64.compose %v2394, 3817748708
      %v2396 = vextract.low.u32 %v2395
      %v2397 = vextract.high.u32 %v2395
      %v2398 = vshrl.u32 %v2397, 4
      %v2399 = vmul.u32 %v2398, 18
      %v2400 = vsub.s32 %v2394, %v2399
      %v2401 = vsub.s32 0, %v2400
      %v2402 = vsel %vm2392, %v2401, %v2400
      %vm2403 = vcmp.lt.s32.totalorder %v2277, 0
      %v2404 = vsub.s32 0, %v2277
      %v2405 = vsel %vm2403, %v2404, %v2277
      %v2406 = vmul.u32.u64.compose %v2405, 3817748708
      %v2407 = vextract.low.u32 %v2406
      %v2408 = vextract.high.u32 %v2406
      %v2409 = vshrl.u32 %v2408, 4
      %v2410 = vmul.u32 %v2409, 18
      %v2411 = vsub.s32 %v2405, %v2410
      %v2412 = vsub.s32 0, %v2411
      %v2413 = vsel %vm2403, %v2412, %v2411
      %vm2414 = vcmp.lt.s32.totalorder %v2278, 0
      %v2415 = vsub.s32 0, %v2278
      %v2416 = vsel %vm2414, %v2415, %v2278
      %v2417 = vmul.u32.u64.compose %v2416, 3817748708
      %v2418 = vextract.low.u32 %v2417
      %v2419 = vextract.high.u32 %v2417
      %v2420 = vshrl.u32 %v2419, 4
      %v2421 = vmul.u32 %v2420, 18
      %v2422 = vsub.s32 %v2416, %v2421
      %v2423 = vsub.s32 0, %v2422
      %v2424 = vsel %vm2414, %v2423, %v2422
      %vm2425 = vcmp.lt.s32.totalorder %v2279, 0
      %v2426 = vsub.s32 0, %v2279
      %v2427 = vsel %vm2425, %v2426, %v2279
      %v2428 = vmul.u32.u64.compose %v2427, 3817748708
      %v2429 = vextract.low.u32 %v2428
      %v2430 = vextract.high.u32 %v2428
      %v2431 = vshrl.u32 %v2430, 4
      %v2432 = vmul.u32 %v2431, 18
      %v2433 = vsub.s32 %v2427, %v2432
      %v2434 = vsub.s32 0, %v2433
      %v2435 = vsel %vm2425, %v2434, %v2433
      %vm2436 = vcmp.lt.s32.totalorder %v2280, 0
      %v2437 = vsub.s32 0, %v2280
      %v2438 = vsel %vm2436, %v2437, %v2280
      %v2439 = vmul.u32.u64.compose %v2438, 3817748708
      %v2440 = vextract.low.u32 %v2439
      %v2441 = vextract.high.u32 %v2439
      %v2442 = vshrl.u32 %v2441, 4
      %v2443 = vmul.u32 %v2442, 18
      %v2444 = vsub.s32 %v2438, %v2443
      %v2445 = vsub.s32 0, %v2444
      %v2446 = vsel %vm2436, %v2445, %v2444
      %vm2447 = vcmp.lt.s32.totalorder %v2281, 0
      %v2448 = vsub.s32 0, %v2281
      %v2449 = vsel %vm2447, %v2448, %v2281
      %v2450 = vmul.u32.u64.compose %v2449, 3817748708
      %v2451 = vextract.low.u32 %v2450
      %v2452 = vextract.high.u32 %v2450
      %v2453 = vshrl.u32 %v2452, 4
      %v2454 = vmul.u32 %v2453, 18
      %v2455 = vsub.s32 %v2449, %v2454
      %v2456 = vsub.s32 0, %v2455
      %v2457 = vsel %vm2447, %v2456, %v2455
      %vm2458 = vcmp.lt.s32.totalorder %v2282, 0
      %v2459 = vsub.s32 0, %v2282
      %v2460 = vsel %vm2458, %v2459, %v2282
      %v2461 = vmul.u32.u64.compose %v2460, 3817748708
      %v2462 = vextract.low.u32 %v2461
      %v2463 = vextract.high.u32 %v2461
      %v2464 = vshrl.u32 %v2463, 4
      %v2465 = vmul.u32 %v2464, 18
      %v2466 = vsub.s32 %v2460, %v2465
      %v2467 = vsub.s32 0, %v2466
      %v2468 = vsel %vm2458, %v2467, %v2466
      %vm2469 = vcmp.lt.s32.totalorder %v2283, 0
      %v2470 = vsub.s32 0, %v2283
      %v2471 = vsel %vm2469, %v2470, %v2283
      %v2472 = vmul.u32.u64.compose %v2471, 3817748708
      %v2473 = vextract.low.u32 %v2472
      %v2474 = vextract.high.u32 %v2472
      %v2475 = vshrl.u32 %v2474, 4
      %v2476 = vmul.u32 %v2475, 18
      %v2477 = vsub.s32 %v2471, %v2476
      %v2478 = vsub.s32 0, %v2477
      %v2479 = vsel %vm2469, %v2478, %v2477
      %vm2480 = vcmp.lt.s32.totalorder %v2284, 0
      %v2481 = vsub.s32 0, %v2284
      %v2482 = vsel %vm2480, %v2481, %v2284
      %v2483 = vmul.u32.u64.compose %v2482, 3817748708
      %v2484 = vextract.low.u32 %v2483
      %v2485 = vextract.high.u32 %v2483
      %v2486 = vshrl.u32 %v2485, 4
      %v2487 = vmul.u32 %v2486, 18
      %v2488 = vsub.s32 %v2482, %v2487
      %v2489 = vsub.s32 0, %v2488
      %v2490 = vsel %vm2480, %v2489, %v2488
      %vm2491 = vcmp.lt.s32.totalorder %v2285, 0
      %v2492 = vsub.s32 0, %v2285
      %v2493 = vsel %vm2491, %v2492, %v2285
      %v2494 = vmul.u32.u64.compose %v2493, 3817748708
      %v2495 = vextract.low.u32 %v2494
      %v2496 = vextract.high.u32 %v2494
      %v2497 = vshrl.u32 %v2496, 4
      %v2498 = vmul.u32 %v2497, 18
      %v2499 = vsub.s32 %v2493, %v2498
      %v2500 = vsub.s32 0, %v2499
      %v2501 = vsel %vm2491, %v2500, %v2499
      %vm2502 = vcmp.lt.s32.totalorder %v2286, 0
      %v2503 = vsub.s32 0, %v2286
      %v2504 = vsel %vm2502, %v2503, %v2286
      %v2505 = vmul.u32.u64.compose %v2504, 3817748708
      %v2506 = vextract.low.u32 %v2505
      %v2507 = vextract.high.u32 %v2505
      %v2508 = vshrl.u32 %v2507, 4
      %v2509 = vmul.u32 %v2508, 18
      %v2510 = vsub.s32 %v2504, %v2509
      %v2511 = vsub.s32 0, %v2510
      %v2512 = vsel %vm2502, %v2511, %v2510
      %vm2513 = vcmp.lt.s32.totalorder %v2287, 0
      %v2514 = vsub.s32 0, %v2287
      %v2515 = vsel %vm2513, %v2514, %v2287
      %v2516 = vmul.u32.u64.compose %v2515, 3817748708
      %v2517 = vextract.low.u32 %v2516
      %v2518 = vextract.high.u32 %v2516
      %v2519 = vshrl.u32 %v2518, 4
      %v2520 = vmul.u32 %v2519, 18
      %v2521 = vsub.s32 %v2515, %v2520
      %v2522 = vsub.s32 0, %v2521
      %v2523 = vsel %vm2513, %v2522, %v2521
      %vm2524 = vcmp.lt.s32.totalorder %v2288, 0
      %v2525 = vsub.s32 0, %v2288
      %v2526 = vsel %vm2524, %v2525, %v2288
      %v2527 = vmul.u32.u64.compose %v2526, 3817748708
      %v2528 = vextract.low.u32 %v2527
      %v2529 = vextract.high.u32 %v2527
      %v2530 = vshrl.u32 %v2529, 4
      %v2531 = vmul.u32 %v2530, 18
      %v2532 = vsub.s32 %v2526, %v2531
      %v2533 = vsub.s32 0, %v2532
      %v2534 = vsel %vm2524, %v2533, %v2532
      %vm2535 = vcmp.lt.s32.totalorder %v2289, 0
      %v2536 = vsub.s32 0, %v2289
      %v2537 = vsel %vm2535, %v2536, %v2289
      %v2538 = vmul.u32.u64.compose %v2537, 3817748708
      %v2539 = vextract.low.u32 %v2538
      %v2540 = vextract.high.u32 %v2538
      %v2541 = vshrl.u32 %v2540, 4
      %v2542 = vmul.u32 %v2541, 18
      %v2543 = vsub.s32 %v2537, %v2542
      %v2544 = vsub.s32 0, %v2543
      %v2545 = vsel %vm2535, %v2544, %v2543
      %vm2546 = vcmp.lt.s32.totalorder %v2290, 0
      %v2547 = vsub.s32 0, %v2290
      %v2548 = vsel %vm2546, %v2547, %v2290
      %v2549 = vmul.u32.u64.compose %v2548, 3817748708
      %v2550 = vextract.low.u32 %v2549
      %v2551 = vextract.high.u32 %v2549
      %v2552 = vshrl.u32 %v2551, 4
      %v2553 = vmul.u32 %v2552, 18
      %v2554 = vsub.s32 %v2548, %v2553
      %v2555 = vsub.s32 0, %v2554
      %v2556 = vsel %vm2546, %v2555, %v2554
      %vm2557 = vcmp.lt.s32.totalorder %v2291, 0
      %v2558 = vsub.s32 0, %v2291
      %v2559 = vsel %vm2557, %v2558, %v2291
      %v2560 = vmul.u32.u64.compose %v2559, 3817748708
      %v2561 = vextract.low.u32 %v2560
      %v2562 = vextract.high.u32 %v2560
      %v2563 = vshrl.u32 %v2562, 4
      %v2564 = vmul.u32 %v2563, 18
      %v2565 = vsub.s32 %v2559, %v2564
      %v2566 = vsub.s32 0, %v2565
      %v2567 = vsel %vm2557, %v2566, %v2565
      %vm2568 = vcmp.lt.s32.totalorder %v2292, 0
      %v2569 = vsub.s32 0, %v2292
      %v2570 = vsel %vm2568, %v2569, %v2292
      %v2571 = vmul.u32.u64.compose %v2570, 3817748708
      %v2572 = vextract.low.u32 %v2571
      %v2573 = vextract.high.u32 %v2571
      %v2574 = vshrl.u32 %v2573, 4
      %v2575 = vmul.u32 %v2574, 18
      %v2576 = vsub.s32 %v2570, %v2575
      %v2577 = vsub.s32 0, %v2576
      %v2578 = vsel %vm2568, %v2577, %v2576
      %vm2579 = vcmp.lt.s32.totalorder %v2293, 0
      %v2580 = vsub.s32 0, %v2293
      %v2581 = vsel %vm2579, %v2580, %v2293
      %v2582 = vmul.u32.u64.compose %v2581, 3817748708
      %v2583 = vextract.low.u32 %v2582
      %v2584 = vextract.high.u32 %v2582
      %v2585 = vshrl.u32 %v2584, 4
      %v2586 = vmul.u32 %v2585, 18
      %v2587 = vsub.s32 %v2581, %v2586
      %v2588 = vsub.s32 0, %v2587
      %v2589 = vsel %vm2579, %v2588, %v2587
      %vm2590 = vcmp.lt.s32.totalorder %v2294, 0
      %v2591 = vsub.s32 0, %v2294
      %v2592 = vsel %vm2590, %v2591, %v2294
      %v2593 = vmul.u32.u64.compose %v2592, 3817748708
      %v2594 = vextract.low.u32 %v2593
      %v2595 = vextract.high.u32 %v2593
      %v2596 = vshrl.u32 %v2595, 4
      %v2597 = vmul.u32 %v2596, 18
      %v2598 = vsub.s32 %v2592, %v2597
      %v2599 = vsub.s32 0, %v2598
      %v2600 = vsel %vm2590, %v2599, %v2598
      %vm2601 = vcmp.lt.s32.totalorder %v2295, 0
      %v2602 = vsub.s32 0, %v2295
      %v2603 = vsel %vm2601, %v2602, %v2295
      %v2604 = vmul.u32.u64.compose %v2603, 3817748708
      %v2605 = vextract.low.u32 %v2604
      %v2606 = vextract.high.u32 %v2604
      %v2607 = vshrl.u32 %v2606, 4
      %v2608 = vmul.u32 %v2607, 18
      %v2609 = vsub.s32 %v2603, %v2608
      %v2610 = vsub.s32 0, %v2609
      %v2611 = vsel %vm2601, %v2610, %v2609
      %vm2612 = vcmp.lt.s32.totalorder %v2296, 0
      %v2613 = vsub.s32 0, %v2296
      %v2614 = vsel %vm2612, %v2613, %v2296
      %v2615 = vmul.u32.u64.compose %v2614, 3817748708
      %v2616 = vextract.low.u32 %v2615
      %v2617 = vextract.high.u32 %v2615
      %v2618 = vshrl.u32 %v2617, 4
      %v2619 = vmul.u32 %v2618, 18
      %v2620 = vsub.s32 %v2614, %v2619
      %v2621 = vsub.s32 0, %v2620
      %v2622 = vsel %vm2612, %v2621, %v2620
      %vm2623 = vcmp.lt.s32.totalorder %v2297, 0
      %v2624 = vsub.s32 0, %v2297
      %v2625 = vsel %vm2623, %v2624, %v2297
      %v2626 = vmul.u32.u64.compose %v2625, 3817748708
      %v2627 = vextract.low.u32 %v2626
      %v2628 = vextract.high.u32 %v2626
      %v2629 = vshrl.u32 %v2628, 4
      %v2630 = vmul.u32 %v2629, 18
      %v2631 = vsub.s32 %v2625, %v2630
      %v2632 = vsub.s32 0, %v2631
      %v2633 = vsel %vm2623, %v2632, %v2631
      %vm2634 = vcmp.lt.s32.totalorder %v2298, 0
      %v2635 = vsub.s32 0, %v2298
      %v2636 = vsel %vm2634, %v2635, %v2298
      %v2637 = vmul.u32.u64.compose %v2636, 3817748708
      %v2638 = vextract.low.u32 %v2637
      %v2639 = vextract.high.u32 %v2637
      %v2640 = vshrl.u32 %v2639, 4
      %v2641 = vmul.u32 %v2640, 18
      %v2642 = vsub.s32 %v2636, %v2641
      %v2643 = vsub.s32 0, %v2642
      %v2644 = vsel %vm2634, %v2643, %v2642
      %vm2645 = vcmp.lt.s32.totalorder %v2299, 0
      %v2646 = vsub.s32 0, %v2299
      %v2647 = vsel %vm2645, %v2646, %v2299
      %v2648 = vmul.u32.u64.compose %v2647, 3817748708
      %v2649 = vextract.low.u32 %v2648
      %v2650 = vextract.high.u32 %v2648
      %v2651 = vshrl.u32 %v2650, 4
      %v2652 = vmul.u32 %v2651, 18
      %v2653 = vsub.s32 %v2647, %v2652
      %v2654 = vsub.s32 0, %v2653
      %v2655 = vsel %vm2645, %v2654, %v2653
      %vm2656 = vcmp.lt.s32.totalorder %v2300, 0
      %v2657 = vsub.s32 0, %v2300
      %v2658 = vsel %vm2656, %v2657, %v2300
      %v2659 = vmul.u32.u64.compose %v2658, 3817748708
      %v2660 = vextract.low.u32 %v2659
      %v2661 = vextract.high.u32 %v2659
      %v2662 = vshrl.u32 %v2661, 4
      %v2663 = vmul.u32 %v2662, 18
      %v2664 = vsub.s32 %v2658, %v2663
      %v2665 = vsub.s32 0, %v2664
      %v2666 = vsel %vm2656, %v2665, %v2664
      %vm2667 = vcmp.lt.s32.totalorder %v2301, 0
      %v2668 = vsub.s32 0, %v2301
      %v2669 = vsel %vm2667, %v2668, %v2301
      %v2670 = vmul.u32.u64.compose %v2669, 3817748708
      %v2671 = vextract.low.u32 %v2670
      %v2672 = vextract.high.u32 %v2670
      %v2673 = vshrl.u32 %v2672, 4
      %v2674 = vmul.u32 %v2673, 18
      %v2675 = vsub.s32 %v2669, %v2674
      %v2676 = vsub.s32 0, %v2675
      %v2677 = vsel %vm2667, %v2676, %v2675
      %vm2678 = vcmp.lt.s32.totalorder %v2302, 0
      %v2679 = vsub.s32 0, %v2302
      %v2680 = vsel %vm2678, %v2679, %v2302
      %v2681 = vmul.u32.u64.compose %v2680, 3817748708
      %v2682 = vextract.low.u32 %v2681
      %v2683 = vextract.high.u32 %v2681
      %v2684 = vshrl.u32 %v2683, 4
      %v2685 = vmul.u32 %v2684, 18
      %v2686 = vsub.s32 %v2680, %v2685
      %v2687 = vsub.s32 0, %v2686
      %v2688 = vsel %vm2678, %v2687, %v2686
      %vm2689 = vcmp.lt.s32.totalorder %v2303, 0
      %v2690 = vsub.s32 0, %v2303
      %v2691 = vsel %vm2689, %v2690, %v2303
      %v2692 = vmul.u32.u64.compose %v2691, 3817748708
      %v2693 = vextract.low.u32 %v2692
      %v2694 = vextract.high.u32 %v2692
      %v2695 = vshrl.u32 %v2694, 4
      %v2696 = vmul.u32 %v2695, 18
      %v2697 = vsub.s32 %v2691, %v2696
      %v2698 = vsub.s32 0, %v2697
      %v2699 = vsel %vm2689, %v2698, %v2697
      %vm2700 = vcmp.ne.s32.totalorder %v2314, 0
      %vm2701 = vcmp.ne.s32.totalorder %v2325, 0
      %vm2702 = vcmp.ne.s32.totalorder %v2336, 0
      %vm2703 = vcmp.ne.s32.totalorder %v2347, 0
      %vm2704 = vcmp.ne.s32.totalorder %v2358, 0
      %vm2705 = vcmp.ne.s32.totalorder %v2369, 0
      %vm2706 = vcmp.ne.s32.totalorder %v2380, 0
      %vm2707 = vcmp.ne.s32.totalorder %v2391, 0
      %vm2708 = vcmp.ne.s32.totalorder %v2402, 0
      %vm2709 = vcmp.ne.s32.totalorder %v2413, 0
      %vm2710 = vcmp.ne.s32.totalorder %v2424, 0
      %vm2711 = vcmp.ne.s32.totalorder %v2435, 0
      %vm2712 = vcmp.ne.s32.totalorder %v2446, 0
      %vm2713 = vcmp.ne.s32.totalorder %v2457, 0
      %vm2714 = vcmp.ne.s32.totalorder %v2468, 0
      %vm2715 = vcmp.ne.s32.totalorder %v2479, 0
      %vm2716 = vcmp.ne.s32.totalorder %v2490, 0
      %vm2717 = vcmp.ne.s32.totalorder %v2501, 0
      %vm2718 = vcmp.ne.s32.totalorder %v2512, 0
      %vm2719 = vcmp.ne.s32.totalorder %v2523, 0
      %vm2720 = vcmp.ne.s32.totalorder %v2534, 0
      %vm2721 = vcmp.ne.s32.totalorder %v2545, 0
      %vm2722 = vcmp.ne.s32.totalorder %v2556, 0
      %vm2723 = vcmp.ne.s32.totalorder %v2567, 0
      %vm2724 = vcmp.ne.s32.totalorder %v2578, 0
      %vm2725 = vcmp.ne.s32.totalorder %v2589, 0
      %vm2726 = vcmp.ne.s32.totalorder %v2600, 0
      %vm2727 = vcmp.ne.s32.totalorder %v2611, 0
      %vm2728 = vcmp.ne.s32.totalorder %v2622, 0
      %vm2729 = vcmp.ne.s32.totalorder %v2633, 0
      %vm2730 = vcmp.ne.s32.totalorder %v2644, 0
      %vm2731 = vcmp.ne.s32.totalorder %v2655, 0
      %vm2732 = vcmp.ne.s32.totalorder %v2666, 0
      %vm2733 = vcmp.ne.s32.totalorder %v2677, 0
      %vm2734 = vcmp.ne.s32.totalorder %v2688, 0
      %vm2735 = vcmp.ne.s32.totalorder %v2699, 0
      %vm2736 = vcmp.lt.s32.totalorder %v2314, 0
      %vm2737 = vcmp.lt.s32.totalorder %v2325, 0
      %vm2738 = vcmp.lt.s32.totalorder %v2336, 0
      %vm2739 = vcmp.lt.s32.totalorder %v2347, 0
      %vm2740 = vcmp.lt.s32.totalorder %v2358, 0
      %vm2741 = vcmp.lt.s32.totalorder %v2369, 0
      %vm2742 = vcmp.lt.s32.totalorder %v2380, 0
      %vm2743 = vcmp.lt.s32.totalorder %v2391, 0
      %vm2744 = vcmp.lt.s32.totalorder %v2402, 0
      %vm2745 = vcmp.lt.s32.totalorder %v2413, 0
      %vm2746 = vcmp.lt.s32.totalorder %v2424, 0
      %vm2747 = vcmp.lt.s32.totalorder %v2435, 0
      %vm2748 = vcmp.lt.s32.totalorder %v2446, 0
      %vm2749 = vcmp.lt.s32.totalorder %v2457, 0
      %vm2750 = vcmp.lt.s32.totalorder %v2468, 0
      %vm2751 = vcmp.lt.s32.totalorder %v2479, 0
      %vm2752 = vcmp.lt.s32.totalorder %v2490, 0
      %vm2753 = vcmp.lt.s32.totalorder %v2501, 0
      %vm2754 = vcmp.lt.s32.totalorder %v2512, 0
      %vm2755 = vcmp.lt.s32.totalorder %v2523, 0
      %vm2756 = vcmp.lt.s32.totalorder %v2534, 0
      %vm2757 = vcmp.lt.s32.totalorder %v2545, 0
      %vm2758 = vcmp.lt.s32.totalorder %v2556, 0
      %vm2759 = vcmp.lt.s32.totalorder %v2567, 0
      %vm2760 = vcmp.lt.s32.totalorder %v2578, 0
      %vm2761 = vcmp.lt.s32.totalorder %v2589, 0
      %vm2762 = vcmp.lt.s32.totalorder %v2600, 0
      %vm2763 = vcmp.lt.s32.totalorder %v2611, 0
      %vm2764 = vcmp.lt.s32.totalorder %v2622, 0
      %vm2765 = vcmp.lt.s32.totalorder %v2633, 0
      %vm2766 = vcmp.lt.s32.totalorder %v2644, 0
      %vm2767 = vcmp.lt.s32.totalorder %v2655, 0
      %vm2768 = vcmp.lt.s32.totalorder %v2666, 0
      %vm2769 = vcmp.lt.s32.totalorder %v2677, 0
      %vm2770 = vcmp.lt.s32.totalorder %v2688, 0
      %vm2771 = vcmp.lt.s32.totalorder %v2699, 0
      %vm2772 = vmand %vm2736, %vm2700
      %vm2773 = vmand %vm2737, %vm2701
      %vm2774 = vmand %vm2738, %vm2702
      %vm2775 = vmand %vm2739, %vm2703
      %vm2776 = vmand %vm2740, %vm2704
      %vm2777 = vmand %vm2741, %vm2705
      %vm2778 = vmand %vm2742, %vm2706
      %vm2779 = vmand %vm2743, %vm2707
      %vm2780 = vmand %vm2744, %vm2708
      %vm2781 = vmand %vm2745, %vm2709
      %vm2782 = vmand %vm2746, %vm2710
      %vm2783 = vmand %vm2747, %vm2711
      %vm2784 = vmand %vm2748, %vm2712
      %vm2785 = vmand %vm2749, %vm2713
      %vm2786 = vmand %vm2750, %vm2714
      %vm2787 = vmand %vm2751, %vm2715
      %vm2788 = vmand %vm2752, %vm2716
      %vm2789 = vmand %vm2753, %vm2717
      %vm2790 = vmand %vm2754, %vm2718
      %vm2791 = vmand %vm2755, %vm2719
      %vm2792 = vmand %vm2756, %vm2720
      %vm2793 = vmand %vm2757, %vm2721
      %vm2794 = vmand %vm2758, %vm2722
      %vm2795 = vmand %vm2759, %vm2723
      %vm2796 = vmand %vm2760, %vm2724
      %vm2797 = vmand %vm2761, %vm2725
      %vm2798 = vmand %vm2762, %vm2726
      %vm2799 = vmand %vm2763, %vm2727
      %vm2800 = vmand %vm2764, %vm2728
      %vm2801 = vmand %vm2765, %vm2729
      %vm2802 = vmand %vm2766, %vm2730
      %vm2803 = vmand %vm2767, %vm2731
      %vm2804 = vmand %vm2768, %vm2732
      %vm2805 = vmand %vm2769, %vm2733
      %vm2806 = vmand %vm2770, %vm2734
      %vm2807 = vmand %vm2771, %vm2735
      %v2808 = vadd.s32 %v2314, 18
      %v2809 = vadd.s32 %v2325, 18
      %v2810 = vadd.s32 %v2336, 18
      %v2811 = vadd.s32 %v2347, 18
      %v2812 = vadd.s32 %v2358, 18
      %v2813 = vadd.s32 %v2369, 18
      %v2814 = vadd.s32 %v2380, 18
      %v2815 = vadd.s32 %v2391, 18
      %v2816 = vadd.s32 %v2402, 18
      %v2817 = vadd.s32 %v2413, 18
      %v2818 = vadd.s32 %v2424, 18
      %v2819 = vadd.s32 %v2435, 18
      %v2820 = vadd.s32 %v2446, 18
      %v2821 = vadd.s32 %v2457, 18
      %v2822 = vadd.s32 %v2468, 18
      %v2823 = vadd.s32 %v2479, 18
      %v2824 = vadd.s32 %v2490, 18
      %v2825 = vadd.s32 %v2501, 18
      %v2826 = vadd.s32 %v2512, 18
      %v2827 = vadd.s32 %v2523, 18
      %v2828 = vadd.s32 %v2534, 18
      %v2829 = vadd.s32 %v2545, 18
      %v2830 = vadd.s32 %v2556, 18
      %v2831 = vadd.s32 %v2567, 18
      %v2832 = vadd.s32 %v2578, 18
      %v2833 = vadd.s32 %v2589, 18
      %v2834 = vadd.s32 %v2600, 18
      %v2835 = vadd.s32 %v2611, 18
      %v2836 = vadd.s32 %v2622, 18
      %v2837 = vadd.s32 %v2633, 18
      %v2838 = vadd.s32 %v2644, 18
      %v2839 = vadd.s32 %v2655, 18
      %v2840 = vadd.s32 %v2666, 18
      %v2841 = vadd.s32 %v2677, 18
      %v2842 = vadd.s32 %v2688, 18
      %v2843 = vadd.s32 %v2699, 18
      %v2844 = vsel %vm2772, %v2808, %v2314
      %v2845 = vsel %vm2773, %v2809, %v2325
      %v2846 = vsel %vm2774, %v2810, %v2336
      %v2847 = vsel %vm2775, %v2811, %v2347
      %v2848 = vsel %vm2776, %v2812, %v2358
      %v2849 = vsel %vm2777, %v2813, %v2369
      %v2850 = vsel %vm2778, %v2814, %v2380
      %v2851 = vsel %vm2779, %v2815, %v2391
      %v2852 = vsel %vm2780, %v2816, %v2402
      %v2853 = vsel %vm2781, %v2817, %v2413
      %v2854 = vsel %vm2782, %v2818, %v2424
      %v2855 = vsel %vm2783, %v2819, %v2435
      %v2856 = vsel %vm2784, %v2820, %v2446
      %v2857 = vsel %vm2785, %v2821, %v2457
      %v2858 = vsel %vm2786, %v2822, %v2468
      %v2859 = vsel %vm2787, %v2823, %v2479
      %v2860 = vsel %vm2788, %v2824, %v2490
      %v2861 = vsel %vm2789, %v2825, %v2501
      %v2862 = vsel %vm2790, %v2826, %v2512
      %v2863 = vsel %vm2791, %v2827, %v2523
      %v2864 = vsel %vm2792, %v2828, %v2534
      %v2865 = vsel %vm2793, %v2829, %v2545
      %v2866 = vsel %vm2794, %v2830, %v2556
      %v2867 = vsel %vm2795, %v2831, %v2567
      %v2868 = vsel %vm2796, %v2832, %v2578
      %v2869 = vsel %vm2797, %v2833, %v2589
      %v2870 = vsel %vm2798, %v2834, %v2600
      %v2871 = vsel %vm2799, %v2835, %v2611
      %v2872 = vsel %vm2800, %v2836, %v2622
      %v2873 = vsel %vm2801, %v2837, %v2633
      %v2874 = vsel %vm2802, %v2838, %v2644
      %v2875 = vsel %vm2803, %v2839, %v2655
      %v2876 = vsel %vm2804, %v2840, %v2666
      %v2877 = vsel %vm2805, %v2841, %v2677
      %v2878 = vsel %vm2806, %v2842, %v2688
      %v2879 = vsel %vm2807, %v2843, %v2699
      %vm2880 = vcmp.lt.s32.totalorder %v2844, 16
      %vm2881 = vcmp.lt.s32.totalorder %v2845, 16
      %vm2882 = vcmp.lt.s32.totalorder %v2846, 16
      %vm2883 = vcmp.lt.s32.totalorder %v2847, 16
      %vm2884 = vcmp.lt.s32.totalorder %v2848, 16
      %vm2885 = vcmp.lt.s32.totalorder %v2849, 16
      %vm2886 = vcmp.lt.s32.totalorder %v2850, 16
      %vm2887 = vcmp.lt.s32.totalorder %v2851, 16
      %vm2888 = vcmp.lt.s32.totalorder %v2852, 16
      %vm2889 = vcmp.lt.s32.totalorder %v2853, 16
      %vm2890 = vcmp.lt.s32.totalorder %v2854, 16
      %vm2891 = vcmp.lt.s32.totalorder %v2855, 16
      %vm2892 = vcmp.lt.s32.totalorder %v2856, 16
      %vm2893 = vcmp.lt.s32.totalorder %v2857, 16
      %vm2894 = vcmp.lt.s32.totalorder %v2858, 16
      %vm2895 = vcmp.lt.s32.totalorder %v2859, 16
      %vm2896 = vcmp.lt.s32.totalorder %v2860, 16
      %vm2897 = vcmp.lt.s32.totalorder %v2861, 16
      %vm2898 = vcmp.lt.s32.totalorder %v2862, 16
      %vm2899 = vcmp.lt.s32.totalorder %v2863, 16
      %vm2900 = vcmp.lt.s32.totalorder %v2864, 16
      %vm2901 = vcmp.lt.s32.totalorder %v2865, 16
      %vm2902 = vcmp.lt.s32.totalorder %v2866, 16
      %vm2903 = vcmp.lt.s32.totalorder %v2867, 16
      %vm2904 = vcmp.lt.s32.totalorder %v2868, 16
      %vm2905 = vcmp.lt.s32.totalorder %v2869, 16
      %vm2906 = vcmp.lt.s32.totalorder %v2870, 16
      %vm2907 = vcmp.lt.s32.totalorder %v2871, 16
      %vm2908 = vcmp.lt.s32.totalorder %v2872, 16
      %vm2909 = vcmp.lt.s32.totalorder %v2873, 16
      %vm2910 = vcmp.lt.s32.totalorder %v2874, 16
      %vm2911 = vcmp.lt.s32.totalorder %v2875, 16
      %vm2912 = vcmp.lt.s32.totalorder %v2876, 16
      %vm2913 = vcmp.lt.s32.totalorder %v2877, 16
      %vm2914 = vcmp.lt.s32.totalorder %v2878, 16
      %vm2915 = vcmp.lt.s32.totalorder %v2879, 16
      %2916 = vst.msk [vmem:[#allocation2] sm:$0xff] %vm1602, 0.0
      %2917 = vst.msk [vmem:[#allocation2 + $0x8] sm:$0xff] %vm1602, 0.0
      %2918 = vst.msk [vmem:[#allocation2 + $0x10] sm:$0xff] %vm1602, 0.0
      %2919 = vst.msk [vmem:[#allocation2 + $0x18] sm:$0xff] %vm1602, 0.0
      %2920 = vst.msk [vmem:[#allocation2 + $0x20] sm:$0xff] %vm1602, 0.0
      %2921 = vst.msk [vmem:[#allocation2 + $0x28] sm:$0xff] %vm1602, 0.0
      %2922 = vst.msk [vmem:[#allocation2 + $0x30] sm:$0xff] %vm1602, 0.0
      %2923 = vst.msk [vmem:[#allocation2 + $0x38] sm:$0xff] %vm1602, 0.0
      %2924 = vst.msk [vmem:[#allocation2 + $0x40] sm:$0xff] %vm1602, 0.0
      %2925 = vst.msk [vmem:[#allocation2 + $0x48] sm:$0xff] %vm1602, 0.0
      %2926 = vst.msk [vmem:[#allocation2 + $0x50] sm:$0xff] %vm1602, 0.0
      %2927 = vst.msk [vmem:[#allocation2 + $0x58] sm:$0xff] %vm1602, 0.0
      %2928 = vst.msk [vmem:[#allocation2 + $0x60] sm:$0xff] %vm1602, 0.0
      %2929 = vst.msk [vmem:[#allocation2 + $0x68] sm:$0xff] %vm1602, 0.0
      %2930 = vst.msk [vmem:[#allocation2 + $0x70] sm:$0xff] %vm1602, 0.0
      %2931 = vst.msk [vmem:[#allocation2 + $0x78] sm:$0xff] %vm1602, 0.0
      %2932 = vst.msk [vmem:[#allocation2 + $0x80] sm:$0xff] %vm1602, 0.0
      %2933 = vst.msk [vmem:[#allocation2 + $0x88] sm:$0xff] %vm1602, 0.0
      %2934 = vst.msk [vmem:[#allocation2 + $0x90] sm:$0xff] %vm1602, 0.0
      %2935 = vst.msk [vmem:[#allocation2 + $0x98] sm:$0xff] %vm1602, 0.0
      %2936 = vst.msk [vmem:[#allocation2 + $0xa0] sm:$0xff] %vm1602, 0.0
      %2937 = vst.msk [vmem:[#allocation2 + $0xa8] sm:$0xff] %vm1602, 0.0
      %2938 = vst.msk [vmem:[#allocation2 + $0xb0] sm:$0xff] %vm1602, 0.0
      %2939 = vst.msk [vmem:[#allocation2 + $0xb8] sm:$0xff] %vm1602, 0.0
      %2940 = vst.msk [vmem:[#allocation2 + $0xc0] sm:$0xff] %vm1602, 0.0
      %2941 = vst.msk [vmem:[#allocation2 + $0xc8] sm:$0xff] %vm1602, 0.0
      %2942 = vst.msk [vmem:[#allocation2 + $0xd0] sm:$0xff] %vm1602, 0.0
      %2943 = vst.msk [vmem:[#allocation2 + $0xd8] sm:$0xff] %vm1602, 0.0
      %2944 = vst.msk [vmem:[#allocation2 + $0xe0] sm:$0xff] %vm1602, 0.0
      %2945 = vst.msk [vmem:[#allocation2 + $0xe8] sm:$0xff] %vm1602, 0.0
      %2946 = vst.msk [vmem:[#allocation2 + $0xf0] sm:$0xff] %vm1602, 0.0
      %2947 = vst.msk [vmem:[#allocation2 + $0xf8] sm:$0xff] %vm1602, 0.0
      %2948 = vst.msk [vmem:[#allocation2 + $0x100] sm:$0xff] %vm1602, 0.0
      %2949 = vst.msk [vmem:[#allocation2 + $0x108] sm:$0xff] %vm1602, 0.0
      %2950 = vst.msk [vmem:[#allocation2 + $0x110] sm:$0xff] %vm1602, 0.0
      %2951 = vst.msk [vmem:[#allocation2 + $0x118] sm:$0xff] %vm1602, 0.0
      %2952 = vst.msk [vmem:[#allocation2 + $0x120] sm:$0xff] %vm1602, 0.0
      %2953 = vst.msk [vmem:[#allocation2 + $0x128] sm:$0xff] %vm1602, 0.0
      %2954 = vst.msk [vmem:[#allocation2 + $0x130] sm:$0xff] %vm1602, 0.0
      %2955 = vst.msk [vmem:[#allocation2 + $0x138] sm:$0xff] %vm1602, 0.0
      %2956 = vst.msk [vmem:[#allocation2 + $0x140] sm:$0xff] %vm1602, 0.0
      %2957 = vst.msk [vmem:[#allocation2 + $0x148] sm:$0xff] %vm1602, 0.0
      %vm2958 = vcmask 62464
      %2959 = vst.msk [vmem:[#allocation2 + $0x150] sm:$0x3f] %vm2958, 0.0
      %v2960 = vsel %vm2880, %v2231, 0.0
      %v2961 = vsel %vm2881, %v2232, 0.0
      %v2962 = vsel %vm2882, %v2233, 0.0
      %v2963 = vsel %vm2883, %v2234, 0.0
      %v2964 = vsel %vm2884, %v2235, 0.0
      %v2965 = vsel %vm2885, %v2236, 0.0
      %v2966 = vsel %vm2886, %v2237, 0.0
      %v2967 = vsel %vm2887, %v2238, 0.0
      %v2968 = vsel %vm2888, %v2239, 0.0
      %v2969 = vsel %vm2889, %v2240, 0.0
      %v2970 = vsel %vm2890, %v2241, 0.0
      %v2971 = vsel %vm2891, %v2242, 0.0
      %v2972 = vsel %vm2892, %v2243, 0.0
      %v2973 = vsel %vm2893, %v2244, 0.0
      %v2974 = vsel %vm2894, %v2245, 0.0
      %v2975 = vsel %vm2895, %v2246, 0.0
      %v2976 = vsel %vm2896, %v2247, 0.0
      %v2977 = vsel %vm2897, %v2248, 0.0
      %v2978 = vsel %vm2898, %v2249, 0.0
      %v2979 = vsel %vm2899, %v2250, 0.0
      %v2980 = vsel %vm2900, %v2251, 0.0
      %v2981 = vsel %vm2901, %v2252, 0.0
      %v2982 = vsel %vm2902, %v2253, 0.0
      %v2983 = vsel %vm2903, %v2254, 0.0
      %v2984 = vsel %vm2904, %v2255, 0.0
      %v2985 = vsel %vm2905, %v2256, 0.0
      %v2986 = vsel %vm2906, %v2257, 0.0
      %v2987 = vsel %vm2907, %v2258, 0.0
      %v2988 = vsel %vm2908, %v2259, 0.0
      %v2989 = vsel %vm2909, %v2260, 0.0
      %v2990 = vsel %vm2910, %v2261, 0.0
      %v2991 = vsel %vm2911, %v2262, 0.0
      %v2992 = vsel %vm2912, %v2263, 0.0
      %v2993 = vsel %vm2913, %v2264, 0.0
      %v2994 = vsel %vm2914, %v2265, 0.0
      %v2995 = vsel %vm2915, %v2266, 0.0
      %2996 = vst.msk [vmem:[#allocation2 + $0x13] sm:$0xff] %vm1602, %v2960
      %2997 = vst.msk [vmem:[#allocation2 + $0x1b] sm:$0xff] %vm1602, %v2961
      %2998 = vst.msk [vmem:[#allocation2 + $0x23] sm:$0xff] %vm1602, %v2962
      %2999 = vst.msk [vmem:[#allocation2 + $0x2b] sm:$0xff] %vm1602, %v2963
      %3000 = vst.msk [vmem:[#allocation2 + $0x33] sm:$0xff] %vm1602, %v2964
      %3001 = vst.msk [vmem:[#allocation2 + $0x3b] sm:$0xff] %vm1602, %v2965
      %3002 = vst.msk [vmem:[#allocation2 + $0x43] sm:$0xff] %vm1602, %v2966
      %3003 = vst.msk [vmem:[#allocation2 + $0x4b] sm:$0xff] %vm1602, %v2967
      %3004 = vst.msk [vmem:[#allocation2 + $0x53] sm:$0xff] %vm1602, %v2968
      %3005 = vst.msk [vmem:[#allocation2 + $0x5b] sm:$0xff] %vm1602, %v2969
      %3006 = vst.msk [vmem:[#allocation2 + $0x63] sm:$0xff] %vm1602, %v2970
      %3007 = vst.msk [vmem:[#allocation2 + $0x6b] sm:$0xff] %vm1602, %v2971
      %3008 = vst.msk [vmem:[#allocation2 + $0x73] sm:$0xff] %vm1602, %v2972
      %3009 = vst.msk [vmem:[#allocation2 + $0x7b] sm:$0xff] %vm1602, %v2973
      %3010 = vst.msk [vmem:[#allocation2 + $0x83] sm:$0xff] %vm1602, %v2974
      %3011 = vst.msk [vmem:[#allocation2 + $0x8b] sm:$0xff] %vm1602, %v2975
      %3012 = vst.msk [vmem:[#allocation2 + $0x93] sm:$0xff] %vm1602, %v2976
      %3013 = vst.msk [vmem:[#allocation2 + $0x9b] sm:$0xff] %vm1602, %v2977
      %3014 = vst.msk [vmem:[#allocation2 + $0xa3] sm:$0xff] %vm1602, %v2978
      %3015 = vst.msk [vmem:[#allocation2 + $0xab] sm:$0xff] %vm1602, %v2979
      %3016 = vst.msk [vmem:[#allocation2 + $0xb3] sm:$0xff] %vm1602, %v2980
      %3017 = vst.msk [vmem:[#allocation2 + $0xbb] sm:$0xff] %vm1602, %v2981
      %3018 = vst.msk [vmem:[#allocation2 + $0xc3] sm:$0xff] %vm1602, %v2982
      %3019 = vst.msk [vmem:[#allocation2 + $0xcb] sm:$0xff] %vm1602, %v2983
      %3020 = vst.msk [vmem:[#allocation2 + $0xd3] sm:$0xff] %vm1602, %v2984
      %3021 = vst.msk [vmem:[#allocation2 + $0xdb] sm:$0xff] %vm1602, %v2985
      %3022 = vst.msk [vmem:[#allocation2 + $0xe3] sm:$0xff] %vm1602, %v2986
      %3023 = vst.msk [vmem:[#allocation2 + $0xeb] sm:$0xff] %vm1602, %v2987
      %3024 = vst.msk [vmem:[#allocation2 + $0xf3] sm:$0xff] %vm1602, %v2988
      %3025 = vst.msk [vmem:[#allocation2 + $0xfb] sm:$0xff] %vm1602, %v2989
      %3026 = vst.msk [vmem:[#allocation2 + $0x103] sm:$0xff] %vm1602, %v2990
      %3027 = vst.msk [vmem:[#allocation2 + $0x10b] sm:$0xff] %vm1602, %v2991
      %3028 = vst.msk [vmem:[#allocation2 + $0x113] sm:$0xff] %vm1602, %v2992
      %3029 = vst.msk [vmem:[#allocation2 + $0x11b] sm:$0xff] %vm1602, %v2993
      %3030 = vst.msk [vmem:[#allocation2 + $0x123] sm:$0xff] %vm1602, %v2994
      %3031 = vst.msk [vmem:[#allocation2 + $0x12b] sm:$0xff] %vm1602, %v2995
      %v3032 = vld [vmem:[#allocation2] sm:$0xff]
      %v3033 = vld [vmem:[#allocation2 + $0x8] sm:$0xff]
      %v3034 = vld [vmem:[#allocation2 + $0x10] sm:$0xff]
      %v3035 = vld [vmem:[#allocation2 + $0x18] sm:$0xff]
      %v3036 = vld [vmem:[#allocation2 + $0x20] sm:$0xff]
      %v3037 = vld [vmem:[#allocation2 + $0x28] sm:$0xff]
      %v3038 = vld [vmem:[#allocation2 + $0x30] sm:$0xff]
      %v3039 = vld [vmem:[#allocation2 + $0x38] sm:$0xff]
      %v3040 = vld [vmem:[#allocation2 + $0x40] sm:$0xff]
      %v3041 = vld [vmem:[#allocation2 + $0x48] sm:$0xff]
      %v3042 = vld [vmem:[#allocation2 + $0x50] sm:$0xff]
      %v3043 = vld [vmem:[#allocation2 + $0x58] sm:$0xff]
      %v3044 = vld [vmem:[#allocation2 + $0x60] sm:$0xff]
      %v3045 = vld [vmem:[#allocation2 + $0x68] sm:$0xff]
      %v3046 = vld [vmem:[#allocation2 + $0x70] sm:$0xff]
      %v3047 = vld [vmem:[#allocation2 + $0x78] sm:$0xff]
      %v3048 = vld [vmem:[#allocation2 + $0x80] sm:$0xff]
      %v3049 = vld [vmem:[#allocation2 + $0x88] sm:$0xff]
      %v3050 = vld [vmem:[#allocation2 + $0x90] sm:$0xff]
      %v3051 = vld [vmem:[#allocation2 + $0x98] sm:$0xff]
      %v3052 = vld [vmem:[#allocation2 + $0xa0] sm:$0xff]
      %v3053 = vld [vmem:[#allocation2 + $0xa8] sm:$0xff]
      %v3054 = vld [vmem:[#allocation2 + $0xb0] sm:$0xff]
      %v3055 = vld [vmem:[#allocation2 + $0xb8] sm:$0xff]
      %v3056 = vld [vmem:[#allocation2 + $0xc0] sm:$0xff]
      %v3057 = vld [vmem:[#allocation2 + $0xc8] sm:$0xff]
      %v3058 = vld [vmem:[#allocation2 + $0xd0] sm:$0xff]
      %v3059 = vld [vmem:[#allocation2 + $0xd8] sm:$0xff]
      %v3060 = vld [vmem:[#allocation2 + $0xe0] sm:$0xff]
      %v3061 = vld [vmem:[#allocation2 + $0xe8] sm:$0xff]
      %v3062 = vld [vmem:[#allocation2 + $0xf0] sm:$0xff]
      %v3063 = vld [vmem:[#allocation2 + $0xf8] sm:$0xff]
      %v3064 = vld [vmem:[#allocation2 + $0x100] sm:$0xff]
      %v3065 = vld [vmem:[#allocation2 + $0x108] sm:$0xff]
      %v3066 = vld [vmem:[#allocation2 + $0x110] sm:$0xff]
      %v3067 = vld [vmem:[#allocation2 + $0x118] sm:$0xff]
      %v3068 = vld [vmem:[#allocation2 + $0x1] sm:$0xff]
      %v3069 = vld [vmem:[#allocation2 + $0x9] sm:$0xff]
      %v3070 = vld [vmem:[#allocation2 + $0x11] sm:$0xff]
      %v3071 = vld [vmem:[#allocation2 + $0x19] sm:$0xff]
      %v3072 = vld [vmem:[#allocation2 + $0x21] sm:$0xff]
      %v3073 = vld [vmem:[#allocation2 + $0x29] sm:$0xff]
      %v3074 = vld [vmem:[#allocation2 + $0x31] sm:$0xff]
      %v3075 = vld [vmem:[#allocation2 + $0x39] sm:$0xff]
      %v3076 = vld [vmem:[#allocation2 + $0x41] sm:$0xff]
      %v3077 = vld [vmem:[#allocation2 + $0x49] sm:$0xff]
      %v3078 = vld [vmem:[#allocation2 + $0x51] sm:$0xff]
      %v3079 = vld [vmem:[#allocation2 + $0x59] sm:$0xff]
      %v3080 = vld [vmem:[#allocation2 + $0x61] sm:$0xff]
      %v3081 = vld [vmem:[#allocation2 + $0x69] sm:$0xff]
      %v3082 = vld [vmem:[#allocation2 + $0x71] sm:$0xff]
      %v3083 = vld [vmem:[#allocation2 + $0x79] sm:$0xff]
      %v3084 = vld [vmem:[#allocation2 + $0x81] sm:$0xff]
      %v3085 = vld [vmem:[#allocation2 + $0x89] sm:$0xff]
      %v3086 = vld [vmem:[#allocation2 + $0x91] sm:$0xff]
      %v3087 = vld [vmem:[#allocation2 + $0x99] sm:$0xff]
      %v3088 = vld [vmem:[#allocation2 + $0xa1] sm:$0xff]
      %v3089 = vld [vmem:[#allocation2 + $0xa9] sm:$0xff]
      %v3090 = vld [vmem:[#allocation2 + $0xb1] sm:$0xff]
      %v3091 = vld [vmem:[#allocation2 + $0xb9] sm:$0xff]
      %v3092 = vld [vmem:[#allocation2 + $0xc1] sm:$0xff]
      %v3093 = vld [vmem:[#allocation2 + $0xc9] sm:$0xff]
      %v3094 = vld [vmem:[#allocation2 + $0xd1] sm:$0xff]
      %v3095 = vld [vmem:[#allocation2 + $0xd9] sm:$0xff]
      %v3096 = vld [vmem:[#allocation2 + $0xe1] sm:$0xff]
      %v3097 = vld [vmem:[#allocation2 + $0xe9] sm:$0xff]
      %v3098 = vld [vmem:[#allocation2 + $0xf1] sm:$0xff]
      %v3099 = vld [vmem:[#allocation2 + $0xf9] sm:$0xff]
      %v3100 = vld [vmem:[#allocation2 + $0x101] sm:$0xff]
      %v3101 = vld [vmem:[#allocation2 + $0x109] sm:$0xff]
      %v3102 = vld [vmem:[#allocation2 + $0x111] sm:$0xff]
      %v3103 = vld [vmem:[#allocation2 + $0x119] sm:$0xff]
      %v3104 = vld [vmem:[#allocation2 + $0x2] sm:$0xff]
      %v3105 = vld [vmem:[#allocation2 + $0xa] sm:$0xff]
      %v3106 = vld [vmem:[#allocation2 + $0x12] sm:$0xff]
      %v3107 = vld [vmem:[#allocation2 + $0x1a] sm:$0xff]
      %v3108 = vld [vmem:[#allocation2 + $0x22] sm:$0xff]
      %v3109 = vld [vmem:[#allocation2 + $0x2a] sm:$0xff]
      %v3110 = vld [vmem:[#allocation2 + $0x32] sm:$0xff]
      %v3111 = vld [vmem:[#allocation2 + $0x3a] sm:$0xff]
      %v3112 = vld [vmem:[#allocation2 + $0x42] sm:$0xff]
      %v3113 = vld [vmem:[#allocation2 + $0x4a] sm:$0xff]
      %v3114 = vld [vmem:[#allocation2 + $0x52] sm:$0xff]
      %v3115 = vld [vmem:[#allocation2 + $0x5a] sm:$0xff]
      %v3116 = vld [vmem:[#allocation2 + $0x62] sm:$0xff]
      %v3117 = vld [vmem:[#allocation2 + $0x6a] sm:$0xff]
      %v3118 = vld [vmem:[#allocation2 + $0x72] sm:$0xff]
      %v3119 = vld [vmem:[#allocation2 + $0x7a] sm:$0xff]
      %v3120 = vld [vmem:[#allocation2 + $0x82] sm:$0xff]
      %v3121 = vld [vmem:[#allocation2 + $0x8a] sm:$0xff]
      %v3122 = vld [vmem:[#allocation2 + $0x92] sm:$0xff]
      %v3123 = vld [vmem:[#allocation2 + $0x9a] sm:$0xff]
      %v3124 = vld [vmem:[#allocation2 + $0xa2] sm:$0xff]
      %v3125 = vld [vmem:[#allocation2 + $0xaa] sm:$0xff]
      %v3126 = vld [vmem:[#allocation2 + $0xb2] sm:$0xff]
      %v3127 = vld [vmem:[#allocation2 + $0xba] sm:$0xff]
      %v3128 = vld [vmem:[#allocation2 + $0xc2] sm:$0xff]
      %v3129 = vld [vmem:[#allocation2 + $0xca] sm:$0xff]
      %v3130 = vld [vmem:[#allocation2 + $0xd2] sm:$0xff]
      %v3131 = vld [vmem:[#allocation2 + $0xda] sm:$0xff]
      %v3132 = vld [vmem:[#allocation2 + $0xe2] sm:$0xff]
      %v3133 = vld [vmem:[#allocation2 + $0xea] sm:$0xff]
      %v3134 = vld [vmem:[#allocation2 + $0xf2] sm:$0xff]
      %v3135 = vld [vmem:[#allocation2 + $0xfa] sm:$0xff]
      %v3136 = vld [vmem:[#allocation2 + $0x102] sm:$0xff]
      %v3137 = vld [vmem:[#allocation2 + $0x10a] sm:$0xff]
      %v3138 = vld [vmem:[#allocation2 + $0x112] sm:$0xff]
      %v3139 = vld [vmem:[#allocation2 + $0x11a] sm:$0xff]
      %v3140 = vld [vmem:[#allocation2 + $0x122] sm:$0xff]
      %v3141 = vld [vmem:[#allocation2 + $0x12a] sm:$0xff]
      %v3142 = vld [vmem:[#allocation2 + $0x13] sm:$0xff]
      %v3143 = vld [vmem:[#allocation2 + $0x1b] sm:$0xff]
      %v3144 = vld [vmem:[#allocation2 + $0x23] sm:$0xff]
      %v3145 = vld [vmem:[#allocation2 + $0x2b] sm:$0xff]
      %v3146 = vld [vmem:[#allocation2 + $0x33] sm:$0xff]
      %v3147 = vld [vmem:[#allocation2 + $0x3b] sm:$0xff]
      %v3148 = vld [vmem:[#allocation2 + $0x43] sm:$0xff]
      %v3149 = vld [vmem:[#allocation2 + $0x4b] sm:$0xff]
      %v3150 = vld [vmem:[#allocation2 + $0x53] sm:$0xff]
      %v3151 = vld [vmem:[#allocation2 + $0x5b] sm:$0xff]
      %v3152 = vld [vmem:[#allocation2 + $0x63] sm:$0xff]
      %v3153 = vld [vmem:[#allocation2 + $0x6b] sm:$0xff]
      %v3154 = vld [vmem:[#allocation2 + $0x73] sm:$0xff]
      %v3155 = vld [vmem:[#allocation2 + $0x7b] sm:$0xff]
      %v3156 = vld [vmem:[#allocation2 + $0x83] sm:$0xff]
      %v3157 = vld [vmem:[#allocation2 + $0x8b] sm:$0xff]
      %v3158 = vld [vmem:[#allocation2 + $0x93] sm:$0xff]
      %v3159 = vld [vmem:[#allocation2 + $0x9b] sm:$0xff]
      %v3160 = vld [vmem:[#allocation2 + $0xa3] sm:$0xff]
      %v3161 = vld [vmem:[#allocation2 + $0xab] sm:$0xff]
      %v3162 = vld [vmem:[#allocation2 + $0xb3] sm:$0xff]
      %v3163 = vld [vmem:[#allocation2 + $0xbb] sm:$0xff]
      %v3164 = vld [vmem:[#allocation2 + $0xc3] sm:$0xff]
      %v3165 = vld [vmem:[#allocation2 + $0xcb] sm:$0xff]
      %v3166 = vld [vmem:[#allocation2 + $0xd3] sm:$0xff]
      %v3167 = vld [vmem:[#allocation2 + $0xdb] sm:$0xff]
      %v3168 = vld [vmem:[#allocation2 + $0xe3] sm:$0xff]
      %v3169 = vld [vmem:[#allocation2 + $0xeb] sm:$0xff]
      %v3170 = vld [vmem:[#allocation2 + $0xf3] sm:$0xff]
      %v3171 = vld [vmem:[#allocation2 + $0xfb] sm:$0xff]
      %v3172 = vld [vmem:[#allocation2 + $0x103] sm:$0xff]
      %v3173 = vld [vmem:[#allocation2 + $0x10b] sm:$0xff]
      %v3174 = vld [vmem:[#allocation2 + $0x113] sm:$0xff]
      %v3175 = vld [vmem:[#allocation2 + $0x11b] sm:$0xff]
      %v3176 = vld [vmem:[#allocation2 + $0x123] sm:$0xff]
      %v3177 = vld [vmem:[#allocation2 + $0x12b] sm:$0xff]
      %v3178 = vld [vmem:[#allocation2 + $0x14] sm:$0xff]
      %v3179 = vld [vmem:[#allocation2 + $0x1c] sm:$0xff]
      %v3180 = vld [vmem:[#allocation2 + $0x24] sm:$0xff]
      %v3181 = vld [vmem:[#allocation2 + $0x2c] sm:$0xff]
      %v3182 = vld [vmem:[#allocation2 + $0x34] sm:$0xff]
      %v3183 = vld [vmem:[#allocation2 + $0x3c] sm:$0xff]
      %v3184 = vld [vmem:[#allocation2 + $0x44] sm:$0xff]
      %v3185 = vld [vmem:[#allocation2 + $0x4c] sm:$0xff]
      %v3186 = vld [vmem:[#allocation2 + $0x54] sm:$0xff]
      %v3187 = vld [vmem:[#allocation2 + $0x5c] sm:$0xff]
      %v3188 = vld [vmem:[#allocation2 + $0x64] sm:$0xff]
      %v3189 = vld [vmem:[#allocation2 + $0x6c] sm:$0xff]
      %v3190 = vld [vmem:[#allocation2 + $0x74] sm:$0xff]
      %v3191 = vld [vmem:[#allocation2 + $0x7c] sm:$0xff]
      %v3192 = vld [vmem:[#allocation2 + $0x84] sm:$0xff]
      %v3193 = vld [vmem:[#allocation2 + $0x8c] sm:$0xff]
      %v3194 = vld [vmem:[#allocation2 + $0x94] sm:$0xff]
      %v3195 = vld [vmem:[#allocation2 + $0x9c] sm:$0xff]
      %v3196 = vld [vmem:[#allocation2 + $0xa4] sm:$0xff]
      %v3197 = vld [vmem:[#allocation2 + $0xac] sm:$0xff]
      %v3198 = vld [vmem:[#allocation2 + $0xb4] sm:$0xff]
      %v3199 = vld [vmem:[#allocation2 + $0xbc] sm:$0xff]
      %v3200 = vld [vmem:[#allocation2 + $0xc4] sm:$0xff]
      %v3201 = vld [vmem:[#allocation2 + $0xcc] sm:$0xff]
      %v3202 = vld [vmem:[#allocation2 + $0xd4] sm:$0xff]
      %v3203 = vld [vmem:[#allocation2 + $0xdc] sm:$0xff]
      %v3204 = vld [vmem:[#allocation2 + $0xe4] sm:$0xff]
      %v3205 = vld [vmem:[#allocation2 + $0xec] sm:$0xff]
      %v3206 = vld [vmem:[#allocation2 + $0xf4] sm:$0xff]
      %v3207 = vld [vmem:[#allocation2 + $0xfc] sm:$0xff]
      %v3208 = vld [vmem:[#allocation2 + $0x104] sm:$0xff]
      %v3209 = vld [vmem:[#allocation2 + $0x10c] sm:$0xff]
      %v3210 = vld [vmem:[#allocation2 + $0x114] sm:$0xff]
      %v3211 = vld [vmem:[#allocation2 + $0x11c] sm:$0xff]
      %v3212 = vld [vmem:[#allocation2 + $0x124] sm:$0xff]
      %v3213 = vld [vmem:[#allocation2 + $0x12c] sm:$0xff]
      %v3214 = vld [vmem:[#allocation2 + $0x134] sm:$0xff]
      %v3215 = vld [vmem:[#allocation2 + $0x13c] sm:$0xff]
      %v3216 = vld [vmem:[#allocation2 + $0x25] sm:$0xff]
      %v3217 = vld [vmem:[#allocation2 + $0x2d] sm:$0xff]
      %v3218 = vld [vmem:[#allocation2 + $0x35] sm:$0xff]
      %v3219 = vld [vmem:[#allocation2 + $0x3d] sm:$0xff]
      %v3220 = vld [vmem:[#allocation2 + $0x45] sm:$0xff]
      %v3221 = vld [vmem:[#allocation2 + $0x4d] sm:$0xff]
      %v3222 = vld [vmem:[#allocation2 + $0x55] sm:$0xff]
      %v3223 = vld [vmem:[#allocation2 + $0x5d] sm:$0xff]
      %v3224 = vld [vmem:[#allocation2 + $0x65] sm:$0xff]
      %v3225 = vld [vmem:[#allocation2 + $0x6d] sm:$0xff]
      %v3226 = vld [vmem:[#allocation2 + $0x75] sm:$0xff]
      %v3227 = vld [vmem:[#allocation2 + $0x7d] sm:$0xff]
      %v3228 = vld [vmem:[#allocation2 + $0x85] sm:$0xff]
      %v3229 = vld [vmem:[#allocation2 + $0x8d] sm:$0xff]
      %v3230 = vld [vmem:[#allocation2 + $0x95] sm:$0xff]
      %v3231 = vld [vmem:[#allocation2 + $0x9d] sm:$0xff]
      %v3232 = vld [vmem:[#allocation2 + $0xa5] sm:$0xff]
      %v3233 = vld [vmem:[#allocation2 + $0xad] sm:$0xff]
      %v3234 = vld [vmem:[#allocation2 + $0xb5] sm:$0xff]
      %v3235 = vld [vmem:[#allocation2 + $0xbd] sm:$0xff]
      %v3236 = vld [vmem:[#allocation2 + $0xc5] sm:$0xff]
      %v3237 = vld [vmem:[#allocation2 + $0xcd] sm:$0xff]
      %v3238 = vld [vmem:[#allocation2 + $0xd5] sm:$0xff]
      %v3239 = vld [vmem:[#allocation2 + $0xdd] sm:$0xff]
      %v3240 = vld [vmem:[#allocation2 + $0xe5] sm:$0xff]
      %v3241 = vld [vmem:[#allocation2 + $0xed] sm:$0xff]
      %v3242 = vld [vmem:[#allocation2 + $0xf5] sm:$0xff]
      %v3243 = vld [vmem:[#allocation2 + $0xfd] sm:$0xff]
      %v3244 = vld [vmem:[#allocation2 + $0x105] sm:$0xff]
      %v3245 = vld [vmem:[#allocation2 + $0x10d] sm:$0xff]
      %v3246 = vld [vmem:[#allocation2 + $0x115] sm:$0xff]
      %v3247 = vld [vmem:[#allocation2 + $0x11d] sm:$0xff]
      %v3248 = vld [vmem:[#allocation2 + $0x125] sm:$0xff]
      %v3249 = vld [vmem:[#allocation2 + $0x12d] sm:$0xff]
      %v3250 = vld [vmem:[#allocation2 + $0x135] sm:$0xff]
      %v3251 = vld [vmem:[#allocation2 + $0x13d] sm:$0xff]
      %v3252 = vld [vmem:[#allocation2 + $0x26] sm:$0xff]
      %v3253 = vld [vmem:[#allocation2 + $0x2e] sm:$0xff]
      %v3254 = vld [vmem:[#allocation2 + $0x36] sm:$0xff]
      %v3255 = vld [vmem:[#allocation2 + $0x3e] sm:$0xff]
      %v3256 = vld [vmem:[#allocation2 + $0x46] sm:$0xff]
      %v3257 = vld [vmem:[#allocation2 + $0x4e] sm:$0xff]
      %v3258 = vld [vmem:[#allocation2 + $0x56] sm:$0xff]
      %v3259 = vld [vmem:[#allocation2 + $0x5e] sm:$0xff]
      %v3260 = vld [vmem:[#allocation2 + $0x66] sm:$0xff]
      %v3261 = vld [vmem:[#allocation2 + $0x6e] sm:$0xff]
      %v3262 = vld [vmem:[#allocation2 + $0x76] sm:$0xff]
      %v3263 = vld [vmem:[#allocation2 + $0x7e] sm:$0xff]
      %v3264 = vld [vmem:[#allocation2 + $0x86] sm:$0xff]
      %v3265 = vld [vmem:[#allocation2 + $0x8e] sm:$0xff]
      %v3266 = vld [vmem:[#allocation2 + $0x96] sm:$0xff]
      %v3267 = vld [vmem:[#allocation2 + $0x9e] sm:$0xff]
      %v3268 = vld [vmem:[#allocation2 + $0xa6] sm:$0xff]
      %v3269 = vld [vmem:[#allocation2 + $0xae] sm:$0xff]
      %v3270 = vld [vmem:[#allocation2 + $0xb6] sm:$0xff]
      %v3271 = vld [vmem:[#allocation2 + $0xbe] sm:$0xff]
      %v3272 = vld [vmem:[#allocation2 + $0xc6] sm:$0xff]
      %v3273 = vld [vmem:[#allocation2 + $0xce] sm:$0xff]
      %v3274 = vld [vmem:[#allocation2 + $0xd6] sm:$0xff]
      %v3275 = vld [vmem:[#allocation2 + $0xde] sm:$0xff]
      %v3276 = vld [vmem:[#allocation2 + $0xe6] sm:$0xff]
      %v3277 = vld [vmem:[#allocation2 + $0xee] sm:$0xff]
      %v3278 = vld [vmem:[#allocation2 + $0xf6] sm:$0xff]
      %v3279 = vld [vmem:[#allocation2 + $0xfe] sm:$0xff]
      %v3280 = vld [vmem:[#allocation2 + $0x106] sm:$0xff]
      %v3281 = vld [vmem:[#allocation2 + $0x10e] sm:$0xff]
      %v3282 = vld [vmem:[#allocation2 + $0x116] sm:$0xff]
      %v3283 = vld [vmem:[#allocation2 + $0x11e] sm:$0xff]
      %v3284 = vld [vmem:[#allocation2 + $0x126] sm:$0xff]
      %v3285 = vld [vmem:[#allocation2 + $0x12e] sm:$0xff]
      %v3286 = vld [vmem:[#allocation2 + $0x136] sm:$0xff]
      %v3287 = vld [vmem:[#allocation2 + $0x13e] sm:$0xff]
      %3324 = vrot.lane.b32.xlu0 %v3068, 8
      %v3325 = vpop.permute.xlu0 %3324
      %3326 = vrot.lane.b32.xlu0 %v3069, 8
      %v3327 = vpop.permute.xlu0 %3326
      %3328 = vrot.lane.b32.xlu0 %v3070, 8
      %v3329 = vpop.permute.xlu0 %3328
      %3330 = vrot.lane.b32.xlu0 %v3071, 8
      %v3331 = vpop.permute.xlu0 %3330
      %3332 = vrot.lane.b32.xlu0 %v3072, 8
      %v3333 = vpop.permute.xlu0 %3332
      %3334 = vrot.lane.b32.xlu0 %v3073, 8
      %v3335 = vpop.permute.xlu0 %3334
      %3336 = vrot.lane.b32.xlu0 %v3074, 8
      %v3337 = vpop.permute.xlu0 %3336
      %3338 = vrot.lane.b32.xlu0 %v3075, 8
      %v3339 = vpop.permute.xlu0 %3338
      %3340 = vrot.lane.b32.xlu0 %v3076, 8
      %v3341 = vpop.permute.xlu0 %3340
      %3342 = vrot.lane.b32.xlu0 %v3077, 8
      %v3343 = vpop.permute.xlu0 %3342
      %3344 = vrot.lane.b32.xlu0 %v3078, 8
      %v3345 = vpop.permute.xlu0 %3344
      %3346 = vrot.lane.b32.xlu0 %v3079, 8
      %v3347 = vpop.permute.xlu0 %3346
      %3348 = vrot.lane.b32.xlu0 %v3080, 8
      %v3349 = vpop.permute.xlu0 %3348
      %3350 = vrot.lane.b32.xlu0 %v3081, 8
      %v3351 = vpop.permute.xlu0 %3350
      %3352 = vrot.lane.b32.xlu0 %v3082, 8
      %v3353 = vpop.permute.xlu0 %3352
      %3354 = vrot.lane.b32.xlu0 %v3083, 8
      %v3355 = vpop.permute.xlu0 %3354
      %3356 = vrot.lane.b32.xlu0 %v3084, 8
      %v3357 = vpop.permute.xlu0 %3356
      %3358 = vrot.lane.b32.xlu0 %v3085, 8
      %v3359 = vpop.permute.xlu0 %3358
      %3360 = vrot.lane.b32.xlu0 %v3086, 8
      %v3361 = vpop.permute.xlu0 %3360
      %3362 = vrot.lane.b32.xlu0 %v3087, 8
      %v3363 = vpop.permute.xlu0 %3362
      %3364 = vrot.lane.b32.xlu0 %v3088, 8
      %v3365 = vpop.permute.xlu0 %3364
      %3366 = vrot.lane.b32.xlu0 %v3089, 8
      %v3367 = vpop.permute.xlu0 %3366
      %3368 = vrot.lane.b32.xlu0 %v3090, 8
      %v3369 = vpop.permute.xlu0 %3368
      %3370 = vrot.lane.b32.xlu0 %v3091, 8
      %v3371 = vpop.permute.xlu0 %3370
      %3372 = vrot.lane.b32.xlu0 %v3092, 8
      %v3373 = vpop.permute.xlu0 %3372
      %3374 = vrot.lane.b32.xlu0 %v3093, 8
      %v3375 = vpop.permute.xlu0 %3374
      %3376 = vrot.lane.b32.xlu0 %v3094, 8
      %v3377 = vpop.permute.xlu0 %3376
      %3378 = vrot.lane.b32.xlu0 %v3095, 8
      %v3379 = vpop.permute.xlu0 %3378
      %3380 = vrot.lane.b32.xlu0 %v3096, 8
      %v3381 = vpop.permute.xlu0 %3380
      %3382 = vrot.lane.b32.xlu0 %v3097, 8
      %v3383 = vpop.permute.xlu0 %3382
      %3384 = vrot.lane.b32.xlu0 %v3098, 8
      %v3385 = vpop.permute.xlu0 %3384
      %3386 = vrot.lane.b32.xlu0 %v3099, 8
      %v3387 = vpop.permute.xlu0 %3386
      %3388 = vrot.lane.b32.xlu0 %v3100, 8
      %v3389 = vpop.permute.xlu0 %3388
      %3390 = vrot.lane.b32.xlu0 %v3101, 8
      %v3391 = vpop.permute.xlu0 %3390
      %3392 = vrot.lane.b32.xlu0 %v3102, 8
      %v3393 = vpop.permute.xlu0 %3392
      %3394 = vrot.lane.b32.xlu0 %v3103, 8
      %v3395 = vpop.permute.xlu0 %3394
      %3468 = vrot.lane.b32.xlu0 %v3104, 16
      %v3469 = vpop.permute.xlu0 %3468
      %3470 = vrot.lane.b32.xlu0 %v3105, 16
      %v3471 = vpop.permute.xlu0 %3470
      %3472 = vrot.lane.b32.xlu0 %v3106, 16
      %v3473 = vpop.permute.xlu0 %3472
      %3474 = vrot.lane.b32.xlu0 %v3107, 16
      %v3475 = vpop.permute.xlu0 %3474
      %3476 = vrot.lane.b32.xlu0 %v3108, 16
      %v3477 = vpop.permute.xlu0 %3476
      %3478 = vrot.lane.b32.xlu0 %v3109, 16
      %v3479 = vpop.permute.xlu0 %3478
      %3480 = vrot.lane.b32.xlu0 %v3110, 16
      %v3481 = vpop.permute.xlu0 %3480
      %3482 = vrot.lane.b32.xlu0 %v3111, 16
      %v3483 = vpop.permute.xlu0 %3482
      %3484 = vrot.lane.b32.xlu0 %v3112, 16
      %v3485 = vpop.permute.xlu0 %3484
      %3486 = vrot.lane.b32.xlu0 %v3113, 16
      %v3487 = vpop.permute.xlu0 %3486
      %3488 = vrot.lane.b32.xlu0 %v3114, 16
      %v3489 = vpop.permute.xlu0 %3488
      %3490 = vrot.lane.b32.xlu0 %v3115, 16
      %v3491 = vpop.permute.xlu0 %3490
      %3492 = vrot.lane.b32.xlu0 %v3116, 16
      %v3493 = vpop.permute.xlu0 %3492
      %3494 = vrot.lane.b32.xlu0 %v3117, 16
      %v3495 = vpop.permute.xlu0 %3494
      %3496 = vrot.lane.b32.xlu0 %v3118, 16
      %v3497 = vpop.permute.xlu0 %3496
      %3498 = vrot.lane.b32.xlu0 %v3119, 16
      %v3499 = vpop.permute.xlu0 %3498
      %3500 = vrot.lane.b32.xlu0 %v3120, 16
      %v3501 = vpop.permute.xlu0 %3500
      %3502 = vrot.lane.b32.xlu0 %v3121, 16
      %v3503 = vpop.permute.xlu0 %3502
      %3504 = vrot.lane.b32.xlu0 %v3122, 16
      %v3505 = vpop.permute.xlu0 %3504
      %3506 = vrot.lane.b32.xlu0 %v3123, 16
      %v3507 = vpop.permute.xlu0 %3506
      %3508 = vrot.lane.b32.xlu0 %v3124, 16
      %v3509 = vpop.permute.xlu0 %3508
      %3510 = vrot.lane.b32.xlu0 %v3125, 16
      %v3511 = vpop.permute.xlu0 %3510
      %3512 = vrot.lane.b32.xlu0 %v3126, 16
      %v3513 = vpop.permute.xlu0 %3512
      %3514 = vrot.lane.b32.xlu0 %v3127, 16
      %v3515 = vpop.permute.xlu0 %3514
      %3516 = vrot.lane.b32.xlu0 %v3128, 16
      %v3517 = vpop.permute.xlu0 %3516
      %3518 = vrot.lane.b32.xlu0 %v3129, 16
      %v3519 = vpop.permute.xlu0 %3518
      %3520 = vrot.lane.b32.xlu0 %v3130, 16
      %v3521 = vpop.permute.xlu0 %3520
      %3522 = vrot.lane.b32.xlu0 %v3131, 16
      %v3523 = vpop.permute.xlu0 %3522
      %3524 = vrot.lane.b32.xlu0 %v3132, 16
      %v3525 = vpop.permute.xlu0 %3524
      %3526 = vrot.lane.b32.xlu0 %v3133, 16
      %v3527 = vpop.permute.xlu0 %3526
      %3528 = vrot.lane.b32.xlu0 %v3134, 16
      %v3529 = vpop.permute.xlu0 %3528
      %3530 = vrot.lane.b32.xlu0 %v3135, 16
      %v3531 = vpop.permute.xlu0 %3530
      %3532 = vrot.lane.b32.xlu0 %v3136, 16
      %v3533 = vpop.permute.xlu0 %3532
      %3534 = vrot.lane.b32.xlu0 %v3137, 16
      %v3535 = vpop.permute.xlu0 %3534
      %3536 = vrot.lane.b32.xlu0 %v3138, 16
      %v3537 = vpop.permute.xlu0 %3536
      %3538 = vrot.lane.b32.xlu0 %v3139, 16
      %v3539 = vpop.permute.xlu0 %3538
      %3578 = vrot.lane.b32.xlu0 %v3106, 24
      %v3579 = vpop.permute.xlu0 %3578
      %3580 = vrot.lane.b32.xlu0 %v3107, 24
      %v3581 = vpop.permute.xlu0 %3580
      %3582 = vrot.lane.b32.xlu0 %v3108, 24
      %v3583 = vpop.permute.xlu0 %3582
      %3584 = vrot.lane.b32.xlu0 %v3109, 24
      %v3585 = vpop.permute.xlu0 %3584
      %3586 = vrot.lane.b32.xlu0 %v3110, 24
      %v3587 = vpop.permute.xlu0 %3586
      %3588 = vrot.lane.b32.xlu0 %v3111, 24
      %v3589 = vpop.permute.xlu0 %3588
      %3590 = vrot.lane.b32.xlu0 %v3112, 24
      %v3591 = vpop.permute.xlu0 %3590
      %3592 = vrot.lane.b32.xlu0 %v3113, 24
      %v3593 = vpop.permute.xlu0 %3592
      %3594 = vrot.lane.b32.xlu0 %v3114, 24
      %v3595 = vpop.permute.xlu0 %3594
      %3596 = vrot.lane.b32.xlu0 %v3115, 24
      %v3597 = vpop.permute.xlu0 %3596
      %3598 = vrot.lane.b32.xlu0 %v3116, 24
      %v3599 = vpop.permute.xlu0 %3598
      %3600 = vrot.lane.b32.xlu0 %v3117, 24
      %v3601 = vpop.permute.xlu0 %3600
      %3602 = vrot.lane.b32.xlu0 %v3118, 24
      %v3603 = vpop.permute.xlu0 %3602
      %3604 = vrot.lane.b32.xlu0 %v3119, 24
      %v3605 = vpop.permute.xlu0 %3604
      %3606 = vrot.lane.b32.xlu0 %v3120, 24
      %v3607 = vpop.permute.xlu0 %3606
      %3608 = vrot.lane.b32.xlu0 %v3121, 24
      %v3609 = vpop.permute.xlu0 %3608
      %3610 = vrot.lane.b32.xlu0 %v3122, 24
      %v3611 = vpop.permute.xlu0 %3610
      %3612 = vrot.lane.b32.xlu0 %v3123, 24
      %v3613 = vpop.permute.xlu0 %3612
      %3614 = vrot.lane.b32.xlu0 %v3124, 24
      %v3615 = vpop.permute.xlu0 %3614
      %3616 = vrot.lane.b32.xlu0 %v3125, 24
      %v3617 = vpop.permute.xlu0 %3616
      %3618 = vrot.lane.b32.xlu0 %v3126, 24
      %v3619 = vpop.permute.xlu0 %3618
      %3620 = vrot.lane.b32.xlu0 %v3127, 24
      %v3621 = vpop.permute.xlu0 %3620
      %3622 = vrot.lane.b32.xlu0 %v3128, 24
      %v3623 = vpop.permute.xlu0 %3622
      %3624 = vrot.lane.b32.xlu0 %v3129, 24
      %v3625 = vpop.permute.xlu0 %3624
      %3626 = vrot.lane.b32.xlu0 %v3130, 24
      %v3627 = vpop.permute.xlu0 %3626
      %3628 = vrot.lane.b32.xlu0 %v3131, 24
      %v3629 = vpop.permute.xlu0 %3628
      %3630 = vrot.lane.b32.xlu0 %v3132, 24
      %v3631 = vpop.permute.xlu0 %3630
      %3632 = vrot.lane.b32.xlu0 %v3133, 24
      %v3633 = vpop.permute.xlu0 %3632
      %3634 = vrot.lane.b32.xlu0 %v3134, 24
      %v3635 = vpop.permute.xlu0 %3634
      %3636 = vrot.lane.b32.xlu0 %v3135, 24
      %v3637 = vpop.permute.xlu0 %3636
      %3638 = vrot.lane.b32.xlu0 %v3136, 24
      %v3639 = vpop.permute.xlu0 %3638
      %3640 = vrot.lane.b32.xlu0 %v3137, 24
      %v3641 = vpop.permute.xlu0 %3640
      %3642 = vrot.lane.b32.xlu0 %v3138, 24
      %v3643 = vpop.permute.xlu0 %3642
      %3644 = vrot.lane.b32.xlu0 %v3139, 24
      %v3645 = vpop.permute.xlu0 %3644
      %3646 = vrot.lane.b32.xlu0 %v3140, 24
      %v3647 = vpop.permute.xlu0 %3646
      %3648 = vrot.lane.b32.xlu0 %v3141, 24
      %v3649 = vpop.permute.xlu0 %3648
      %3722 = vrot.lane.b32.xlu0 %v3142, 32
      %v3723 = vpop.permute.xlu0 %3722
      %3724 = vrot.lane.b32.xlu0 %v3143, 32
      %v3725 = vpop.permute.xlu0 %3724
      %3726 = vrot.lane.b32.xlu0 %v3144, 32
      %v3727 = vpop.permute.xlu0 %3726
      %3728 = vrot.lane.b32.xlu0 %v3145, 32
      %v3729 = vpop.permute.xlu0 %3728
      %3730 = vrot.lane.b32.xlu0 %v3146, 32
      %v3731 = vpop.permute.xlu0 %3730
      %3732 = vrot.lane.b32.xlu0 %v3147, 32
      %v3733 = vpop.permute.xlu0 %3732
      %3734 = vrot.lane.b32.xlu0 %v3148, 32
      %v3735 = vpop.permute.xlu0 %3734
      %3736 = vrot.lane.b32.xlu0 %v3149, 32
      %v3737 = vpop.permute.xlu0 %3736
      %3738 = vrot.lane.b32.xlu0 %v3150, 32
      %v3739 = vpop.permute.xlu0 %3738
      %3740 = vrot.lane.b32.xlu0 %v3151, 32
      %v3741 = vpop.permute.xlu0 %3740
      %3742 = vrot.lane.b32.xlu0 %v3152, 32
      %v3743 = vpop.permute.xlu0 %3742
      %3744 = vrot.lane.b32.xlu0 %v3153, 32
      %v3745 = vpop.permute.xlu0 %3744
      %3746 = vrot.lane.b32.xlu0 %v3154, 32
      %v3747 = vpop.permute.xlu0 %3746
      %3748 = vrot.lane.b32.xlu0 %v3155, 32
      %v3749 = vpop.permute.xlu0 %3748
      %3750 = vrot.lane.b32.xlu0 %v3156, 32
      %v3751 = vpop.permute.xlu0 %3750
      %3752 = vrot.lane.b32.xlu0 %v3157, 32
      %v3753 = vpop.permute.xlu0 %3752
      %3754 = vrot.lane.b32.xlu0 %v3158, 32
      %v3755 = vpop.permute.xlu0 %3754
      %3756 = vrot.lane.b32.xlu0 %v3159, 32
      %v3757 = vpop.permute.xlu0 %3756
      %3758 = vrot.lane.b32.xlu0 %v3160, 32
      %v3759 = vpop.permute.xlu0 %3758
      %3760 = vrot.lane.b32.xlu0 %v3161, 32
      %v3761 = vpop.permute.xlu0 %3760
      %3762 = vrot.lane.b32.xlu0 %v3162, 32
      %v3763 = vpop.permute.xlu0 %3762
      %3764 = vrot.lane.b32.xlu0 %v3163, 32
      %v3765 = vpop.permute.xlu0 %3764
      %3766 = vrot.lane.b32.xlu0 %v3164, 32
      %v3767 = vpop.permute.xlu0 %3766
      %3768 = vrot.lane.b32.xlu0 %v3165, 32
      %v3769 = vpop.permute.xlu0 %3768
      %3770 = vrot.lane.b32.xlu0 %v3166, 32
      %v3771 = vpop.permute.xlu0 %3770
      %3772 = vrot.lane.b32.xlu0 %v3167, 32
      %v3773 = vpop.permute.xlu0 %3772
      %3774 = vrot.lane.b32.xlu0 %v3168, 32
      %v3775 = vpop.permute.xlu0 %3774
      %3776 = vrot.lane.b32.xlu0 %v3169, 32
      %v3777 = vpop.permute.xlu0 %3776
      %3778 = vrot.lane.b32.xlu0 %v3170, 32
      %v3779 = vpop.permute.xlu0 %3778
      %3780 = vrot.lane.b32.xlu0 %v3171, 32
      %v3781 = vpop.permute.xlu0 %3780
      %3782 = vrot.lane.b32.xlu0 %v3172, 32
      %v3783 = vpop.permute.xlu0 %3782
      %3784 = vrot.lane.b32.xlu0 %v3173, 32
      %v3785 = vpop.permute.xlu0 %3784
      %3786 = vrot.lane.b32.xlu0 %v3174, 32
      %v3787 = vpop.permute.xlu0 %3786
      %3788 = vrot.lane.b32.xlu0 %v3175, 32
      %v3789 = vpop.permute.xlu0 %3788
      %3790 = vrot.lane.b32.xlu0 %v3176, 32
      %v3791 = vpop.permute.xlu0 %3790
      %3792 = vrot.lane.b32.xlu0 %v3177, 32
      %v3793 = vpop.permute.xlu0 %3792
      %3866 = vrot.lane.b32.xlu0 %v3178, 40
      %v3867 = vpop.permute.xlu0 %3866
      %3868 = vrot.lane.b32.xlu0 %v3179, 40
      %v3869 = vpop.permute.xlu0 %3868
      %3870 = vrot.lane.b32.xlu0 %v3180, 40
      %v3871 = vpop.permute.xlu0 %3870
      %3872 = vrot.lane.b32.xlu0 %v3181, 40
      %v3873 = vpop.permute.xlu0 %3872
      %3874 = vrot.lane.b32.xlu0 %v3182, 40
      %v3875 = vpop.permute.xlu0 %3874
      %3876 = vrot.lane.b32.xlu0 %v3183, 40
      %v3877 = vpop.permute.xlu0 %3876
      %3878 = vrot.lane.b32.xlu0 %v3184, 40
      %v3879 = vpop.permute.xlu0 %3878
      %3880 = vrot.lane.b32.xlu0 %v3185, 40
      %v3881 = vpop.permute.xlu0 %3880
      %3882 = vrot.lane.b32.xlu0 %v3186, 40
      %v3883 = vpop.permute.xlu0 %3882
      %3884 = vrot.lane.b32.xlu0 %v3187, 40
      %v3885 = vpop.permute.xlu0 %3884
      %3886 = vrot.lane.b32.xlu0 %v3188, 40
      %v3887 = vpop.permute.xlu0 %3886
      %3888 = vrot.lane.b32.xlu0 %v3189, 40
      %v3889 = vpop.permute.xlu0 %3888
      %3890 = vrot.lane.b32.xlu0 %v3190, 40
      %v3891 = vpop.permute.xlu0 %3890
      %3892 = vrot.lane.b32.xlu0 %v3191, 40
      %v3893 = vpop.permute.xlu0 %3892
      %3894 = vrot.lane.b32.xlu0 %v3192, 40
      %v3895 = vpop.permute.xlu0 %3894
      %3896 = vrot.lane.b32.xlu0 %v3193, 40
      %v3897 = vpop.permute.xlu0 %3896
      %3898 = vrot.lane.b32.xlu0 %v3194, 40
      %v3899 = vpop.permute.xlu0 %3898
      %3900 = vrot.lane.b32.xlu0 %v3195, 40
      %v3901 = vpop.permute.xlu0 %3900
      %3902 = vrot.lane.b32.xlu0 %v3196, 40
      %v3903 = vpop.permute.xlu0 %3902
      %3904 = vrot.lane.b32.xlu0 %v3197, 40
      %v3905 = vpop.permute.xlu0 %3904
      %3906 = vrot.lane.b32.xlu0 %v3198, 40
      %v3907 = vpop.permute.xlu0 %3906
      %3908 = vrot.lane.b32.xlu0 %v3199, 40
      %v3909 = vpop.permute.xlu0 %3908
      %3910 = vrot.lane.b32.xlu0 %v3200, 40
      %v3911 = vpop.permute.xlu0 %3910
      %3912 = vrot.lane.b32.xlu0 %v3201, 40
      %v3913 = vpop.permute.xlu0 %3912
      %3914 = vrot.lane.b32.xlu0 %v3202, 40
      %v3915 = vpop.permute.xlu0 %3914
      %3916 = vrot.lane.b32.xlu0 %v3203, 40
      %v3917 = vpop.permute.xlu0 %3916
      %3918 = vrot.lane.b32.xlu0 %v3204, 40
      %v3919 = vpop.permute.xlu0 %3918
      %3920 = vrot.lane.b32.xlu0 %v3205, 40
      %v3921 = vpop.permute.xlu0 %3920
      %3922 = vrot.lane.b32.xlu0 %v3206, 40
      %v3923 = vpop.permute.xlu0 %3922
      %3924 = vrot.lane.b32.xlu0 %v3207, 40
      %v3925 = vpop.permute.xlu0 %3924
      %3926 = vrot.lane.b32.xlu0 %v3208, 40
      %v3927 = vpop.permute.xlu0 %3926
      %3928 = vrot.lane.b32.xlu0 %v3209, 40
      %v3929 = vpop.permute.xlu0 %3928
      %3930 = vrot.lane.b32.xlu0 %v3210, 40
      %v3931 = vpop.permute.xlu0 %3930
      %3932 = vrot.lane.b32.xlu0 %v3211, 40
      %v3933 = vpop.permute.xlu0 %3932
      %3934 = vrot.lane.b32.xlu0 %v3212, 40
      %v3935 = vpop.permute.xlu0 %3934
      %3936 = vrot.lane.b32.xlu0 %v3213, 40
      %v3937 = vpop.permute.xlu0 %3936
      %3976 = vrot.lane.b32.xlu0 %v3180, 48
      %v3977 = vpop.permute.xlu0 %3976
      %3978 = vrot.lane.b32.xlu0 %v3181, 48
      %v3979 = vpop.permute.xlu0 %3978
      %3980 = vrot.lane.b32.xlu0 %v3182, 48
      %v3981 = vpop.permute.xlu0 %3980
      %3982 = vrot.lane.b32.xlu0 %v3183, 48
      %v3983 = vpop.permute.xlu0 %3982
      %3984 = vrot.lane.b32.xlu0 %v3184, 48
      %v3985 = vpop.permute.xlu0 %3984
      %3986 = vrot.lane.b32.xlu0 %v3185, 48
      %v3987 = vpop.permute.xlu0 %3986
      %3988 = vrot.lane.b32.xlu0 %v3186, 48
      %v3989 = vpop.permute.xlu0 %3988
      %3990 = vrot.lane.b32.xlu0 %v3187, 48
      %v3991 = vpop.permute.xlu0 %3990
      %3992 = vrot.lane.b32.xlu0 %v3188, 48
      %v3993 = vpop.permute.xlu0 %3992
      %3994 = vrot.lane.b32.xlu0 %v3189, 48
      %v3995 = vpop.permute.xlu0 %3994
      %3996 = vrot.lane.b32.xlu0 %v3190, 48
      %v3997 = vpop.permute.xlu0 %3996
      %3998 = vrot.lane.b32.xlu0 %v3191, 48
      %v3999 = vpop.permute.xlu0 %3998
      %4000 = vrot.lane.b32.xlu0 %v3192, 48
      %v4001 = vpop.permute.xlu0 %4000
      %4002 = vrot.lane.b32.xlu0 %v3193, 48
      %v4003 = vpop.permute.xlu0 %4002
      %4004 = vrot.lane.b32.xlu0 %v3194, 48
      %v4005 = vpop.permute.xlu0 %4004
      %4006 = vrot.lane.b32.xlu0 %v3195, 48
      %v4007 = vpop.permute.xlu0 %4006
      %4008 = vrot.lane.b32.xlu0 %v3196, 48
      %v4009 = vpop.permute.xlu0 %4008
      %4010 = vrot.lane.b32.xlu0 %v3197, 48
      %v4011 = vpop.permute.xlu0 %4010
      %4012 = vrot.lane.b32.xlu0 %v3198, 48
      %v4013 = vpop.permute.xlu0 %4012
      %4014 = vrot.lane.b32.xlu0 %v3199, 48
      %v4015 = vpop.permute.xlu0 %4014
      %4016 = vrot.lane.b32.xlu0 %v3200, 48
      %v4017 = vpop.permute.xlu0 %4016
      %4018 = vrot.lane.b32.xlu0 %v3201, 48
      %v4019 = vpop.permute.xlu0 %4018
      %4020 = vrot.lane.b32.xlu0 %v3202, 48
      %v4021 = vpop.permute.xlu0 %4020
      %4022 = vrot.lane.b32.xlu0 %v3203, 48
      %v4023 = vpop.permute.xlu0 %4022
      %4024 = vrot.lane.b32.xlu0 %v3204, 48
      %v4025 = vpop.permute.xlu0 %4024
      %4026 = vrot.lane.b32.xlu0 %v3205, 48
      %v4027 = vpop.permute.xlu0 %4026
      %4028 = vrot.lane.b32.xlu0 %v3206, 48
      %v4029 = vpop.permute.xlu0 %4028
      %4030 = vrot.lane.b32.xlu0 %v3207, 48
      %v4031 = vpop.permute.xlu0 %4030
      %4032 = vrot.lane.b32.xlu0 %v3208, 48
      %v4033 = vpop.permute.xlu0 %4032
      %4034 = vrot.lane.b32.xlu0 %v3209, 48
      %v4035 = vpop.permute.xlu0 %4034
      %4036 = vrot.lane.b32.xlu0 %v3210, 48
      %v4037 = vpop.permute.xlu0 %4036
      %4038 = vrot.lane.b32.xlu0 %v3211, 48
      %v4039 = vpop.permute.xlu0 %4038
      %4040 = vrot.lane.b32.xlu0 %v3212, 48
      %v4041 = vpop.permute.xlu0 %4040
      %4042 = vrot.lane.b32.xlu0 %v3213, 48
      %v4043 = vpop.permute.xlu0 %4042
      %4044 = vrot.lane.b32.xlu0 %v3214, 48
      %v4045 = vpop.permute.xlu0 %4044
      %4046 = vrot.lane.b32.xlu0 %v3215, 48
      %v4047 = vpop.permute.xlu0 %4046
      %4120 = vrot.lane.b32.xlu0 %v3216, 56
      %v4121 = vpop.permute.xlu0 %4120
      %4122 = vrot.lane.b32.xlu0 %v3217, 56
      %v4123 = vpop.permute.xlu0 %4122
      %4124 = vrot.lane.b32.xlu0 %v3218, 56
      %v4125 = vpop.permute.xlu0 %4124
      %4126 = vrot.lane.b32.xlu0 %v3219, 56
      %v4127 = vpop.permute.xlu0 %4126
      %4128 = vrot.lane.b32.xlu0 %v3220, 56
      %v4129 = vpop.permute.xlu0 %4128
      %4130 = vrot.lane.b32.xlu0 %v3221, 56
      %v4131 = vpop.permute.xlu0 %4130
      %4132 = vrot.lane.b32.xlu0 %v3222, 56
      %v4133 = vpop.permute.xlu0 %4132
      %4134 = vrot.lane.b32.xlu0 %v3223, 56
      %v4135 = vpop.permute.xlu0 %4134
      %4136 = vrot.lane.b32.xlu0 %v3224, 56
      %v4137 = vpop.permute.xlu0 %4136
      %4138 = vrot.lane.b32.xlu0 %v3225, 56
      %v4139 = vpop.permute.xlu0 %4138
      %4140 = vrot.lane.b32.xlu0 %v3226, 56
      %v4141 = vpop.permute.xlu0 %4140
      %4142 = vrot.lane.b32.xlu0 %v3227, 56
      %v4143 = vpop.permute.xlu0 %4142
      %4144 = vrot.lane.b32.xlu0 %v3228, 56
      %v4145 = vpop.permute.xlu0 %4144
      %4146 = vrot.lane.b32.xlu0 %v3229, 56
      %v4147 = vpop.permute.xlu0 %4146
      %4148 = vrot.lane.b32.xlu0 %v3230, 56
      %v4149 = vpop.permute.xlu0 %4148
      %4150 = vrot.lane.b32.xlu0 %v3231, 56
      %v4151 = vpop.permute.xlu0 %4150
      %4152 = vrot.lane.b32.xlu0 %v3232, 56
      %v4153 = vpop.permute.xlu0 %4152
      %4154 = vrot.lane.b32.xlu0 %v3233, 56
      %v4155 = vpop.permute.xlu0 %4154
      %4156 = vrot.lane.b32.xlu0 %v3234, 56
      %v4157 = vpop.permute.xlu0 %4156
      %4158 = vrot.lane.b32.xlu0 %v3235, 56
      %v4159 = vpop.permute.xlu0 %4158
      %4160 = vrot.lane.b32.xlu0 %v3236, 56
      %v4161 = vpop.permute.xlu0 %4160
      %4162 = vrot.lane.b32.xlu0 %v3237, 56
      %v4163 = vpop.permute.xlu0 %4162
      %4164 = vrot.lane.b32.xlu0 %v3238, 56
      %v4165 = vpop.permute.xlu0 %4164
      %4166 = vrot.lane.b32.xlu0 %v3239, 56
      %v4167 = vpop.permute.xlu0 %4166
      %4168 = vrot.lane.b32.xlu0 %v3240, 56
      %v4169 = vpop.permute.xlu0 %4168
      %4170 = vrot.lane.b32.xlu0 %v3241, 56
      %v4171 = vpop.permute.xlu0 %4170
      %4172 = vrot.lane.b32.xlu0 %v3242, 56
      %v4173 = vpop.permute.xlu0 %4172
      %4174 = vrot.lane.b32.xlu0 %v3243, 56
      %v4175 = vpop.permute.xlu0 %4174
      %4176 = vrot.lane.b32.xlu0 %v3244, 56
      %v4177 = vpop.permute.xlu0 %4176
      %4178 = vrot.lane.b32.xlu0 %v3245, 56
      %v4179 = vpop.permute.xlu0 %4178
      %4180 = vrot.lane.b32.xlu0 %v3246, 56
      %v4181 = vpop.permute.xlu0 %4180
      %4182 = vrot.lane.b32.xlu0 %v3247, 56
      %v4183 = vpop.permute.xlu0 %4182
      %4184 = vrot.lane.b32.xlu0 %v3248, 56
      %v4185 = vpop.permute.xlu0 %4184
      %4186 = vrot.lane.b32.xlu0 %v3249, 56
      %v4187 = vpop.permute.xlu0 %4186
      %4188 = vrot.lane.b32.xlu0 %v3250, 56
      %v4189 = vpop.permute.xlu0 %4188
      %4190 = vrot.lane.b32.xlu0 %v3251, 56
      %v4191 = vpop.permute.xlu0 %4190
      %4264 = vrot.lane.b32.xlu0 %v3252, 64
      %v4265 = vpop.permute.xlu0 %4264
      %4266 = vrot.lane.b32.xlu0 %v3253, 64
      %v4267 = vpop.permute.xlu0 %4266
      %4268 = vrot.lane.b32.xlu0 %v3254, 64
      %v4269 = vpop.permute.xlu0 %4268
      %4270 = vrot.lane.b32.xlu0 %v3255, 64
      %v4271 = vpop.permute.xlu0 %4270
      %4272 = vrot.lane.b32.xlu0 %v3256, 64
      %v4273 = vpop.permute.xlu0 %4272
      %4274 = vrot.lane.b32.xlu0 %v3257, 64
      %v4275 = vpop.permute.xlu0 %4274
      %4276 = vrot.lane.b32.xlu0 %v3258, 64
      %v4277 = vpop.permute.xlu0 %4276
      %4278 = vrot.lane.b32.xlu0 %v3259, 64
      %v4279 = vpop.permute.xlu0 %4278
      %4280 = vrot.lane.b32.xlu0 %v3260, 64
      %v4281 = vpop.permute.xlu0 %4280
      %4282 = vrot.lane.b32.xlu0 %v3261, 64
      %v4283 = vpop.permute.xlu0 %4282
      %4284 = vrot.lane.b32.xlu0 %v3262, 64
      %v4285 = vpop.permute.xlu0 %4284
      %4286 = vrot.lane.b32.xlu0 %v3263, 64
      %v4287 = vpop.permute.xlu0 %4286
      %4288 = vrot.lane.b32.xlu0 %v3264, 64
      %v4289 = vpop.permute.xlu0 %4288
      %4290 = vrot.lane.b32.xlu0 %v3265, 64
      %v4291 = vpop.permute.xlu0 %4290
      %4292 = vrot.lane.b32.xlu0 %v3266, 64
      %v4293 = vpop.permute.xlu0 %4292
      %4294 = vrot.lane.b32.xlu0 %v3267, 64
      %v4295 = vpop.permute.xlu0 %4294
      %4296 = vrot.lane.b32.xlu0 %v3268, 64
      %v4297 = vpop.permute.xlu0 %4296
      %4298 = vrot.lane.b32.xlu0 %v3269, 64
      %v4299 = vpop.permute.xlu0 %4298
      %4300 = vrot.lane.b32.xlu0 %v3270, 64
      %v4301 = vpop.permute.xlu0 %4300
      %4302 = vrot.lane.b32.xlu0 %v3271, 64
      %v4303 = vpop.permute.xlu0 %4302
      %4304 = vrot.lane.b32.xlu0 %v3272, 64
      %v4305 = vpop.permute.xlu0 %4304
      %4306 = vrot.lane.b32.xlu0 %v3273, 64
      %v4307 = vpop.permute.xlu0 %4306
      %4308 = vrot.lane.b32.xlu0 %v3274, 64
      %v4309 = vpop.permute.xlu0 %4308
      %4310 = vrot.lane.b32.xlu0 %v3275, 64
      %v4311 = vpop.permute.xlu0 %4310
      %4312 = vrot.lane.b32.xlu0 %v3276, 64
      %v4313 = vpop.permute.xlu0 %4312
      %4314 = vrot.lane.b32.xlu0 %v3277, 64
      %v4315 = vpop.permute.xlu0 %4314
      %4316 = vrot.lane.b32.xlu0 %v3278, 64
      %v4317 = vpop.permute.xlu0 %4316
      %4318 = vrot.lane.b32.xlu0 %v3279, 64
      %v4319 = vpop.permute.xlu0 %4318
      %4320 = vrot.lane.b32.xlu0 %v3280, 64
      %v4321 = vpop.permute.xlu0 %4320
      %4322 = vrot.lane.b32.xlu0 %v3281, 64
      %v4323 = vpop.permute.xlu0 %4322
      %4324 = vrot.lane.b32.xlu0 %v3282, 64
      %v4325 = vpop.permute.xlu0 %4324
      %4326 = vrot.lane.b32.xlu0 %v3283, 64
      %v4327 = vpop.permute.xlu0 %4326
      %4328 = vrot.lane.b32.xlu0 %v3284, 64
      %v4329 = vpop.permute.xlu0 %4328
      %4330 = vrot.lane.b32.xlu0 %v3285, 64
      %v4331 = vpop.permute.xlu0 %4330
      %4332 = vrot.lane.b32.xlu0 %v3286, 64
      %v4333 = vpop.permute.xlu0 %4332
      %4334 = vrot.lane.b32.xlu0 %v3287, 64
      %v4335 = vpop.permute.xlu0 %4334
      %v4372 = vsel %vm1602, %v3032, %v3325
      %v4373 = vsel %vm1602, %v3033, %v3327
      %v4374 = vsel %vm1602, %v3034, %v3329
      %v4375 = vsel %vm1602, %v3035, %v3331
      %v4376 = vsel %vm1602, %v3036, %v3333
      %v4377 = vsel %vm1602, %v3037, %v3335
      %v4378 = vsel %vm1602, %v3038, %v3337
      %v4379 = vsel %vm1602, %v3039, %v3339
      %v4380 = vsel %vm1602, %v3040, %v3341
      %v4381 = vsel %vm1602, %v3041, %v3343
      %v4382 = vsel %vm1602, %v3042, %v3345
      %v4383 = vsel %vm1602, %v3043, %v3347
      %v4384 = vsel %vm1602, %v3044, %v3349
      %v4385 = vsel %vm1602, %v3045, %v3351
      %v4386 = vsel %vm1602, %v3046, %v3353
      %v4387 = vsel %vm1602, %v3047, %v3355
      %v4388 = vsel %vm1602, %v3048, %v3357
      %v4389 = vsel %vm1602, %v3049, %v3359
      %v4390 = vsel %vm1602, %v3050, %v3361
      %v4391 = vsel %vm1602, %v3051, %v3363
      %v4392 = vsel %vm1602, %v3052, %v3365
      %v4393 = vsel %vm1602, %v3053, %v3367
      %v4394 = vsel %vm1602, %v3054, %v3369
      %v4395 = vsel %vm1602, %v3055, %v3371
      %v4396 = vsel %vm1602, %v3056, %v3373
      %v4397 = vsel %vm1602, %v3057, %v3375
      %v4398 = vsel %vm1602, %v3058, %v3377
      %v4399 = vsel %vm1602, %v3059, %v3379
      %v4400 = vsel %vm1602, %v3060, %v3381
      %v4401 = vsel %vm1602, %v3061, %v3383
      %v4402 = vsel %vm1602, %v3062, %v3385
      %v4403 = vsel %vm1602, %v3063, %v3387
      %v4404 = vsel %vm1602, %v3064, %v3389
      %v4405 = vsel %vm1602, %v3065, %v3391
      %v4406 = vsel %vm1602, %v3066, %v3393
      %v4407 = vsel %vm1602, %v3067, %v3395
      %v4408 = vsel %vm1676, %v4372, %v3469
      %v4409 = vsel %vm1676, %v4373, %v3471
      %v4410 = vsel %vm1676, %v4374, %v3473
      %v4411 = vsel %vm1676, %v4375, %v3475
      %v4412 = vsel %vm1676, %v4376, %v3477
      %v4413 = vsel %vm1676, %v4377, %v3479
      %v4414 = vsel %vm1676, %v4378, %v3481
      %v4415 = vsel %vm1676, %v4379, %v3483
      %v4416 = vsel %vm1676, %v4380, %v3485
      %v4417 = vsel %vm1676, %v4381, %v3487
      %v4418 = vsel %vm1676, %v4382, %v3489
      %v4419 = vsel %vm1676, %v4383, %v3491
      %v4420 = vsel %vm1676, %v4384, %v3493
      %v4421 = vsel %vm1676, %v4385, %v3495
      %v4422 = vsel %vm1676, %v4386, %v3497
      %v4423 = vsel %vm1676, %v4387, %v3499
      %v4424 = vsel %vm1676, %v4388, %v3501
      %v4425 = vsel %vm1676, %v4389, %v3503
      %v4426 = vsel %vm1676, %v4390, %v3505
      %v4427 = vsel %vm1676, %v4391, %v3507
      %v4428 = vsel %vm1676, %v4392, %v3509
      %v4429 = vsel %vm1676, %v4393, %v3511
      %v4430 = vsel %vm1676, %v4394, %v3513
      %v4431 = vsel %vm1676, %v4395, %v3515
      %v4432 = vsel %vm1676, %v4396, %v3517
      %v4433 = vsel %vm1676, %v4397, %v3519
      %v4434 = vsel %vm1676, %v4398, %v3521
      %v4435 = vsel %vm1676, %v4399, %v3523
      %v4436 = vsel %vm1676, %v4400, %v3525
      %v4437 = vsel %vm1676, %v4401, %v3527
      %v4438 = vsel %vm1676, %v4402, %v3529
      %v4439 = vsel %vm1676, %v4403, %v3531
      %v4440 = vsel %vm1676, %v4404, %v3533
      %v4441 = vsel %vm1676, %v4405, %v3535
      %v4442 = vsel %vm1676, %v4406, %v3537
      %v4443 = vsel %vm1676, %v4407, %v3539
      %v4444 = vsel %vm1750, %v4408, %v3579
      %v4445 = vsel %vm1750, %v4409, %v3581
      %v4446 = vsel %vm1750, %v4410, %v3583
      %v4447 = vsel %vm1750, %v4411, %v3585
      %v4448 = vsel %vm1750, %v4412, %v3587
      %v4449 = vsel %vm1750, %v4413, %v3589
      %v4450 = vsel %vm1750, %v4414, %v3591
      %v4451 = vsel %vm1750, %v4415, %v3593
      %v4452 = vsel %vm1750, %v4416, %v3595
      %v4453 = vsel %vm1750, %v4417, %v3597
      %v4454 = vsel %vm1750, %v4418, %v3599
      %v4455 = vsel %vm1750, %v4419, %v3601
      %v4456 = vsel %vm1750, %v4420, %v3603
      %v4457 = vsel %vm1750, %v4421, %v3605
      %v4458 = vsel %vm1750, %v4422, %v3607
      %v4459 = vsel %vm1750, %v4423, %v3609
      %v4460 = vsel %vm1750, %v4424, %v3611
      %v4461 = vsel %vm1750, %v4425, %v3613
      %v4462 = vsel %vm1750, %v4426, %v3615
      %v4463 = vsel %vm1750, %v4427, %v3617
      %v4464 = vsel %vm1750, %v4428, %v3619
      %v4465 = vsel %vm1750, %v4429, %v3621
      %v4466 = vsel %vm1750, %v4430, %v3623
      %v4467 = vsel %vm1750, %v4431, %v3625
      %v4468 = vsel %vm1750, %v4432, %v3627
      %v4469 = vsel %vm1750, %v4433, %v3629
      %v4470 = vsel %vm1750, %v4434, %v3631
      %v4471 = vsel %vm1750, %v4435, %v3633
      %v4472 = vsel %vm1750, %v4436, %v3635
      %v4473 = vsel %vm1750, %v4437, %v3637
      %v4474 = vsel %vm1750, %v4438, %v3639
      %v4475 = vsel %vm1750, %v4439, %v3641
      %v4476 = vsel %vm1750, %v4440, %v3643
      %v4477 = vsel %vm1750, %v4441, %v3645
      %v4478 = vsel %vm1750, %v4442, %v3647
      %v4479 = vsel %vm1750, %v4443, %v3649
      %v4480 = vsel %vm1824, %v4444, %v3723
      %v4481 = vsel %vm1824, %v4445, %v3725
      %v4482 = vsel %vm1824, %v4446, %v3727
      %v4483 = vsel %vm1824, %v4447, %v3729
      %v4484 = vsel %vm1824, %v4448, %v3731
      %v4485 = vsel %vm1824, %v4449, %v3733
      %v4486 = vsel %vm1824, %v4450, %v3735
      %v4487 = vsel %vm1824, %v4451, %v3737
      %v4488 = vsel %vm1824, %v4452, %v3739
      %v4489 = vsel %vm1824, %v4453, %v3741
      %v4490 = vsel %vm1824, %v4454, %v3743
      %v4491 = vsel %vm1824, %v4455, %v3745
      %v4492 = vsel %vm1824, %v4456, %v3747
      %v4493 = vsel %vm1824, %v4457, %v3749
      %v4494 = vsel %vm1824, %v4458, %v3751
      %v4495 = vsel %vm1824, %v4459, %v3753
      %v4496 = vsel %vm1824, %v4460, %v3755
      %v4497 = vsel %vm1824, %v4461, %v3757
      %v4498 = vsel %vm1824, %v4462, %v3759
      %v4499 = vsel %vm1824, %v4463, %v3761
      %v4500 = vsel %vm1824, %v4464, %v3763
      %v4501 = vsel %vm1824, %v4465, %v3765
      %v4502 = vsel %vm1824, %v4466, %v3767
      %v4503 = vsel %vm1824, %v4467, %v3769
      %v4504 = vsel %vm1824, %v4468, %v3771
      %v4505 = vsel %vm1824, %v4469, %v3773
      %v4506 = vsel %vm1824, %v4470, %v3775
      %v4507 = vsel %vm1824, %v4471, %v3777
      %v4508 = vsel %vm1824, %v4472, %v3779
      %v4509 = vsel %vm1824, %v4473, %v3781
      %v4510 = vsel %vm1824, %v4474, %v3783
      %v4511 = vsel %vm1824, %v4475, %v3785
      %v4512 = vsel %vm1824, %v4476, %v3787
      %v4513 = vsel %vm1824, %v4477, %v3789
      %v4514 = vsel %vm1824, %v4478, %v3791
      %v4515 = vsel %vm1824, %v4479, %v3793
      %vm4516 = vcmask 326656
      %v4517 = vsel %vm4516, %v4480, %v3867
      %v4518 = vsel %vm4516, %v4481, %v3869
      %v4519 = vsel %vm4516, %v4482, %v3871
      %v4520 = vsel %vm4516, %v4483, %v3873
      %v4521 = vsel %vm4516, %v4484, %v3875
      %v4522 = vsel %vm4516, %v4485, %v3877
      %v4523 = vsel %vm4516, %v4486, %v3879
      %v4524 = vsel %vm4516, %v4487, %v3881
      %v4525 = vsel %vm4516, %v4488, %v3883
      %v4526 = vsel %vm4516, %v4489, %v3885
      %v4527 = vsel %vm4516, %v4490, %v3887
      %v4528 = vsel %vm4516, %v4491, %v3889
      %v4529 = vsel %vm4516, %v4492, %v3891
      %v4530 = vsel %vm4516, %v4493, %v3893
      %v4531 = vsel %vm4516, %v4494, %v3895
      %v4532 = vsel %vm4516, %v4495, %v3897
      %v4533 = vsel %vm4516, %v4496, %v3899
      %v4534 = vsel %vm4516, %v4497, %v3901
      %v4535 = vsel %vm4516, %v4498, %v3903
      %v4536 = vsel %vm4516, %v4499, %v3905
      %v4537 = vsel %vm4516, %v4500, %v3907
      %v4538 = vsel %vm4516, %v4501, %v3909
      %v4539 = vsel %vm4516, %v4502, %v3911
      %v4540 = vsel %vm4516, %v4503, %v3913
      %v4541 = vsel %vm4516, %v4504, %v3915
      %v4542 = vsel %vm4516, %v4505, %v3917
      %v4543 = vsel %vm4516, %v4506, %v3919
      %v4544 = vsel %vm4516, %v4507, %v3921
      %v4545 = vsel %vm4516, %v4508, %v3923
      %v4546 = vsel %vm4516, %v4509, %v3925
      %v4547 = vsel %vm4516, %v4510, %v3927
      %v4548 = vsel %vm4516, %v4511, %v3929
      %v4549 = vsel %vm4516, %v4512, %v3931
      %v4550 = vsel %vm4516, %v4513, %v3933
      %v4551 = vsel %vm4516, %v4514, %v3935
      %v4552 = vsel %vm4516, %v4515, %v3937
      %vm4553 = vcmask 392192
      %v4554 = vsel %vm4553, %v4517, %v3977
      %v4555 = vsel %vm4553, %v4518, %v3979
      %v4556 = vsel %vm4553, %v4519, %v3981
      %v4557 = vsel %vm4553, %v4520, %v3983
      %v4558 = vsel %vm4553, %v4521, %v3985
      %v4559 = vsel %vm4553, %v4522, %v3987
      %v4560 = vsel %vm4553, %v4523, %v3989
      %v4561 = vsel %vm4553, %v4524, %v3991
      %v4562 = vsel %vm4553, %v4525, %v3993
      %v4563 = vsel %vm4553, %v4526, %v3995
      %v4564 = vsel %vm4553, %v4527, %v3997
      %v4565 = vsel %vm4553, %v4528, %v3999
      %v4566 = vsel %vm4553, %v4529, %v4001
      %v4567 = vsel %vm4553, %v4530, %v4003
      %v4568 = vsel %vm4553, %v4531, %v4005
      %v4569 = vsel %vm4553, %v4532, %v4007
      %v4570 = vsel %vm4553, %v4533, %v4009
      %v4571 = vsel %vm4553, %v4534, %v4011
      %v4572 = vsel %vm4553, %v4535, %v4013
      %v4573 = vsel %vm4553, %v4536, %v4015
      %v4574 = vsel %vm4553, %v4537, %v4017
      %v4575 = vsel %vm4553, %v4538, %v4019
      %v4576 = vsel %vm4553, %v4539, %v4021
      %v4577 = vsel %vm4553, %v4540, %v4023
      %v4578 = vsel %vm4553, %v4541, %v4025
      %v4579 = vsel %vm4553, %v4542, %v4027
      %v4580 = vsel %vm4553, %v4543, %v4029
      %v4581 = vsel %vm4553, %v4544, %v4031
      %v4582 = vsel %vm4553, %v4545, %v4033
      %v4583 = vsel %vm4553, %v4546, %v4035
      %v4584 = vsel %vm4553, %v4547, %v4037
      %v4585 = vsel %vm4553, %v4548, %v4039
      %v4586 = vsel %vm4553, %v4549, %v4041
      %v4587 = vsel %vm4553, %v4550, %v4043
      %v4588 = vsel %vm4553, %v4551, %v4045
      %v4589 = vsel %vm4553, %v4552, %v4047
      %vm4590 = vcmask 457728
      %v4591 = vsel %vm4590, %v4554, %v4121
      %v4592 = vsel %vm4590, %v4555, %v4123
      %v4593 = vsel %vm4590, %v4556, %v4125
      %v4594 = vsel %vm4590, %v4557, %v4127
      %v4595 = vsel %vm4590, %v4558, %v4129
      %v4596 = vsel %vm4590, %v4559, %v4131
      %v4597 = vsel %vm4590, %v4560, %v4133
      %v4598 = vsel %vm4590, %v4561, %v4135
      %v4599 = vsel %vm4590, %v4562, %v4137
      %v4600 = vsel %vm4590, %v4563, %v4139
      %v4601 = vsel %vm4590, %v4564, %v4141
      %v4602 = vsel %vm4590, %v4565, %v4143
      %v4603 = vsel %vm4590, %v4566, %v4145
      %v4604 = vsel %vm4590, %v4567, %v4147
      %v4605 = vsel %vm4590, %v4568, %v4149
      %v4606 = vsel %vm4590, %v4569, %v4151
      %v4607 = vsel %vm4590, %v4570, %v4153
      %v4608 = vsel %vm4590, %v4571, %v4155
      %v4609 = vsel %vm4590, %v4572, %v4157
      %v4610 = vsel %vm4590, %v4573, %v4159
      %v4611 = vsel %vm4590, %v4574, %v4161
      %v4612 = vsel %vm4590, %v4575, %v4163
      %v4613 = vsel %vm4590, %v4576, %v4165
      %v4614 = vsel %vm4590, %v4577, %v4167
      %v4615 = vsel %vm4590, %v4578, %v4169
      %v4616 = vsel %vm4590, %v4579, %v4171
      %v4617 = vsel %vm4590, %v4580, %v4173
      %v4618 = vsel %vm4590, %v4581, %v4175
      %v4619 = vsel %vm4590, %v4582, %v4177
      %v4620 = vsel %vm4590, %v4583, %v4179
      %v4621 = vsel %vm4590, %v4584, %v4181
      %v4622 = vsel %vm4590, %v4585, %v4183
      %v4623 = vsel %vm4590, %v4586, %v4185
      %v4624 = vsel %vm4590, %v4587, %v4187
      %v4625 = vsel %vm4590, %v4588, %v4189
      %v4626 = vsel %vm4590, %v4589, %v4191
      %vm4627 = vcmask 523264
      %v4628 = vsel %vm4627, %v4591, %v4265
      %v4629 = vsel %vm4627, %v4592, %v4267
      %v4630 = vsel %vm4627, %v4593, %v4269
      %v4631 = vsel %vm4627, %v4594, %v4271
      %v4632 = vsel %vm4627, %v4595, %v4273
      %v4633 = vsel %vm4627, %v4596, %v4275
      %v4634 = vsel %vm4627, %v4597, %v4277
      %v4635 = vsel %vm4627, %v4598, %v4279
      %v4636 = vsel %vm4627, %v4599, %v4281
      %v4637 = vsel %vm4627, %v4600, %v4283
      %v4638 = vsel %vm4627, %v4601, %v4285
      %v4639 = vsel %vm4627, %v4602, %v4287
      %v4640 = vsel %vm4627, %v4603, %v4289
      %v4641 = vsel %vm4627, %v4604, %v4291
      %v4642 = vsel %vm4627, %v4605, %v4293
      %v4643 = vsel %vm4627, %v4606, %v4295
      %v4644 = vsel %vm4627, %v4607, %v4297
      %v4645 = vsel %vm4627, %v4608, %v4299
      %v4646 = vsel %vm4627, %v4609, %v4301
      %v4647 = vsel %vm4627, %v4610, %v4303
      %v4648 = vsel %vm4627, %v4611, %v4305
      %v4649 = vsel %vm4627, %v4612, %v4307
      %v4650 = vsel %vm4627, %v4613, %v4309
      %v4651 = vsel %vm4627, %v4614, %v4311
      %v4652 = vsel %vm4627, %v4615, %v4313
      %v4653 = vsel %vm4627, %v4616, %v4315
      %v4654 = vsel %vm4627, %v4617, %v4317
      %v4655 = vsel %vm4627, %v4618, %v4319
      %v4656 = vsel %vm4627, %v4619, %v4321
      %v4657 = vsel %vm4627, %v4620, %v4323
      %v4658 = vsel %vm4627, %v4621, %v4325
      %v4659 = vsel %vm4627, %v4622, %v4327
      %v4660 = vsel %vm4627, %v4623, %v4329
      %v4661 = vsel %vm4627, %v4624, %v4331
      %v4662 = vsel %vm4627, %v4625, %v4333
      %v4663 = vsel %vm4627, %v4626, %v4335
      %v4664 = vld [vmem:[%s3] sm:$0xff]
      %v4665 = vld [vmem:[%s3 + $0x8] sm:$0xff]
      %v4666 = vld [vmem:[%s3 + $0x10] sm:$0xff]
      %v4667 = vld [vmem:[%s3 + $0x18] sm:$0xff]
      %v4668 = vld [vmem:[%s3 + $0x20] sm:$0xff]
      %v4669 = vld [vmem:[%s3 + $0x28] sm:$0xff]
      %v4670 = vld [vmem:[%s3 + $0x30] sm:$0xff]
      %v4671 = vld [vmem:[%s3 + $0x38] sm:$0xff]
      %v4672 = vld [vmem:[%s3 + $0x40] sm:$0xff]
      %v4673 = vld [vmem:[%s4] sm:$0x1]
      %v4675 = vlaneseq
      %v4676 = vshrl.u32 %v4675, 7
      %v4677 = vsub.s32 0, %v4676
      %v4678 = vrot.slane %v4673, %v4677
      %vm4680 = vcmask 588800
      %v4682 = vsel %vm4680, %v4628, 0
      %v4685 = vsel %vm4680, %v4629, 0
      %v4688 = vsel %vm4680, %v4630, 0
      %v4691 = vsel %vm4680, %v4631, 0
      %v4694 = vsel %vm4680, %v4632, 0
      %v4697 = vsel %vm4680, %v4633, 0
      %v4700 = vsel %vm4680, %v4634, 0
      %v4703 = vsel %vm4680, %v4635, 0
      %v4706 = vsel %vm4680, %v4636, 0
      %v4709 = vsel %vm4680, %v4637, 0
      %v4712 = vsel %vm4680, %v4638, 0
      %v4715 = vsel %vm4680, %v4639, 0
      %v4718 = vsel %vm4680, %v4640, 0
      %v4721 = vsel %vm4680, %v4641, 0
      %v4724 = vsel %vm4680, %v4642, 0
      %v4727 = vsel %vm4680, %v4643, 0
      %v4730 = vsel %vm4680, %v4644, 0
      %v4733 = vsel %vm4680, %v4645, 0
      %v4736 = vsel %vm4680, %v4646, 0
      %v4739 = vsel %vm4680, %v4647, 0
      %v4742 = vsel %vm4680, %v4648, 0
      %v4745 = vsel %vm4680, %v4649, 0
      %v4748 = vsel %vm4680, %v4650, 0
      %v4751 = vsel %vm4680, %v4651, 0
      %v4754 = vsel %vm4680, %v4652, 0
      %v4757 = vsel %vm4680, %v4653, 0
      %v4760 = vsel %vm4680, %v4654, 0
      %v4763 = vsel %vm4680, %v4655, 0
      %v4766 = vsel %vm4680, %v4656, 0
      %v4769 = vsel %vm4680, %v4657, 0
      %v4772 = vsel %vm4680, %v4658, 0
      %v4775 = vsel %vm4680, %v4659, 0
      %v4778 = vsel %vm4680, %v4660, 0
      %v4781 = vsel %vm4680, %v4661, 0
      %v4784 = vsel %vm4680, %v4662, 0
      %v4787 = vsel %vm4680, %v4663, 0
      %4789 = vmatprep.subr.mxu0 0.0
      %4790 = vmatpush1.msra.mxu0 %v4664
      %4791 = vmatprep.subr.mxu0 0.0
      %4792 = vmatpush1.msra.mxu0 %v4665
      %4793 = vmatprep.subr.mxu0 0.0
      %4794 = vmatpush1.msra.mxu0 %v4666
      %4795 = vmatprep.subr.mxu0 0.0
      %4796 = vmatpush1.msra.mxu0 %v4667
      %4797 = vmatprep.subr.mxu0 0.0
      %4798 = vmatpush1.msra.mxu0 %v4668
      %4799 = vmatprep.subr.mxu0 0.0
      %4800 = vmatpush1.msra.mxu0 %v4669
      %4801 = vmatprep.subr.mxu0 0.0
      %4802 = vmatpush1.msra.mxu0 %v4670
      %4803 = vmatprep.subr.mxu0 0.0
      %4804 = vmatpush1.msra.mxu0 %v4671
      %4805 = vmatprep.subr.mxu0 0.0
      %4806 = vmatpush1.msra.mxu0 %v4672
      %4807 = vmatprep.subr.mxu0 0.0
      %4808 = vmatpush1.msra.mxu0 0.0
      %4809 = vmatprep.subr.mxu0 0.0
      %4810 = vmatpush1.msra.mxu0 0.0
      %4811 = vmatprep.subr.mxu0 0.0
      %4812 = vmatpush1.msra.mxu0 0.0
      %4813 = vmatprep.subr.mxu0 0.0
      %4814 = vmatpush1.msra.mxu0 0.0
      %4815 = vmatprep.subr.mxu0 0.0
      %4816 = vmatpush1.msra.mxu0 0.0
      %4817 = vmatprep.subr.mxu0 0.0
      %4818 = vmatpush1.msra.mxu0 0.0
      %4819 = vmatprep.subr.mxu0 0.0
      %4820 = vmatpush1.msra.mxu0 0.0
      %4821 = vmatprep.subr.mxu0 0.0
      %4822 = vmatpush1.msra.mxu0 0.0
      %4823 = vmatprep.subr.mxu0 0.0
      %4824 = vmatpush1.msra.mxu0 0.0
      %4825 = vmatprep.subr.mxu0 0.0
      %4826 = vmatpush1.msra.mxu0 0.0
      %4827 = vmatprep.subr.mxu0 0.0
      %4828 = vmatpush1.msra.mxu0 0.0
      %4829 = vmatprep.subr.mxu0 0.0
      %4830 = vmatpush1.msra.mxu0 0.0
      %4831 = vmatprep.subr.mxu0 0.0
      %4832 = vmatpush1.msra.mxu0 0.0
      %4833 = vmatprep.subr.mxu0 0.0
      %4834 = vmatpush1.msra.mxu0 0.0
      %4835 = vmatprep.subr.mxu0 0.0
      %4836 = vmatpush1.msra.mxu0 0.0
      %4837 = vmatprep.subr.mxu0 0.0
      %4838 = vmatpush1.msra.mxu0 0.0
      %4839 = vmatprep.subr.mxu0 0.0
      %4840 = vmatpush1.msra.mxu0 0.0
      %4841 = vmatprep.subr.mxu0 0.0
      %4842 = vmatpush1.msra.mxu0 0.0
      %4843 = vmatprep.subr.mxu0 0.0
      %4844 = vmatpush1.msra.mxu0 0.0
      %4845 = vmatprep.subr.mxu0 0.0
      %4846 = vmatpush1.msra.mxu0 0.0
      %4847 = vmatprep.subr.mxu0 0.0
      %4848 = vmatpush1.msra.mxu0 0.0
      %4849 = vmatprep.subr.mxu0 0.0
      %4850 = vmatpush1.msra.mxu0 0.0
      %4851 = vmatprep.subr.mxu0 0.0
      %4852 = vmatpush1.msra.mxu0 0.0
      %4853 = vmatprep.mubr.f32.mxu0 0.0
      %4854 = vmatmul.mubr.f32.gmra.mrb[0].mxu0 %v4682
      %v4855 = vpop.f32.mrb[0].mxu0
      %v4856 = vadd.f32 %v4678, %v4855
      %v4857 = vpop.f32.mrb[0].mxu0
      %4858 = vmatprep.mubr.f32.mxu0 0.0
      %4859 = vmatmul.mubr.f32.gmra.mrb[0].mxu0 %v4685
      %v4860 = vpop.f32.mrb[0].mxu0
      %v4861 = vadd.f32 %v4678, %v4860
      %v4862 = vpop.f32.mrb[0].mxu0
      %4863 = vmatprep.mubr.f32.mxu0 0.0
      %4864 = vmatmul.mubr.f32.gmra.mrb[0].mxu0 %v4688
      %v4865 = vpop.f32.mrb[0].mxu0
      %v4866 = vadd.f32 %v4678, %v4865
      %v4867 = vpop.f32.mrb[0].mxu0
      %4868 = vmatprep.mubr.f32.mxu0 0.0
      %4869 = vmatmul.mubr.f32.gmra.mrb[0].mxu0 %v4691
      %v4870 = vpop.f32.mrb[0].mxu0
      %v4871 = vadd.f32 %v4678, %v4870
      %v4872 = vpop.f32.mrb[0].mxu0
      %4873 = vmatprep.mubr.f32.mxu0 0.0
      %4874 = vmatmul.mubr.f32.gmra.mrb[0].mxu0 %v4694
      %v4875 = vpop.f32.mrb[0].mxu0
      %v4876 = vadd.f32 %v4678, %v4875
      %v4877 = vpop.f32.mrb[0].mxu0
      %4878 = vmatprep.mubr.f32.mxu0 0.0
      %4879 = vmatmul.mubr.f32.gmra.mrb[0].mxu0 %v4697
      %v4880 = vpop.f32.mrb[0].mxu0
      %v4881 = vadd.f32 %v4678, %v4880
      %v4882 = vpop.f32.mrb[0].mxu0
      %4883 = vmatprep.mubr.f32.mxu0 0.0
      %4884 = vmatmul.mubr.f32.gmra.mrb[0].mxu0 %v4700
      %v4885 = vpop.f32.mrb[0].mxu0
      %v4886 = vadd.f32 %v4678, %v4885
      %v4887 = vpop.f32.mrb[0].mxu0
      %4888 = vmatprep.mubr.f32.mxu0 0.0
      %4889 = vmatmul.mubr.f32.gmra.mrb[0].mxu0 %v4703
      %v4890 = vpop.f32.mrb[0].mxu0
      %v4891 = vadd.f32 %v4678, %v4890
      %v4892 = vpop.f32.mrb[0].mxu0
      %4893 = vmatprep.mubr.f32.mxu0 0.0
      %4894 = vmatmul.mubr.f32.gmra.mrb[0].mxu0 %v4706
      %v4895 = vpop.f32.mrb[0].mxu0
      %v4896 = vadd.f32 %v4678, %v4895
      %v4897 = vpop.f32.mrb[0].mxu0
      %4898 = vmatprep.mubr.f32.mxu0 0.0
      %4899 = vmatmul.mubr.f32.gmra.mrb[0].mxu0 %v4709
      %v4900 = vpop.f32.mrb[0].mxu0
      %v4901 = vadd.f32 %v4678, %v4900
      %v4902 = vpop.f32.mrb[0].mxu0
      %4903 = vmatprep.mubr.f32.mxu0 0.0
      %4904 = vmatmul.mubr.f32.gmra.mrb[0].mxu0 %v4712
      %v4905 = vpop.f32.mrb[0].mxu0
      %v4906 = vadd.f32 %v4678, %v4905
      %v4907 = vpop.f32.mrb[0].mxu0
      %4908 = vmatprep.mubr.f32.mxu0 0.0
      %4909 = vmatmul.mubr.f32.gmra.mrb[0].mxu0 %v4715
      %v4910 = vpop.f32.mrb[0].mxu0
      %v4911 = vadd.f32 %v4678, %v4910
      %v4912 = vpop.f32.mrb[0].mxu0
      %4913 = vmatprep.mubr.f32.mxu0 0.0
      %4914 = vmatmul.mubr.f32.gmra.mrb[0].mxu0 %v4718
      %v4915 = vpop.f32.mrb[0].mxu0
      %v4916 = vadd.f32 %v4678, %v4915
      %v4917 = vpop.f32.mrb[0].mxu0
      %4918 = vmatprep.mubr.f32.mxu0 0.0
      %4919 = vmatmul.mubr.f32.gmra.mrb[0].mxu0 %v4721
      %v4920 = vpop.f32.mrb[0].mxu0
      %v4921 = vadd.f32 %v4678, %v4920
      %v4922 = vpop.f32.mrb[0].mxu0
      %4923 = vmatprep.mubr.f32.mxu0 0.0
      %4924 = vmatmul.mubr.f32.gmra.mrb[0].mxu0 %v4724
      %v4925 = vpop.f32.mrb[0].mxu0
      %v4926 = vadd.f32 %v4678, %v4925
      %v4927 = vpop.f32.mrb[0].mxu0
      %4928 = vmatprep.mubr.f32.mxu0 0.0
      %4929 = vmatmul.mubr.f32.gmra.mrb[0].mxu0 %v4727
      %v4930 = vpop.f32.mrb[0].mxu0
      %v4931 = vadd.f32 %v4678, %v4930
      %v4932 = vpop.f32.mrb[0].mxu0
      %4933 = vmatprep.mubr.f32.mxu0 0.0
      %4934 = vmatmul.mubr.f32.gmra.mrb[0].mxu0 %v4730
      %v4935 = vpop.f32.mrb[0].mxu0
      %v4936 = vadd.f32 %v4678, %v4935
      %v4937 = vpop.f32.mrb[0].mxu0
      %4938 = vmatprep.mubr.f32.mxu0 0.0
      %4939 = vmatmul.mubr.f32.gmra.mrb[0].mxu0 %v4733
      %v4940 = vpop.f32.mrb[0].mxu0
      %v4941 = vadd.f32 %v4678, %v4940
      %v4942 = vpop.f32.mrb[0].mxu0
      %4943 = vmatprep.mubr.f32.mxu0 0.0
      %4944 = vmatmul.mubr.f32.gmra.mrb[0].mxu0 %v4736
      %v4945 = vpop.f32.mrb[0].mxu0
      %v4946 = vadd.f32 %v4678, %v4945
      %v4947 = vpop.f32.mrb[0].mxu0
      %4948 = vmatprep.mubr.f32.mxu0 0.0
      %4949 = vmatmul.mubr.f32.gmra.mrb[0].mxu0 %v4739
      %v4950 = vpop.f32.mrb[0].mxu0
      %v4951 = vadd.f32 %v4678, %v4950
      %v4952 = vpop.f32.mrb[0].mxu0
      %4953 = vmatprep.mubr.f32.mxu0 0.0
      %4954 = vmatmul.mubr.f32.gmra.mrb[0].mxu0 %v4742
      %v4955 = vpop.f32.mrb[0].mxu0
      %v4956 = vadd.f32 %v4678, %v4955
      %v4957 = vpop.f32.mrb[0].mxu0
      %4958 = vmatprep.mubr.f32.mxu0 0.0
      %4959 = vmatmul.mubr.f32.gmra.mrb[0].mxu0 %v4745
      %v4960 = vpop.f32.mrb[0].mxu0
      %v4961 = vadd.f32 %v4678, %v4960
      %v4962 = vpop.f32.mrb[0].mxu0
      %4963 = vmatprep.mubr.f32.mxu0 0.0
      %4964 = vmatmul.mubr.f32.gmra.mrb[0].mxu0 %v4748
      %v4965 = vpop.f32.mrb[0].mxu0
      %v4966 = vadd.f32 %v4678, %v4965
      %v4967 = vpop.f32.mrb[0].mxu0
      %4968 = vmatprep.mubr.f32.mxu0 0.0
      %4969 = vmatmul.mubr.f32.gmra.mrb[0].mxu0 %v4751
      %v4970 = vpop.f32.mrb[0].mxu0
      %v4971 = vadd.f32 %v4678, %v4970
      %v4972 = vpop.f32.mrb[0].mxu0
      %4973 = vmatprep.mubr.f32.mxu0 0.0
      %4974 = vmatmul.mubr.f32.gmra.mrb[0].mxu0 %v4754
      %v4975 = vpop.f32.mrb[0].mxu0
      %v4976 = vadd.f32 %v4678, %v4975
      %v4977 = vpop.f32.mrb[0].mxu0
      %4978 = vmatprep.mubr.f32.mxu0 0.0
      %4979 = vmatmul.mubr.f32.gmra.mrb[0].mxu0 %v4757
      %v4980 = vpop.f32.mrb[0].mxu0
      %v4981 = vadd.f32 %v4678, %v4980
      %v4982 = vpop.f32.mrb[0].mxu0
      %4983 = vmatprep.mubr.f32.mxu0 0.0
      %4984 = vmatmul.mubr.f32.gmra.mrb[0].mxu0 %v4760
      %v4985 = vpop.f32.mrb[0].mxu0
      %v4986 = vadd.f32 %v4678, %v4985
      %v4987 = vpop.f32.mrb[0].mxu0
      %4988 = vmatprep.mubr.f32.mxu0 0.0
      %4989 = vmatmul.mubr.f32.gmra.mrb[0].mxu0 %v4763
      %v4990 = vpop.f32.mrb[0].mxu0
      %v4991 = vadd.f32 %v4678, %v4990
      %v4992 = vpop.f32.mrb[0].mxu0
      %4993 = vmatprep.mubr.f32.mxu0 0.0
      %4994 = vmatmul.mubr.f32.gmra.mrb[0].mxu0 %v4766
      %v4995 = vpop.f32.mrb[0].mxu0
      %v4996 = vadd.f32 %v4678, %v4995
      %v4997 = vpop.f32.mrb[0].mxu0
      %4998 = vmatprep.mubr.f32.mxu0 0.0
      %4999 = vmatmul.mubr.f32.gmra.mrb[0].mxu0 %v4769
      %v5000 = vpop.f32.mrb[0].mxu0
      %v5001 = vadd.f32 %v4678, %v5000
      %v5002 = vpop.f32.mrb[0].mxu0
      %5003 = vmatprep.mubr.f32.mxu0 0.0
      %5004 = vmatmul.mubr.f32.gmra.mrb[0].mxu0 %v4772
      %v5005 = vpop.f32.mrb[0].mxu0
      %v5006 = vadd.f32 %v4678, %v5005
      %v5007 = vpop.f32.mrb[0].mxu0
      %5008 = vmatprep.mubr.f32.mxu0 0.0
      %5009 = vmatmul.mubr.f32.gmra.mrb[0].mxu0 %v4775
      %v5010 = vpop.f32.mrb[0].mxu0
      %v5011 = vadd.f32 %v4678, %v5010
      %v5012 = vpop.f32.mrb[0].mxu0
      %5013 = vmatprep.mubr.f32.mxu0 0.0
      %5014 = vmatmul.mubr.f32.gmra.mrb[0].mxu0 %v4778
      %v5015 = vpop.f32.mrb[0].mxu0
      %v5016 = vadd.f32 %v4678, %v5015
      %v5017 = vpop.f32.mrb[0].mxu0
      %5018 = vmatprep.mubr.f32.mxu0 0.0
      %5019 = vmatmul.mubr.f32.gmra.mrb[0].mxu0 %v4781
      %v5020 = vpop.f32.mrb[0].mxu0
      %v5021 = vadd.f32 %v4678, %v5020
      %v5022 = vpop.f32.mrb[0].mxu0
      %5023 = vmatprep.mubr.f32.mxu0 0.0
      %5024 = vmatmul.mubr.f32.gmra.mrb[0].mxu0 %v4784
      %v5025 = vpop.f32.mrb[0].mxu0
      %v5026 = vadd.f32 %v4678, %v5025
      %v5027 = vpop.f32.mrb[0].mxu0
      %5028 = vmatprep.mubr.f32.mxu0 0.0
      %5029 = vmatmul.mubr.f32.gmra.mrb[0].mxu0 %v4787
      %v5030 = vpop.f32.mrb[0].mxu0
      %v5031 = vadd.f32 %v4678, %v5030
      %v5032 = vpop.f32.mrb[0].mxu0
      %5033 = vdwg.mxu0
      %v5034 = vmax.f32 %v4856, 0.0
      %v5035 = vmax.f32 %v4861, 0.0
      %v5036 = vmax.f32 %v4866, 0.0
      %v5037 = vmax.f32 %v4871, 0.0
      %v5038 = vmax.f32 %v4876, 0.0
      %v5039 = vmax.f32 %v4881, 0.0
      %v5040 = vmax.f32 %v4886, 0.0
      %v5041 = vmax.f32 %v4891, 0.0
      %v5042 = vmax.f32 %v4896, 0.0
      %v5043 = vmax.f32 %v4901, 0.0
      %v5044 = vmax.f32 %v4906, 0.0
      %v5045 = vmax.f32 %v4911, 0.0
      %v5046 = vmax.f32 %v4916, 0.0
      %v5047 = vmax.f32 %v4921, 0.0
      %v5048 = vmax.f32 %v4926, 0.0
      %v5049 = vmax.f32 %v4931, 0.0
      %v5050 = vmax.f32 %v4936, 0.0
      %v5051 = vmax.f32 %v4941, 0.0
      %v5052 = vmax.f32 %v4946, 0.0
      %v5053 = vmax.f32 %v4951, 0.0
      %v5054 = vmax.f32 %v4956, 0.0
      %v5055 = vmax.f32 %v4961, 0.0
      %v5056 = vmax.f32 %v4966, 0.0
      %v5057 = vmax.f32 %v4971, 0.0
      %v5058 = vmax.f32 %v4976, 0.0
      %v5059 = vmax.f32 %v4981, 0.0
      %v5060 = vmax.f32 %v4986, 0.0
      %v5061 = vmax.f32 %v4991, 0.0
      %v5062 = vmax.f32 %v4996, 0.0
      %v5063 = vmax.f32 %v5001, 0.0
      %v5064 = vmax.f32 %v5006, 0.0
      %v5065 = vmax.f32 %v5011, 0.0
      %v5066 = vmax.f32 %v5016, 0.0
      %v5067 = vmax.f32 %v5021, 0.0
      %v5068 = vmax.f32 %v5026, 0.0
      %v5069 = vmax.f32 %v5031, 0.0
      %5070 = vst.msk [vmem:[%s224] sm:$0xff] %vm1602, %v5034
      %5071 = vst.msk [vmem:[%s224 + $0x8] sm:$0xff] %vm1602, %v5035
      %5072 = vst.msk [vmem:[%s224 + $0x10] sm:$0xff] %vm1602, %v5036
      %5073 = vst.msk [vmem:[%s224 + $0x18] sm:$0xff] %vm1602, %v5037
      %5074 = vst.msk [vmem:[%s224 + $0x20] sm:$0xff] %vm1602, %v5038
      %5075 = vst.msk [vmem:[%s224 + $0x28] sm:$0xff] %vm1602, %v5039
      %5076 = vst.msk [vmem:[%s224 + $0x30] sm:$0xff] %vm1602, %v5040
      %5077 = vst.msk [vmem:[%s224 + $0x38] sm:$0xff] %vm1602, %v5041
      %5078 = vst.msk [vmem:[%s224 + $0x40] sm:$0xff] %vm1602, %v5042
      %5079 = vst.msk [vmem:[%s224 + $0x48] sm:$0xff] %vm1602, %v5043
      %5080 = vst.msk [vmem:[%s224 + $0x50] sm:$0xff] %vm1602, %v5044
      %5081 = vst.msk [vmem:[%s224 + $0x58] sm:$0xff] %vm1602, %v5045
      %5082 = vst.msk [vmem:[%s224 + $0x60] sm:$0xff] %vm1602, %v5046
      %5083 = vst.msk [vmem:[%s224 + $0x68] sm:$0xff] %vm1602, %v5047
      %5084 = vst.msk [vmem:[%s224 + $0x70] sm:$0xff] %vm1602, %v5048
      %5085 = vst.msk [vmem:[%s224 + $0x78] sm:$0xff] %vm1602, %v5049
      %5086 = vst.msk [vmem:[%s224 + $0x80] sm:$0xff] %vm1602, %v5050
      %5087 = vst.msk [vmem:[%s224 + $0x88] sm:$0xff] %vm1602, %v5051
      %5088 = vst.msk [vmem:[%s224 + $0x90] sm:$0xff] %vm1602, %v5052
      %5089 = vst.msk [vmem:[%s224 + $0x98] sm:$0xff] %vm1602, %v5053
      %5090 = vst.msk [vmem:[%s224 + $0xa0] sm:$0xff] %vm1602, %v5054
      %5091 = vst.msk [vmem:[%s224 + $0xa8] sm:$0xff] %vm1602, %v5055
      %5092 = vst.msk [vmem:[%s224 + $0xb0] sm:$0xff] %vm1602, %v5056
      %5093 = vst.msk [vmem:[%s224 + $0xb8] sm:$0xff] %vm1602, %v5057
      %5094 = vst.msk [vmem:[%s224 + $0xc0] sm:$0xff] %vm1602, %v5058
      %5095 = vst.msk [vmem:[%s224 + $0xc8] sm:$0xff] %vm1602, %v5059
      %5096 = vst.msk [vmem:[%s224 + $0xd0] sm:$0xff] %vm1602, %v5060
      %5097 = vst.msk [vmem:[%s224 + $0xd8] sm:$0xff] %vm1602, %v5061
      %5098 = vst.msk [vmem:[%s224 + $0xe0] sm:$0xff] %vm1602, %v5062
      %5099 = vst.msk [vmem:[%s224 + $0xe8] sm:$0xff] %vm1602, %v5063
      %5100 = vst.msk [vmem:[%s224 + $0xf0] sm:$0xff] %vm1602, %v5064
      %5101 = vst.msk [vmem:[%s224 + $0xf8] sm:$0xff] %vm1602, %v5065
      %5102 = vst.msk [vmem:[%s224 + $0x100] sm:$0xff] %vm1602, %v5066
      %5103 = vst.msk [vmem:[%s224 + $0x108] sm:$0xff] %vm1602, %v5067
      %5104 = vst.msk [vmem:[%s224 + $0x110] sm:$0xff] %vm1602, %v5068
      %5105 = vst.msk [vmem:[%s224 + $0x118] sm:$0xff] %vm1602, %v5069
      %p5106 = scmp.lt.s32.totalorder %s16, 1
      %s5107 = scalar_select %p5106, %s16, 1
      %s5108 = smul.addr %s5107, 36
      %s5109 = smul.addr %s5108, 8
      %s5110 = scalar_lea.vmem %s5, %s5109
      // Predicated region
      $region41: #{fucking_block.2} parent=39 // pred_check
        %p5111 = pneg %p144
      $region42: #{fucking_block.2} parent=39 // pred_check_branch
        %5113 = sbr.rel (%p5111) target = $region44
      $region43: #{fucking_block.2} parent=39 // pred_region
        _
      $region44: #{fucking_block.2} parent=39 // pred_fallthru
        _
    $region40: #{fucking_block.2} parent=5 // pred_fallthru
      _
    %p5114 = scmp.le.s32.totalorder 2, %s11
    // Predicated region
    $region45: #{fucking_block.2} parent=5 // pred_check
      %p5115 = pneg %p5114
    $region46: #{fucking_block.2} parent=5 // pred_check_branch
      %5117 = sbr.rel (%p5115) target = $region48
    $region47: #{fucking_block.2} parent=5 // pred_region
      %s5118 = ssub.s32 %s11, 2
      // Predicated region
      $region49: #{fucking_block.2} parent=47 // pred_check
        %p5119 = pneg %p150
      $region50: #{fucking_block.2} parent=47 // pred_check_branch
        %5121 = sbr.rel (%p5119) target = $region52
      $region51: #{fucking_block.2} parent=47 // pred_region
        %p5122 = scmp.lt.s32.totalorder %s17, 1
        %s5123 = scalar_select %p5122, %s17, 1
        %s5124 = smul.addr %s5123, 36
        %s5125 = smul.addr %s5124, 8
        %s5126 = scalar_lea.vmem %s5, %s5125
      $region52: #{fucking_block.2} parent=47 // pred_fallthru
        _
    $region48: #{fucking_block.2} parent=5 // pred_fallthru
      _
  $region6: #{fucking_block.2} parent=0 // loop_footer
    %s15 = sadd.s32 1, %s11
  $region7: #{fucking_block.2} parent=0 // loop_footer_branch
    %10 = sbr.rel target = $region3
  $region8: #{fucking_block.2} parent=0 // loop_exit
    _

</llo_original>
